<compile_context>
chip_gen: v6e
topology: v6e:2x2x1
jax: 0.10.0
libtpu: 0.0.40
codegen_flags: <defaults>
</compile_context>

<pallas_src>
import jax
import jax.numpy as jnp
from jax.experimental import pallas as pl
from jax.experimental.pallas import tpu as pltpu

BN_EPS = 1e-5
LANE = 128


def _round_up(x, m):
    return (x + m - 1) // m * m


_VMEM_LIMIT = None


def _vmem_limit():
    """Generation-aware scoped-VMEM budget (raise on v5e/v6e, cap on v7x)."""
    global _VMEM_LIMIT
    if _VMEM_LIMIT is None:
        try:
            cap = int(pltpu.get_tpu_info().vmem_capacity_bytes)
            _VMEM_LIMIT = max(32 << 20, min(96 << 20, cap - (16 << 20)))
        except Exception:
            _VMEM_LIMIT = 32 << 20  # safe default
    return _VMEM_LIMIT


# ---------------------------------------------------------------------------
# Pass 1: conv as k*k shifted matmuls (+ fused 1x1 shortcut) + BN batch stats
# ---------------------------------------------------------------------------
def _make_conv_stats_kernel(k, stride, pad, ho, wo, fuse_shortcut):
    mi = ho * wo
    taps = [(dy, dx) for dy in range(k) for dx in range(k)]

    def kernel(*refs):
        if fuse_shortcut:
            x_ref, w_ref, ws_ref, y_ref, sy_ref, stats_ref = refs
        else:
            x_ref, w_ref, y_ref, stats_ref = refs
        co = y_ref.shape[-1]

        @pl.when(pl.program_id(1) == 0)
        def _():
            stats_ref[...] = jnp.zeros_like(stats_ref)

        # k*k shifted-slice matmuls accumulated in f32 (no materialized im2col).
        acc = None
        for t, (dy, dx) in enumerate(taps):
            ph = (dy % stride) * stride + (dx % stride)   # phase index
            qh, qw = dy // stride, dx // stride            # offset within phase
            xt = x_ref[ph, qh:qh + ho, qw:qw + wo, :].reshape(mi, -1)
            d = jnp.dot(xt, w_ref[t], preferred_element_type=jnp.float32)
            acc = d if acc is None else acc + d
        y_ref[0] = acc.astype(y_ref.dtype)
        s0 = jnp.sum(acc, axis=0, keepdims=True)
        s1 = jnp.sum(acc * acc, axis=0, keepdims=True)

        if fuse_shortcut:
            # 1x1 stride-s shortcut conv == tap (pad, pad) of the padded input.
            ph = (pad % stride) * stride + (pad % stride)
            q = pad // stride
            xs = x_ref[ph, q:q + ho, q:q + wo, :].reshape(mi, -1)
            sacc = jnp.dot(xs, ws_ref[...], preferred_element_type=jnp.float32)
            sy_ref[0] = sacc.astype(sy_ref.dtype)
            s2 = jnp.sum(sacc, axis=0, keepdims=True)
            s3 = jnp.sum(sacc * sacc, axis=0, keepdims=True)
        else:
            s2 = jnp.zeros_like(s0)
            s3 = jnp.zeros_like(s0)

        # single full (8, Cp) unmasked RMW of the resident stats block
        upd = jnp.concatenate(
            [s0, s1, s2, s3, jnp.zeros((4, co), jnp.float32)], axis=0)
        stats_ref[0] = stats_ref[0] + upd

    return kernel


def conv_bn_stats_pallas(xph, w_taps, ws, *, n_img, k, stride, pad, ho, wo):
    """xph: (N*stride^2, Hq, Wq, Ci) bf16 phase-decomposed padded input.
       w_taps: (k*k, Ci, Co) bf16.  ws: (Ci, Co) bf16 or None.

    Returns y (N, Ho*Wo, Co) bf16 [, sy], stats (8, Co) f32 where rows 0/1 are
    sum/sumsq of y and rows 2/3 are sum/sumsq of the fused shortcut output."""
    ci = xph.shape[-1]
    co = w_taps.shape[-1]
    hq, wq = xph.shape[1], xph.shape[2]
    mi = ho * wo
    ss = stride * stride
    fuse = ws is not None

    # Outer 'parallel' split over the batch (2-way when possible) so pass 1 can
    # use both TensorCores on v7x; partial stats are reduced in JAX afterwards.
    g = 2 if (n_img >= 2 and n_img % 2 == 0) else 1
    npg = n_img // g

    in_specs = [
        pl.BlockSpec((ss, hq, wq, ci), lambda i, j: (i * npg + j, 0, 0, 0)),
        pl.BlockSpec((k * k, ci, co), lambda i, j: (0, 0, 0)),
    ]
    args = [xph, w_taps]
    out_shape = [jax.ShapeDtypeStruct((n_img, mi, co), jnp.bfloat16)]
    out_specs = [pl.BlockSpec((1, mi, co), lambda i, j: (i * npg + j, 0, 0))]
    if fuse:
        in_specs.append(pl.BlockSpec((ci, co), lambda i, j: (0, 0)))
        args.append(ws)
        out_shape.append(jax.ShapeDtypeStruct((n_img, mi, co), jnp.bfloat16))
        out_specs.append(pl.BlockSpec((1, mi, co), lambda i, j: (i * npg + j, 0, 0)))
    out_shape.append(jax.ShapeDtypeStruct((g, 8, co), jnp.float32))
    out_specs.append(pl.BlockSpec((1, 8, co), lambda i, j: (i, 0, 0)))

    outs = pl.pallas_call(
        _make_conv_stats_kernel(k, stride, pad, ho, wo, fuse),
        grid=(g, npg),
        in_specs=in_specs,
        out_specs=out_specs,
        out_shape=out_shape,
        compiler_params=pltpu.CompilerParams(
            dimension_semantics=("parallel", "arbitrary"),
            vmem_limit_bytes=_vmem_limit()),
    )(*args)
    stats = jnp.sum(outs[-1], axis=0)          # (8, Co)
    if fuse:
        return outs[0], outs[1], stats
    return outs[0], stats


# ---------------------------------------------------------------------------
# Pass 2: folded-BN FMA (+ residual with its own folded BN) + ReLU
# ---------------------------------------------------------------------------
def _make_apply_kernel(has_residual, apply_relu):
    def kernel(*refs):
        if has_residual:
            y_ref, aff_ref, r_ref, o_ref = refs
        else:
            y_ref, aff_ref, o_ref = refs
        aff = aff_ref[...]                                  # one full-block load
        out = y_ref[...].astype(jnp.float32) * aff[0:1] + aff[1:2]
        if has_residual:
            out = out + (r_ref[...].astype(jnp.float32) * aff[2:3] + aff[3:4])
        if apply_relu:
            out = jnp.maximum(out, 0.0)
        o_ref[...] = out.astype(o_ref.dtype)

    return kernel


def bn_apply_pallas(y, affine, residual=None, relu=True):
    """y/residual: (M, Cp) bf16; affine: (8, Cp) f32 [sc_y, sh_y, sc_r, sh_r]."""
    m, co = y.shape
    # memory-bound pass: big M tiles (<= 4096 rows) with minimal padding
    nt = -(-m // 4096)
    tm = _round_up(-(-m // nt), 8)
    m_pad = tm * nt
    if m_pad != m:
        y = jnp.pad(y, ((0, m_pad - m), (0, 0)))
        if residual is not None:
            residual = jnp.pad(residual, ((0, m_pad - m), (0, 0)))
    in_specs = [
        pl.BlockSpec((tm, co), lambda i: (i, 0)),
        pl.BlockSpec((8, co), lambda i: (0, 0)),
    ]
    args = [y, affine]
    if residual is not None:
        in_specs.append(pl.BlockSpec((tm, co), lambda i: (i, 0)))
        args.append(residual)
    out = pl.pallas_call(
        _make_apply_kernel(residual is not None, relu),
        grid=(nt,),
        in_specs=in_specs,
        out_specs=pl.BlockSpec((tm, co), lambda i: (i, 0)),
        out_shape=jax.ShapeDtypeStruct((m_pad, co), jnp.bfloat16),
        compiler_params=pltpu.CompilerParams(
            dimension_semantics=("parallel",),
            vmem_limit_bytes=_vmem_limit()),
    )(*args)
    return out if m_pad == m else out[:m]


# ---------------------------------------------------------------------------
# Plain-JAX glue: phase decomposition, weight repacking, BN folding, blocks
# ---------------------------------------------------------------------------
def _phase_decompose(x, k, stride, pad):
    """(N,H,W,C) -> (N*stride^2, Hq, Wq, C): phase (rh,rw) holds
    x_pad[:, rh::stride, rw::stride, :].  One reshape+transpose — no k^2 blow-up."""
    n, h, w, c = x.shape
    hp, wp = h + 2 * pad, w + 2 * pad
    ho = (hp - k) // stride + 1
    wo = (wp - k) // stride + 1
    hq = max((k - 1) // stride + ho, -(-hp // stride))
    wq = max((k - 1) // stride + wo, -(-wp // stride))
    hp2, wp2 = stride * hq, stride * wq
    xp = jnp.pad(x, ((0, 0), (pad, hp2 - h - pad), (pad, wp2 - w - pad), (0, 0)))
    xph = xp.reshape(n, hq, stride, wq, stride, c)
    xph = jnp.transpose(xph, (0, 2, 4, 1, 3, 5))
    return xph.reshape(n * stride * stride, hq, wq, c)


def _weight_to_taps(w, ci_p, co_p):
    """PyTorch conv weight (C_out, C_in, kh, kw) -> (kh*kw, Ci_p, Co_p) bf16."""
    c_out, c_in, kh, kw = w.shape
    wt = jnp.transpose(w, (2, 3, 1, 0)).reshape(kh * kw, c_in, c_out)
    wt = jnp.pad(wt, ((0, 0), (0, ci_p - c_in), (0, co_p - c_out)))
    return wt.astype(jnp.bfloat16)


def _pad_vec(v, n):
    return jnp.pad(v, (0, n - v.shape[0]))


def _bn_affine(sum_c, sumsq_c, gamma_p, beta_p, m_real):
    """Fold training-mode BN into per-channel scale/shift (tiny, f32)."""
    # TODO(synk): single-pass E[y^2]-E[y]^2 can cancel for very large M;
    #             a per-tile mean-shifted (Welford) combine would be safer.
    mean = sum_c / m_real
    var = jnp.maximum(sumsq_c / m_real - mean * mean, 0.0)
    scale = gamma_p * jax.lax.rsqrt(var + BN_EPS)
    shift = beta_p - mean * scale
    return scale, shift


def residual_block_forward(x, blk, k):
    """x: (N, H, W, Ci_p) bf16 NHWC, channel-padded to 128 (pad channels are 0)."""
    n, h, w, ci_p = x.shape
    c_out, c_in = blk["w1"].shape[0], blk["w1"].shape[1]
    s = blk["stride"]
    pad = k // 2
    co_p = _round_up(c_out, LANE)
    downsample = "ws" in blk

    hp, wp = h + 2 * pad, w + 2 * pad
    ho = (hp - k) // s + 1
    wo = (wp - k) // s + 1
    m = n * ho * wo

    g1, be1 = _pad_vec(blk["g1"], co_p), _pad_vec(blk["be1"], co_p)
    g2, be2 = _pad_vec(blk["g2"], co_p), _pad_vec(blk["be2"], co_p)

    # ---- pass 1 for conv1 (stride s); 1x1 shortcut conv fused in if present
    # NOTE: conv biases (blk['b1'],'b2','bs') are unused: training-mode BN
    # subtracts the batch mean, which cancels them exactly.
    xph1 = _phase_decompose(x, k, s, pad)
    w1 = _weight_to_taps(blk["w1"], ci_p, co_p)
    if downsample:
        ws = jnp.pad(jnp.transpose(blk["ws"][:, :, 0, 0]),
                     ((0, ci_p - c_in), (0, co_p - c_out))).astype(jnp.bfloat16)
        y1, sy, st1 = conv_bn_stats_pallas(xph1, w1, ws, n_img=n, k=k, stride=s,
                                           pad=pad, ho=ho, wo=wo)
    else:
        y1, st1 = conv_bn_stats_pallas(xph1, w1, None, n_img=n, k=k, stride=s,
                                       pad=pad, ho=ho, wo=wo)

    # ---- BN1 + ReLU (folded scale/shift)
    sc1, sh1 = _bn_affine(st1[0], st1[1], g1, be1, m)
    aff1 = jnp.zeros((8, co_p), jnp.float32).at[0].set(sc1).at[1].set(sh1)
    # TODO(synk): aff1+ReLU could be fused into conv2's pass-1 loads to drop
    #             this memory-bound pass entirely (needs in-kernel border zeroing).
    h1 = bn_apply_pallas(y1.reshape(m, co_p), aff1, residual=None, relu=True)
    h1 = h1.reshape(n, ho, wo, co_p)           # stays channel-padded (no slice)

    # ---- pass 1 for conv2 (stride 1)
    xph2 = _phase_decompose(h1, k, 1, pad)
    w2 = _weight_to_taps(blk["w2"], co_p, co_p)
    y2, st2 = conv_bn_stats_pallas(xph2, w2, None, n_img=n, k=k, stride=1,
                                   pad=pad, ho=ho, wo=wo)

    # ---- BN2 + residual (with its own folded BN) + ReLU
    sc2, sh2 = _bn_affine(st2[0], st2[1], g2, be2, m)
    if downsample:
        gs, bes = _pad_vec(blk["gs"], co_p), _pad_vec(blk["bes"], co_p)
        scs, shs = _bn_affine(st1[2], st1[3], gs, bes, m)
        res = sy.reshape(m, co_p)
    else:
        scs = jnp.ones((co_p,), jnp.float32)
        shs = jnp.zeros((co_p,), jnp.float32)
        res = x.reshape(m, ci_p)               # identity: free view, no repack
    aff2 = (jnp.zeros((8, co_p), jnp.float32)
            .at[0].set(sc2).at[1].set(sh2).at[2].set(scs).at[3].set(shs))
    out = bn_apply_pallas(y2.reshape(m, co_p), aff2, residual=res, relu=True)
    return out.reshape(n, ho, wo, co_p)


def flexible_residual_blocker_layer(x_nchw, params, kernel_size):
    """Forward of FlexibleResidualBlockerLayer (conv='normal'), training-mode BN."""
    x = jnp.transpose(x_nchw, (0, 2, 3, 1))               # NCHW -> NHWC
    c_in = x.shape[-1]
    ci_p = _round_up(c_in, LANE)
    x = jnp.pad(x, ((0, 0), (0, 0), (0, 0), (0, ci_p - c_in))).astype(jnp.bfloat16)
    for blk in params:
        x = residual_block_forward(x, blk, kernel_size)
    c_out = params[-1]["w1"].shape[0]
    return jnp.transpose(x[..., :c_out], (0, 3, 1, 2)).astype(jnp.float32)


def init_layer_params(key, c_in, c_out, num_blocks, kernel_size, stride):
    strides = [stride] + [1] * (num_blocks - 1)
    params = []
    last = c_in
    for s in strides:
        key, k1, k2, k3, k4, k5, k6 = jax.random.split(key, 7)
        blk = {
            "stride": s,
            "w1": 0.1 * jax.random.normal(k1, (c_out, last, kernel_size, kernel_size), jnp.float32),
            "b1": 0.1 * jax.random.normal(k2, (c_out,), jnp.float32),   # cancelled by BN
            "g1": jnp.ones((c_out,), jnp.float32),
            "be1": jnp.zeros((c_out,), jnp.float32),
            "w2": 0.1 * jax.random.normal(k3, (c_out, c_out, kernel_size, kernel_size), jnp.float32),
            "b2": 0.1 * jax.random.normal(k4, (c_out,), jnp.float32),   # cancelled by BN
            "g2": jnp.ones((c_out,), jnp.float32),
            "be2": jnp.zeros((c_out,), jnp.float32),
        }
        if s != 1 or last != c_out:
            blk.update({
                "ws": 0.1 * jax.random.normal(k5, (c_out, last, 1, 1), jnp.float32),
                "bs": 0.1 * jax.random.normal(k6, (c_out,), jnp.float32),  # cancelled by BN
                "gs": jnp.ones((c_out,), jnp.float32),
                "bes": jnp.zeros((c_out,), jnp.float32),
            })
        params.append(blk)
        last = c_out
    return params


if __name__ == "__main__":
    in_channels, out_channels, num_blocks, kernel_size, stride = 4, 8, 2, 3, 2

    key = jax.random.PRNGKey(0)
    kx, kp = jax.random.split(key)
    x = jax.random.normal(kx, (2, in_channels, 16, 16), jnp.float32)   # NCHW, like PyTorch
    params = init_layer_params(kp, in_channels, out_channels, num_blocks, kernel_size, stride)

    fwd = jax.jit(lambda inp: flexible_residual_blocker_layer(inp, params, kernel_size))
    out = jax.block_until_ready(fwd(x))

    assert out.shape == (2, out_channels, 8, 8), out.shape
    assert bool(jnp.all(jnp.isfinite(out)))
    print("KERNEL_OK")
</pallas_src>

<mosaic_0001>
module attributes {stable_mosaic.version = 11 : i64} {
  func.func @kernel(%arg0: i32, %arg1: i32, %arg2: memref<4x9x9x128xbf16, #tpu.memory_space<vmem>>, %arg3: memref<9x128x128xbf16, #tpu.memory_space<vmem>>, %arg4: memref<128x128xbf16, #tpu.memory_space<vmem>>, %arg5: memref<1x64x128xbf16, #tpu.memory_space<vmem>>, %arg6: memref<1x64x128xbf16, #tpu.memory_space<vmem>>, %arg7: memref<1x8x128xf32, #tpu.memory_space<vmem>>) attributes {dimension_semantics = [#tpu.dimension_semantics<parallel>, #tpu.dimension_semantics<arbitrary>], iteration_bounds = array<i64: 2, 1>, scalar_prefetch = 0 : i64, scratch_operands = 0 : i64, tpu.core_type = #tpu.core_type<tc>, window_params = [{transform_indices = @transform_0, window_bounds = array<i64: 4, 9, 9, 128>}, {pipeline_mode = #tpu.pipeline_mode<synchronous>, transform_indices = @transform_1, window_bounds = array<i64: 9, 128, 128>}, {pipeline_mode = #tpu.pipeline_mode<synchronous>, transform_indices = @transform_2, window_bounds = array<i64: 128, 128>}, {transform_indices = @transform_3, window_bounds = array<i64: 1, 64, 128>}, {transform_indices = @transform_4, window_bounds = array<i64: 1, 64, 128>}, {transform_indices = @transform_5, window_bounds = array<i64: 1, 8, 128>}]} {
    %c0_i32 = arith.constant 0 : i32
    %0 = arith.cmpi eq, %arg1, %c0_i32 : i32
    %1 = arith.extui %0 : i1 to i32
    %c0_i32_0 = arith.constant 0 : i32
    %2 = arith.cmpi ne, %1, %c0_i32_0 : i32
    scf.if %2 {
      %cst_87 = arith.constant 0.000000e+00 : f32
      %96 = vector.broadcast %cst_87 : f32 to vector<1x8x128xf32>
      %c0_88 = arith.constant 0 : index
      %c0_89 = arith.constant 0 : index
      %c0_90 = arith.constant 0 : index
      %97 = vector.load %arg7[%c0_88, %c0_89, %c0_90] : memref<1x8x128xf32, #tpu.memory_space<vmem>>, vector<1x8x128xf32>
      tpu.vector_store %arg7[%c0_88, %c0_89, %c0_90], %96 {strides = array<i32>} : memref<1x8x128xf32, #tpu.memory_space<vmem>>, vector<1x8x128xf32>,
    } else {
    }
    %c0 = arith.constant 0 : index
    %c0_1 = arith.constant 0 : index
    %c0_2 = arith.constant 0 : index
    %c0_3 = arith.constant 0 : index
    %3 = vector.load %arg2[%c0, %c0_1, %c0_2, %c0_3] : memref<4x9x9x128xbf16, #tpu.memory_space<vmem>>, vector<1x8x8x128xbf16>
    %4 = vector.shape_cast %3 : vector<1x8x8x128xbf16> to vector<8x8x128xbf16>
    %5 = vector.shape_cast %4 : vector<8x8x128xbf16> to vector<64x128xbf16>
    %c0_4 = arith.constant 0 : index
    %c0_5 = arith.constant 0 : index
    %c0_6 = arith.constant 0 : index
    %6 = vector.load %arg3[%c0_4, %c0_5, %c0_6] : memref<9x128x128xbf16, #tpu.memory_space<vmem>>, vector<1x128x128xbf16>
    %7 = vector.shape_cast %6 : vector<1x128x128xbf16> to vector<128x128xbf16>
    %cst = arith.constant dense<0.000000e+00> : vector<64x128xf32>
    %8 = tpu.matmul %5, %7, %cst {dimension_numbers = #tpu.dot_dimension_numbers<[1], [0], [0], [1], [0, 0, 1, 1], [], []>} : vector<64x128xbf16>, vector<128x128xbf16>, vector<64x128xf32> -> vector<64x128xf32>
    %c1 = arith.constant 1 : index
    %c0_7 = arith.constant 0 : index
    %c0_8 = arith.constant 0 : index
    %c0_9 = arith.constant 0 : index
    %9 = vector.load %arg2[%c1, %c0_7, %c0_8, %c0_9] : memref<4x9x9x128xbf16, #tpu.memory_space<vmem>>, vector<1x8x8x128xbf16>
    %10 = vector.shape_cast %9 : vector<1x8x8x128xbf16> to vector<8x8x128xbf16>
    %11 = vector.shape_cast %10 : vector<8x8x128xbf16> to vector<64x128xbf16>
    %c1_10 = arith.constant 1 : index
    %c0_11 = arith.constant 0 : index
    %c0_12 = arith.constant 0 : index
    %12 = vector.load %arg3[%c1_10, %c0_11, %c0_12] : memref<9x128x128xbf16, #tpu.memory_space<vmem>>, vector<1x128x128xbf16>
    %13 = vector.shape_cast %12 : vector<1x128x128xbf16> to vector<128x128xbf16>
    %cst_13 = arith.constant dense<0.000000e+00> : vector<64x128xf32>
    %14 = tpu.matmul %11, %13, %cst_13 {dimension_numbers = #tpu.dot_dimension_numbers<[1], [0], [0], [1], [0, 0, 1, 1], [], []>} : vector<64x128xbf16>, vector<128x128xbf16>, vector<64x128xf32> -> vector<64x128xf32>
    %15 = arith.addf %8, %14 : vector<64x128xf32>
    %c0_14 = arith.constant 0 : index
    %c0_15 = arith.constant 0 : index
    %c1_16 = arith.constant 1 : index
    %c0_17 = arith.constant 0 : index
    %16 = vector.load %arg2[%c0_14, %c0_15, %c1_16, %c0_17] : memref<4x9x9x128xbf16, #tpu.memory_space<vmem>>, vector<1x8x8x128xbf16>
    %17 = vector.shape_cast %16 : vector<1x8x8x128xbf16> to vector<8x8x128xbf16>
    %18 = vector.shape_cast %17 : vector<8x8x128xbf16> to vector<64x128xbf16>
    %c2 = arith.constant 2 : index
    %c0_18 = arith.constant 0 : index
    %c0_19 = arith.constant 0 : index
    %19 = vector.load %arg3[%c2, %c0_18, %c0_19] : memref<9x128x128xbf16, #tpu.memory_space<vmem>>, vector<1x128x128xbf16>
    %20 = vector.shape_cast %19 : vector<1x128x128xbf16> to vector<128x128xbf16>
    %cst_20 = arith.constant dense<0.000000e+00> : vector<64x128xf32>
    %21 = tpu.matmul %18, %20, %cst_20 {dimension_numbers = #tpu.dot_dimension_numbers<[1], [0], [0], [1], [0, 0, 1, 1], [], []>} : vector<64x128xbf16>, vector<128x128xbf16>, vector<64x128xf32> -> vector<64x128xf32>
    %22 = arith.addf %15, %21 : vector<64x128xf32>
    %c2_21 = arith.constant 2 : index
    %c0_22 = arith.constant 0 : index
    %c0_23 = arith.constant 0 : index
    %c0_24 = arith.constant 0 : index
    %23 = vector.load %arg2[%c2_21, %c0_22, %c0_23, %c0_24] : memref<4x9x9x128xbf16, #tpu.memory_space<vmem>>, vector<1x8x8x128xbf16>
    %24 = vector.shape_cast %23 : vector<1x8x8x128xbf16> to vector<8x8x128xbf16>
    %25 = vector.shape_cast %24 : vector<8x8x128xbf16> to vector<64x128xbf16>
    %c3 = arith.constant 3 : index
    %c0_25 = arith.constant 0 : index
    %c0_26 = arith.constant 0 : index
    %26 = vector.load %arg3[%c3, %c0_25, %c0_26] : memref<9x128x128xbf16, #tpu.memory_space<vmem>>, vector<1x128x128xbf16>
    %27 = vector.shape_cast %26 : vector<1x128x128xbf16> to vector<128x128xbf16>
    %cst_27 = arith.constant dense<0.000000e+00> : vector<64x128xf32>
    %28 = tpu.matmul %25, %27, %cst_27 {dimension_numbers = #tpu.dot_dimension_numbers<[1], [0], [0], [1], [0, 0, 1, 1], [], []>} : vector<64x128xbf16>, vector<128x128xbf16>, vector<64x128xf32> -> vector<64x128xf32>
    %29 = arith.addf %22, %28 : vector<64x128xf32>
    %c3_28 = arith.constant 3 : index
    %c0_29 = arith.constant 0 : index
    %c0_30 = arith.constant 0 : index
    %c0_31 = arith.constant 0 : index
    %30 = vector.load %arg2[%c3_28, %c0_29, %c0_30, %c0_31] : memref<4x9x9x128xbf16, #tpu.memory_space<vmem>>, vector<1x8x8x128xbf16>
    %31 = vector.shape_cast %30 : vector<1x8x8x128xbf16> to vector<8x8x128xbf16>
    %32 = vector.shape_cast %31 : vector<8x8x128xbf16> to vector<64x128xbf16>
    %c4 = arith.constant 4 : index
    %c0_32 = arith.constant 0 : index
    %c0_33 = arith.constant 0 : index
    %33 = vector.load %arg3[%c4, %c0_32, %c0_33] : memref<9x128x128xbf16, #tpu.memory_space<vmem>>, vector<1x128x128xbf16>
    %34 = vector.shape_cast %33 : vector<1x128x128xbf16> to vector<128x128xbf16>
    %cst_34 = arith.constant dense<0.000000e+00> : vector<64x128xf32>
    %35 = tpu.matmul %32, %34, %cst_34 {dimension_numbers = #tpu.dot_dimension_numbers<[1], [0], [0], [1], [0, 0, 1, 1], [], []>} : vector<64x128xbf16>, vector<128x128xbf16>, vector<64x128xf32> -> vector<64x128xf32>
    %36 = arith.addf %29, %35 : vector<64x128xf32>
    %c2_35 = arith.constant 2 : index
    %c0_36 = arith.constant 0 : index
    %c1_37 = arith.constant 1 : index
    %c0_38 = arith.constant 0 : index
    %37 = vector.load %arg2[%c2_35, %c0_36, %c1_37, %c0_38] : memref<4x9x9x128xbf16, #tpu.memory_space<vmem>>, vector<1x8x8x128xbf16>
    %38 = vector.shape_cast %37 : vector<1x8x8x128xbf16> to vector<8x8x128xbf16>
    %39 = vector.shape_cast %38 : vector<8x8x128xbf16> to vector<64x128xbf16>
    %c5 = arith.constant 5 : index
    %c0_39 = arith.constant 0 : index
    %c0_40 = arith.constant 0 : index
    %40 = vector.load %arg3[%c5, %c0_39, %c0_40] : memref<9x128x128xbf16, #tpu.memory_space<vmem>>, vector<1x128x128xbf16>
    %41 = vector.shape_cast %40 : vector<1x128x128xbf16> to vector<128x128xbf16>
    %cst_41 = arith.constant dense<0.000000e+00> : vector<64x128xf32>
    %42 = tpu.matmul %39, %41, %cst_41 {dimension_numbers = #tpu.dot_dimension_numbers<[1], [0], [0], [1], [0, 0, 1, 1], [], []>} : vector<64x128xbf16>, vector<128x128xbf16>, vector<64x128xf32> -> vector<64x128xf32>
    %43 = arith.addf %36, %42 : vector<64x128xf32>
    %c0_42 = arith.constant 0 : index
    %c1_43 = arith.constant 1 : index
    %c0_44 = arith.constant 0 : index
    %c0_45 = arith.constant 0 : index
    %44 = vector.load %arg2[%c0_42, %c1_43, %c0_44, %c0_45] : memref<4x9x9x128xbf16, #tpu.memory_space<vmem>>, vector<1x8x8x128xbf16>
    %45 = vector.shape_cast %44 : vector<1x8x8x128xbf16> to vector<8x8x128xbf16>
    %46 = vector.shape_cast %45 : vector<8x8x128xbf16> to vector<64x128xbf16>
    %c6 = arith.constant 6 : index
    %c0_46 = arith.constant 0 : index
    %c0_47 = arith.constant 0 : index
    %47 = vector.load %arg3[%c6, %c0_46, %c0_47] : memref<9x128x128xbf16, #tpu.memory_space<vmem>>, vector<1x128x128xbf16>
    %48 = vector.shape_cast %47 : vector<1x128x128xbf16> to vector<128x128xbf16>
    %cst_48 = arith.constant dense<0.000000e+00> : vector<64x128xf32>
    %49 = tpu.matmul %46, %48, %cst_48 {dimension_numbers = #tpu.dot_dimension_numbers<[1], [0], [0], [1], [0, 0, 1, 1], [], []>} : vector<64x128xbf16>, vector<128x128xbf16>, vector<64x128xf32> -> vector<64x128xf32>
    %50 = arith.addf %43, %49 : vector<64x128xf32>
    %c1_49 = arith.constant 1 : index
    %c1_50 = arith.constant 1 : index
    %c0_51 = arith.constant 0 : index
    %c0_52 = arith.constant 0 : index
    %51 = vector.load %arg2[%c1_49, %c1_50, %c0_51, %c0_52] : memref<4x9x9x128xbf16, #tpu.memory_space<vmem>>, vector<1x8x8x128xbf16>
    %52 = vector.shape_cast %51 : vector<1x8x8x128xbf16> to vector<8x8x128xbf16>
    %53 = vector.shape_cast %52 : vector<8x8x128xbf16> to vector<64x128xbf16>
    %c7 = arith.constant 7 : index
    %c0_53 = arith.constant 0 : index
    %c0_54 = arith.constant 0 : index
    %54 = vector.load %arg3[%c7, %c0_53, %c0_54] : memref<9x128x128xbf16, #tpu.memory_space<vmem>>, vector<1x128x128xbf16>
    %55 = vector.shape_cast %54 : vector<1x128x128xbf16> to vector<128x128xbf16>
    %cst_55 = arith.constant dense<0.000000e+00> : vector<64x128xf32>
    %56 = tpu.matmul %53, %55, %cst_55 {dimension_numbers = #tpu.dot_dimension_numbers<[1], [0], [0], [1], [0, 0, 1, 1], [], []>} : vector<64x128xbf16>, vector<128x128xbf16>, vector<64x128xf32> -> vector<64x128xf32>
    %57 = arith.addf %50, %56 : vector<64x128xf32>
    %c0_56 = arith.constant 0 : index
    %c1_57 = arith.constant 1 : index
    %c1_58 = arith.constant 1 : index
    %c0_59 = arith.constant 0 : index
    %58 = vector.load %arg2[%c0_56, %c1_57, %c1_58, %c0_59] : memref<4x9x9x128xbf16, #tpu.memory_space<vmem>>, vector<1x8x8x128xbf16>
    %59 = vector.shape_cast %58 : vector<1x8x8x128xbf16> to vector<8x8x128xbf16>
    %60 = vector.shape_cast %59 : vector<8x8x128xbf16> to vector<64x128xbf16>
    %c8 = arith.constant 8 : index
    %c0_60 = arith.constant 0 : index
    %c0_61 = arith.constant 0 : index
    %61 = vector.load %arg3[%c8, %c0_60, %c0_61] : memref<9x128x128xbf16, #tpu.memory_space<vmem>>, vector<1x128x128xbf16>
    %62 = vector.shape_cast %61 : vector<1x128x128xbf16> to vector<128x128xbf16>
    %cst_62 = arith.constant dense<0.000000e+00> : vector<64x128xf32>
    %63 = tpu.matmul %60, %62, %cst_62 {dimension_numbers = #tpu.dot_dimension_numbers<[1], [0], [0], [1], [0, 0, 1, 1], [], []>} : vector<64x128xbf16>, vector<128x128xbf16>, vector<64x128xf32> -> vector<64x128xf32>
    %64 = arith.addf %57, %63 : vector<64x128xf32>
    %65 = arith.truncf %64 : vector<64x128xf32> to vector<64x128xbf16>
    %c0_63 = arith.constant 0 : index
    %c0_64 = arith.constant 0 : index
    %c0_65 = arith.constant 0 : index
    %66 = vector.load %arg5[%c0_63, %c0_64, %c0_65] : memref<1x64x128xbf16, #tpu.memory_space<vmem>>, vector<1x64x128xbf16>
    %67 = vector.shape_cast %66 : vector<1x64x128xbf16> to vector<64x128xbf16>
    %68 = vector.shape_cast %65 : vector<64x128xbf16> to vector<1x64x128xbf16>
    tpu.vector_store %arg5[%c0_63, %c0_64, %c0_65], %68 {strides = array<i32>} : memref<1x64x128xbf16, #tpu.memory_space<vmem>>, vector<1x64x128xbf16>,
    %cst_66 = arith.constant dense<0.000000e+00> : vector<128xf32>
    %69 = vector.multi_reduction <add>, %64, %cst_66 [0] : vector<64x128xf32> to vector<128xf32>
    %70 = vector.shape_cast %69 : vector<128xf32> to vector<1x128xf32>
    %71 = arith.mulf %64, %64 : vector<64x128xf32>
    %cst_67 = arith.constant dense<0.000000e+00> : vector<128xf32>
    %72 = vector.multi_reduction <add>, %71, %cst_67 [0] : vector<64x128xf32> to vector<128xf32>
    %73 = vector.shape_cast %72 : vector<128xf32> to vector<1x128xf32>
    %c3_68 = arith.constant 3 : index
    %c0_69 = arith.constant 0 : index
    %c0_70 = arith.constant 0 : index
    %c0_71 = arith.constant 0 : index
    %74 = vector.load %arg2[%c3_68, %c0_69, %c0_70, %c0_71] : memref<4x9x9x128xbf16, #tpu.memory_space<vmem>>, vector<1x8x8x128xbf16>
    %75 = vector.shape_cast %74 : vector<1x8x8x128xbf16> to vector<8x8x128xbf16>
    %76 = vector.shape_cast %75 : vector<8x8x128xbf16> to vector<64x128xbf16>
    %c0_72 = arith.constant 0 : index
    %c0_73 = arith.constant 0 : index
    %77 = vector.load %arg4[%c0_72, %c0_73] : memref<128x128xbf16, #tpu.memory_space<vmem>>, vector<128x128xbf16>
    %cst_74 = arith.constant dense<0.000000e+00> : vector<64x128xf32>
    %78 = tpu.matmul %76, %77, %cst_74 {dimension_numbers = #tpu.dot_dimension_numbers<[1], [0], [0], [1], [0, 0, 1, 1], [], []>} : vector<64x128xbf16>, vector<128x128xbf16>, vector<64x128xf32> -> vector<64x128xf32>
    %79 = arith.truncf %78 : vector<64x128xf32> to vector<64x128xbf16>
    %c0_75 = arith.constant 0 : index
    %c0_76 = arith.constant 0 : index
    %c0_77 = arith.constant 0 : index
    %80 = vector.load %arg6[%c0_75, %c0_76, %c0_77] : memref<1x64x128xbf16, #tpu.memory_space<vmem>>, vector<1x64x128xbf16>
    %81 = vector.shape_cast %80 : vector<1x64x128xbf16> to vector<64x128xbf16>
    %82 = vector.shape_cast %79 : vector<64x128xbf16> to vector<1x64x128xbf16>
    tpu.vector_store %arg6[%c0_75, %c0_76, %c0_77], %82 {strides = array<i32>} : memref<1x64x128xbf16, #tpu.memory_space<vmem>>, vector<1x64x128xbf16>,
    %cst_78 = arith.constant dense<0.000000e+00> : vector<128xf32>
    %83 = vector.multi_reduction <add>, %78, %cst_78 [0] : vector<64x128xf32> to vector<128xf32>
    %84 = vector.shape_cast %83 : vector<128xf32> to vector<1x128xf32>
    %85 = arith.mulf %78, %78 : vector<64x128xf32>
    %cst_79 = arith.constant dense<0.000000e+00> : vector<128xf32>
    %86 = vector.multi_reduction <add>, %85, %cst_79 [0] : vector<64x128xf32> to vector<128xf32>
    %87 = vector.shape_cast %86 : vector<128xf32> to vector<1x128xf32>
    %cst_80 = arith.constant 0.000000e+00 : f32
    %88 = vector.broadcast %cst_80 : f32 to vector<4x128xf32>
    %89 = tpu.concatenate %70, %73, %84, %87, %88 in 0 : vector<1x128xf32>, vector<1x128xf32>, vector<1x128xf32>, vector<1x128xf32>, vector<4x128xf32> -> vector<8x128xf32>
    %c0_81 = arith.constant 0 : index
    %c0_82 = arith.constant 0 : index
    %c0_83 = arith.constant 0 : index
    %90 = vector.load %arg7[%c0_81, %c0_82, %c0_83] : memref<1x8x128xf32, #tpu.memory_space<vmem>>, vector<1x8x128xf32>
    %91 = vector.shape_cast %90 : vector<1x8x128xf32> to vector<8x128xf32>
    %92 = arith.addf %91, %89 : vector<8x128xf32>
    %c0_84 = arith.constant 0 : index
    %c0_85 = arith.constant 0 : index
    %c0_86 = arith.constant 0 : index
    %93 = vector.load %arg7[%c0_84, %c0_85, %c0_86] : memref<1x8x128xf32, #tpu.memory_space<vmem>>, vector<1x8x128xf32>
    %94 = vector.shape_cast %93 : vector<1x8x128xf32> to vector<8x128xf32>
    %95 = vector.shape_cast %92 : vector<8x128xf32> to vector<1x8x128xf32>
    tpu.vector_store %arg7[%c0_84, %c0_85, %c0_86], %95 {strides = array<i32>} : memref<1x8x128xf32, #tpu.memory_space<vmem>>, vector<1x8x128xf32>,
    return
  }
  func.func @transform_0(%arg0: i32, %arg1: i32) -> (i32, i32, i32, i32) {
    %c1_i32 = arith.constant 1 : i32
    %0 = arith.muli %arg0, %c1_i32 : i32
    %1 = arith.addi %0, %arg1 : i32
    %c0_i32 = arith.constant 0 : i32
    %c0_i32_0 = arith.constant 0 : i32
    %c0_i32_1 = arith.constant 0 : i32
    %c0_i32_2 = arith.constant 0 : i32
    return %1, %c0_i32, %c0_i32_0, %c0_i32_1 : i32, i32, i32, i32
  }
  func.func @transform_1(%arg0: i32, %arg1: i32) -> (i32, i32, i32) {
    %c0_i32 = arith.constant 0 : i32
    %c0_i32_0 = arith.constant 0 : i32
    %c0_i32_1 = arith.constant 0 : i32
    %c0_i32_2 = arith.constant 0 : i32
    return %c0_i32, %c0_i32_0, %c0_i32_1 : i32, i32, i32
  }
  func.func @transform_2(%arg0: i32, %arg1: i32) -> (i32, i32) {
    %c0_i32 = arith.constant 0 : i32
    %c0_i32_0 = arith.constant 0 : i32
    %c0_i32_1 = arith.constant 0 : i32
    return %c0_i32, %c0_i32_0 : i32, i32
  }
  func.func @transform_3(%arg0: i32, %arg1: i32) -> (i32, i32, i32) {
    %c1_i32 = arith.constant 1 : i32
    %0 = arith.muli %arg0, %c1_i32 : i32
    %1 = arith.addi %0, %arg1 : i32
    %c0_i32 = arith.constant 0 : i32
    %c0_i32_0 = arith.constant 0 : i32
    %c0_i32_1 = arith.constant 0 : i32
    return %1, %c0_i32, %c0_i32_0 : i32, i32, i32
  }
  func.func @transform_4(%arg0: i32, %arg1: i32) -> (i32, i32, i32) {
    %c1_i32 = arith.constant 1 : i32
    %0 = arith.muli %arg0, %c1_i32 : i32
    %1 = arith.addi %0, %arg1 : i32
    %c0_i32 = arith.constant 0 : i32
    %c0_i32_0 = arith.constant 0 : i32
    %c0_i32_1 = arith.constant 0 : i32
    return %1, %c0_i32, %c0_i32_0 : i32, i32, i32
  }
  func.func @transform_5(%arg0: i32, %arg1: i32) -> (i32, i32, i32) {
    %c0_i32 = arith.constant 0 : i32
    %c0_i32_0 = arith.constant 0 : i32
    %c0_i32_1 = arith.constant 0 : i32
    return %arg0, %c0_i32, %c0_i32_0 : i32, i32, i32
  }
}

module attributes {stable_mosaic.version = 11 : i64} {
  func.func @kernel(%arg0: i32, %arg1: memref<128x128xbf16, #tpu.memory_space<vmem>>, %arg2: memref<8x128xf32, #tpu.memory_space<vmem>>, %arg3: memref<128x128xbf16, #tpu.memory_space<vmem>>) attributes {dimension_semantics = [#tpu.dimension_semantics<parallel>], iteration_bounds = array<i64: 1>, scalar_prefetch = 0 : i64, scratch_operands = 0 : i64, tpu.core_type = #tpu.core_type<tc>, window_params = [{transform_indices = @transform_0, window_bounds = array<i64: 128, 128>}, {pipeline_mode = #tpu.pipeline_mode<synchronous>, transform_indices = @transform_1, window_bounds = array<i64: 8, 128>}, {transform_indices = @transform_2, window_bounds = array<i64: 128, 128>}]} {
    %c0 = arith.constant 0 : index
    %c0_0 = arith.constant 0 : index
    %0 = vector.load %arg2[%c0, %c0_0] : memref<8x128xf32, #tpu.memory_space<vmem>>, vector<8x128xf32>
    %c0_1 = arith.constant 0 : index
    %c0_2 = arith.constant 0 : index
    %1 = vector.load %arg1[%c0_1, %c0_2] : memref<128x128xbf16, #tpu.memory_space<vmem>>, vector<128x128xbf16>
    %2 = arith.extf %1 : vector<128x128xbf16> to vector<128x128xf32>
    %3 = vector.extract_strided_slice %0 {offsets = [0, 0], sizes = [1, 128], strides = [1, 1]} : vector<8x128xf32> to vector<1x128xf32>
    %4 = vector.broadcast %3 : vector<1x128xf32> to vector<128x128xf32>
    %5 = arith.mulf %2, %4 : vector<128x128xf32>
    %6 = vector.extract_strided_slice %0 {offsets = [1, 0], sizes = [1, 128], strides = [1, 1]} : vector<8x128xf32> to vector<1x128xf32>
    %7 = vector.broadcast %6 : vector<1x128xf32> to vector<128x128xf32>
    %8 = arith.addf %5, %7 : vector<128x128xf32>
    %cst = arith.constant 0.000000e+00 : f32
    %9 = vector.broadcast %cst : f32 to vector<128x128xf32>
    %10 = arith.maximumf %8, %9 : vector<128x128xf32>
    %11 = arith.truncf %10 : vector<128x128xf32> to vector<128x128xbf16>
    %c0_3 = arith.constant 0 : index
    %c0_4 = arith.constant 0 : index
    %12 = vector.load %arg3[%c0_3, %c0_4] : memref<128x128xbf16, #tpu.memory_space<vmem>>, vector<128x128xbf16>
    tpu.vector_store %arg3[%c0_3, %c0_4], %11 {strides = array<i32>} : memref<128x128xbf16, #tpu.memory_space<vmem>>, vector<128x128xbf16>,
    return
  }
  func.func @transform_0(%arg0: i32) -> (i32, i32) {
    %c0_i32 = arith.constant 0 : i32
    %c0_i32_0 = arith.constant 0 : i32
    return %arg0, %c0_i32 : i32, i32
  }
  func.func @transform_1(%arg0: i32) -> (i32, i32) {
    %c0_i32 = arith.constant 0 : i32
    %c0_i32_0 = arith.constant 0 : i32
    %c0_i32_1 = arith.constant 0 : i32
    return %c0_i32, %c0_i32_0 : i32, i32
  }
  func.func @transform_2(%arg0: i32) -> (i32, i32) {
    %c0_i32 = arith.constant 0 : i32
    %c0_i32_0 = arith.constant 0 : i32
    return %arg0, %c0_i32 : i32, i32
  }
}

module attributes {stable_mosaic.version = 11 : i64} {
  func.func @kernel(%arg0: i32, %arg1: i32, %arg2: memref<1x10x10x128xbf16, #tpu.memory_space<vmem>>, %arg3: memref<9x128x128xbf16, #tpu.memory_space<vmem>>, %arg4: memref<1x64x128xbf16, #tpu.memory_space<vmem>>, %arg5: memref<1x8x128xf32, #tpu.memory_space<vmem>>) attributes {dimension_semantics = [#tpu.dimension_semantics<parallel>, #tpu.dimension_semantics<arbitrary>], iteration_bounds = array<i64: 2, 1>, scalar_prefetch = 0 : i64, scratch_operands = 0 : i64, tpu.core_type = #tpu.core_type<tc>, window_params = [{transform_indices = @transform_0, window_bounds = array<i64: 1, 10, 10, 128>}, {pipeline_mode = #tpu.pipeline_mode<synchronous>, transform_indices = @transform_1, window_bounds = array<i64: 9, 128, 128>}, {transform_indices = @transform_2, window_bounds = array<i64: 1, 64, 128>}, {transform_indices = @transform_3, window_bounds = array<i64: 1, 8, 128>}]} {
    %c0_i32 = arith.constant 0 : i32
    %0 = arith.cmpi eq, %arg1, %c0_i32 : i32
    %1 = arith.extui %0 : i1 to i32
    %c0_i32_0 = arith.constant 0 : i32
    %2 = arith.cmpi ne, %1, %c0_i32_0 : i32
    scf.if %2 {
      %cst_77 = arith.constant 0.000000e+00 : f32
      %84 = vector.broadcast %cst_77 : f32 to vector<1x8x128xf32>
      %c0_78 = arith.constant 0 : index
      %c0_79 = arith.constant 0 : index
      %c0_80 = arith.constant 0 : index
      %85 = vector.load %arg5[%c0_78, %c0_79, %c0_80] : memref<1x8x128xf32, #tpu.memory_space<vmem>>, vector<1x8x128xf32>
      tpu.vector_store %arg5[%c0_78, %c0_79, %c0_80], %84 {strides = array<i32>} : memref<1x8x128xf32, #tpu.memory_space<vmem>>, vector<1x8x128xf32>,
    } else {
    }
    %c0 = arith.constant 0 : index
    %c0_1 = arith.constant 0 : index
    %c0_2 = arith.constant 0 : index
    %c0_3 = arith.constant 0 : index
    %3 = vector.load %arg2[%c0, %c0_1, %c0_2, %c0_3] : memref<1x10x10x128xbf16, #tpu.memory_space<vmem>>, vector<1x8x8x128xbf16>
    %4 = vector.shape_cast %3 : vector<1x8x8x128xbf16> to vector<8x8x128xbf16>
    %5 = vector.shape_cast %4 : vector<8x8x128xbf16> to vector<64x128xbf16>
    %c0_4 = arith.constant 0 : index
    %c0_5 = arith.constant 0 : index
    %c0_6 = arith.constant 0 : index
    %6 = vector.load %arg3[%c0_4, %c0_5, %c0_6] : memref<9x128x128xbf16, #tpu.memory_space<vmem>>, vector<1x128x128xbf16>
    %7 = vector.shape_cast %6 : vector<1x128x128xbf16> to vector<128x128xbf16>
    %cst = arith.constant dense<0.000000e+00> : vector<64x128xf32>
    %8 = tpu.matmul %5, %7, %cst {dimension_numbers = #tpu.dot_dimension_numbers<[1], [0], [0], [1], [0, 0, 1, 1], [], []>} : vector<64x128xbf16>, vector<128x128xbf16>, vector<64x128xf32> -> vector<64x128xf32>
    %c0_7 = arith.constant 0 : index
    %c0_8 = arith.constant 0 : index
    %c1 = arith.constant 1 : index
    %c0_9 = arith.constant 0 : index
    %9 = vector.load %arg2[%c0_7, %c0_8, %c1, %c0_9] : memref<1x10x10x128xbf16, #tpu.memory_space<vmem>>, vector<1x8x8x128xbf16>
    %10 = vector.shape_cast %9 : vector<1x8x8x128xbf16> to vector<8x8x128xbf16>
    %11 = vector.shape_cast %10 : vector<8x8x128xbf16> to vector<64x128xbf16>
    %c1_10 = arith.constant 1 : index
    %c0_11 = arith.constant 0 : index
    %c0_12 = arith.constant 0 : index
    %12 = vector.load %arg3[%c1_10, %c0_11, %c0_12] : memref<9x128x128xbf16, #tpu.memory_space<vmem>>, vector<1x128x128xbf16>
    %13 = vector.shape_cast %12 : vector<1x128x128xbf16> to vector<128x128xbf16>
    %cst_13 = arith.constant dense<0.000000e+00> : vector<64x128xf32>
    %14 = tpu.matmul %11, %13, %cst_13 {dimension_numbers = #tpu.dot_dimension_numbers<[1], [0], [0], [1], [0, 0, 1, 1], [], []>} : vector<64x128xbf16>, vector<128x128xbf16>, vector<64x128xf32> -> vector<64x128xf32>
    %15 = arith.addf %8, %14 : vector<64x128xf32>
    %c0_14 = arith.constant 0 : index
    %c0_15 = arith.constant 0 : index
    %c2 = arith.constant 2 : index
    %c0_16 = arith.constant 0 : index
    %16 = vector.load %arg2[%c0_14, %c0_15, %c2, %c0_16] : memref<1x10x10x128xbf16, #tpu.memory_space<vmem>>, vector<1x8x8x128xbf16>
    %17 = vector.shape_cast %16 : vector<1x8x8x128xbf16> to vector<8x8x128xbf16>
    %18 = vector.shape_cast %17 : vector<8x8x128xbf16> to vector<64x128xbf16>
    %c2_17 = arith.constant 2 : index
    %c0_18 = arith.constant 0 : index
    %c0_19 = arith.constant 0 : index
    %19 = vector.load %arg3[%c2_17, %c0_18, %c0_19] : memref<9x128x128xbf16, #tpu.memory_space<vmem>>, vector<1x128x128xbf16>
    %20 = vector.shape_cast %19 : vector<1x128x128xbf16> to vector<128x128xbf16>
    %cst_20 = arith.constant dense<0.000000e+00> : vector<64x128xf32>
    %21 = tpu.matmul %18, %20, %cst_20 {dimension_numbers = #tpu.dot_dimension_numbers<[1], [0], [0], [1], [0, 0, 1, 1], [], []>} : vector<64x128xbf16>, vector<128x128xbf16>, vector<64x128xf32> -> vector<64x128xf32>
    %22 = arith.addf %15, %21 : vector<64x128xf32>
    %c0_21 = arith.constant 0 : index
    %c1_22 = arith.constant 1 : index
    %c0_23 = arith.constant 0 : index
    %c0_24 = arith.constant 0 : index
    %23 = vector.load %arg2[%c0_21, %c1_22, %c0_23, %c0_24] : memref<1x10x10x128xbf16, #tpu.memory_space<vmem>>, vector<1x8x8x128xbf16>
    %24 = vector.shape_cast %23 : vector<1x8x8x128xbf16> to vector<8x8x128xbf16>
    %25 = vector.shape_cast %24 : vector<8x8x128xbf16> to vector<64x128xbf16>
    %c3 = arith.constant 3 : index
    %c0_25 = arith.constant 0 : index
    %c0_26 = arith.constant 0 : index
    %26 = vector.load %arg3[%c3, %c0_25, %c0_26] : memref<9x128x128xbf16, #tpu.memory_space<vmem>>, vector<1x128x128xbf16>
    %27 = vector.shape_cast %26 : vector<1x128x128xbf16> to vector<128x128xbf16>
    %cst_27 = arith.constant dense<0.000000e+00> : vector<64x128xf32>
    %28 = tpu.matmul %25, %27, %cst_27 {dimension_numbers = #tpu.dot_dimension_numbers<[1], [0], [0], [1], [0, 0, 1, 1], [], []>} : vector<64x128xbf16>, vector<128x128xbf16>, vector<64x128xf32> -> vector<64x128xf32>
    %29 = arith.addf %22, %28 : vector<64x128xf32>
    %c0_28 = arith.constant 0 : index
    %c1_29 = arith.constant 1 : index
    %c1_30 = arith.constant 1 : index
    %c0_31 = arith.constant 0 : index
    %30 = vector.load %arg2[%c0_28, %c1_29, %c1_30, %c0_31] : memref<1x10x10x128xbf16, #tpu.memory_space<vmem>>, vector<1x8x8x128xbf16>
    %31 = vector.shape_cast %30 : vector<1x8x8x128xbf16> to vector<8x8x128xbf16>
    %32 = vector.shape_cast %31 : vector<8x8x128xbf16> to vector<64x128xbf16>
    %c4 = arith.constant 4 : index
    %c0_32 = arith.constant 0 : index
    %c0_33 = arith.constant 0 : index
    %33 = vector.load %arg3[%c4, %c0_32, %c0_33] : memref<9x128x128xbf16, #tpu.memory_space<vmem>>, vector<1x128x128xbf16>
    %34 = vector.shape_cast %33 : vector<1x128x128xbf16> to vector<128x128xbf16>
    %cst_34 = arith.constant dense<0.000000e+00> : vector<64x128xf32>
    %35 = tpu.matmul %32, %34, %cst_34 {dimension_numbers = #tpu.dot_dimension_numbers<[1], [0], [0], [1], [0, 0, 1, 1], [], []>} : vector<64x128xbf16>, vector<128x128xbf16>, vector<64x128xf32> -> vector<64x128xf32>
    %36 = arith.addf %29, %35 : vector<64x128xf32>
    %c0_35 = arith.constant 0 : index
    %c1_36 = arith.constant 1 : index
    %c2_37 = arith.constant 2 : index
    %c0_38 = arith.constant 0 : index
    %37 = vector.load %arg2[%c0_35, %c1_36, %c2_37, %c0_38] : memref<1x10x10x128xbf16, #tpu.memory_space<vmem>>, vector<1x8x8x128xbf16>
    %38 = vector.shape_cast %37 : vector<1x8x8x128xbf16> to vector<8x8x128xbf16>
    %39 = vector.shape_cast %38 : vector<8x8x128xbf16> to vector<64x128xbf16>
    %c5 = arith.constant 5 : index
    %c0_39 = arith.constant 0 : index
    %c0_40 = arith.constant 0 : index
    %40 = vector.load %arg3[%c5, %c0_39, %c0_40] : memref<9x128x128xbf16, #tpu.memory_space<vmem>>, vector<1x128x128xbf16>
    %41 = vector.shape_cast %40 : vector<1x128x128xbf16> to vector<128x128xbf16>
    %cst_41 = arith.constant dense<0.000000e+00> : vector<64x128xf32>
    %42 = tpu.matmul %39, %41, %cst_41 {dimension_numbers = #tpu.dot_dimension_numbers<[1], [0], [0], [1], [0, 0, 1, 1], [], []>} : vector<64x128xbf16>, vector<128x128xbf16>, vector<64x128xf32> -> vector<64x128xf32>
    %43 = arith.addf %36, %42 : vector<64x128xf32>
    %c0_42 = arith.constant 0 : index
    %c2_43 = arith.constant 2 : index
    %c0_44 = arith.constant 0 : index
    %c0_45 = arith.constant 0 : index
    %44 = vector.load %arg2[%c0_42, %c2_43, %c0_44, %c0_45] : memref<1x10x10x128xbf16, #tpu.memory_space<vmem>>, vector<1x8x8x128xbf16>
    %45 = vector.shape_cast %44 : vector<1x8x8x128xbf16> to vector<8x8x128xbf16>
    %46 = vector.shape_cast %45 : vector<8x8x128xbf16> to vector<64x128xbf16>
    %c6 = arith.constant 6 : index
    %c0_46 = arith.constant 0 : index
    %c0_47 = arith.constant 0 : index
    %47 = vector.load %arg3[%c6, %c0_46, %c0_47] : memref<9x128x128xbf16, #tpu.memory_space<vmem>>, vector<1x128x128xbf16>
    %48 = vector.shape_cast %47 : vector<1x128x128xbf16> to vector<128x128xbf16>
    %cst_48 = arith.constant dense<0.000000e+00> : vector<64x128xf32>
    %49 = tpu.matmul %46, %48, %cst_48 {dimension_numbers = #tpu.dot_dimension_numbers<[1], [0], [0], [1], [0, 0, 1, 1], [], []>} : vector<64x128xbf16>, vector<128x128xbf16>, vector<64x128xf32> -> vector<64x128xf32>
    %50 = arith.addf %43, %49 : vector<64x128xf32>
    %c0_49 = arith.constant 0 : index
    %c2_50 = arith.constant 2 : index
    %c1_51 = arith.constant 1 : index
    %c0_52 = arith.constant 0 : index
    %51 = vector.load %arg2[%c0_49, %c2_50, %c1_51, %c0_52] : memref<1x10x10x128xbf16, #tpu.memory_space<vmem>>, vector<1x8x8x128xbf16>
    %52 = vector.shape_cast %51 : vector<1x8x8x128xbf16> to vector<8x8x128xbf16>
    %53 = vector.shape_cast %52 : vector<8x8x128xbf16> to vector<64x128xbf16>
    %c7 = arith.constant 7 : index
    %c0_53 = arith.constant 0 : index
    %c0_54 = arith.constant 0 : index
    %54 = vector.load %arg3[%c7, %c0_53, %c0_54] : memref<9x128x128xbf16, #tpu.memory_space<vmem>>, vector<1x128x128xbf16>
    %55 = vector.shape_cast %54 : vector<1x128x128xbf16> to vector<128x128xbf16>
    %cst_55 = arith.constant dense<0.000000e+00> : vector<64x128xf32>
    %56 = tpu.matmul %53, %55, %cst_55 {dimension_numbers = #tpu.dot_dimension_numbers<[1], [0], [0], [1], [0, 0, 1, 1], [], []>} : vector<64x128xbf16>, vector<128x128xbf16>, vector<64x128xf32> -> vector<64x128xf32>
    %57 = arith.addf %50, %56 : vector<64x128xf32>
    %c0_56 = arith.constant 0 : index
    %c2_57 = arith.constant 2 : index
    %c2_58 = arith.constant 2 : index
    %c0_59 = arith.constant 0 : index
    %58 = vector.load %arg2[%c0_56, %c2_57, %c2_58, %c0_59] : memref<1x10x10x128xbf16, #tpu.memory_space<vmem>>, vector<1x8x8x128xbf16>
    %59 = vector.shape_cast %58 : vector<1x8x8x128xbf16> to vector<8x8x128xbf16>
    %60 = vector.shape_cast %59 : vector<8x8x128xbf16> to vector<64x128xbf16>
    %c8 = arith.constant 8 : index
    %c0_60 = arith.constant 0 : index
    %c0_61 = arith.constant 0 : index
    %61 = vector.load %arg3[%c8, %c0_60, %c0_61] : memref<9x128x128xbf16, #tpu.memory_space<vmem>>, vector<1x128x128xbf16>
    %62 = vector.shape_cast %61 : vector<1x128x128xbf16> to vector<128x128xbf16>
    %cst_62 = arith.constant dense<0.000000e+00> : vector<64x128xf32>
    %63 = tpu.matmul %60, %62, %cst_62 {dimension_numbers = #tpu.dot_dimension_numbers<[1], [0], [0], [1], [0, 0, 1, 1], [], []>} : vector<64x128xbf16>, vector<128x128xbf16>, vector<64x128xf32> -> vector<64x128xf32>
    %64 = arith.addf %57, %63 : vector<64x128xf32>
    %65 = arith.truncf %64 : vector<64x128xf32> to vector<64x128xbf16>
    %c0_63 = arith.constant 0 : index
    %c0_64 = arith.constant 0 : index
    %c0_65 = arith.constant 0 : index
    %66 = vector.load %arg4[%c0_63, %c0_64, %c0_65] : memref<1x64x128xbf16, #tpu.memory_space<vmem>>, vector<1x64x128xbf16>
    %67 = vector.shape_cast %66 : vector<1x64x128xbf16> to vector<64x128xbf16>
    %68 = vector.shape_cast %65 : vector<64x128xbf16> to vector<1x64x128xbf16>
    tpu.vector_store %arg4[%c0_63, %c0_64, %c0_65], %68 {strides = array<i32>} : memref<1x64x128xbf16, #tpu.memory_space<vmem>>, vector<1x64x128xbf16>,
    %cst_66 = arith.constant dense<0.000000e+00> : vector<128xf32>
    %69 = vector.multi_reduction <add>, %64, %cst_66 [0] : vector<64x128xf32> to vector<128xf32>
    %70 = vector.shape_cast %69 : vector<128xf32> to vector<1x128xf32>
    %71 = arith.mulf %64, %64 : vector<64x128xf32>
    %cst_67 = arith.constant dense<0.000000e+00> : vector<128xf32>
    %72 = vector.multi_reduction <add>, %71, %cst_67 [0] : vector<64x128xf32> to vector<128xf32>
    %73 = vector.shape_cast %72 : vector<128xf32> to vector<1x128xf32>
    %cst_68 = arith.constant 0.000000e+00 : f32
    %74 = vector.broadcast %cst_68 : f32 to vector<1x128xf32>
    %cst_69 = arith.constant 0.000000e+00 : f32
    %75 = vector.broadcast %cst_69 : f32 to vector<1x128xf32>
    %cst_70 = arith.constant 0.000000e+00 : f32
    %76 = vector.broadcast %cst_70 : f32 to vector<4x128xf32>
    %77 = tpu.concatenate %70, %73, %74, %75, %76 in 0 : vector<1x128xf32>, vector<1x128xf32>, vector<1x128xf32>, vector<1x128xf32>, vector<4x128xf32> -> vector<8x128xf32>
    %c0_71 = arith.constant 0 : index
    %c0_72 = arith.constant 0 : index
    %c0_73 = arith.constant 0 : index
    %78 = vector.load %arg5[%c0_71, %c0_72, %c0_73] : memref<1x8x128xf32, #tpu.memory_space<vmem>>, vector<1x8x128xf32>
    %79 = vector.shape_cast %78 : vector<1x8x128xf32> to vector<8x128xf32>
    %80 = arith.addf %79, %77 : vector<8x128xf32>
    %c0_74 = arith.constant 0 : index
    %c0_75 = arith.constant 0 : index
    %c0_76 = arith.constant 0 : index
    %81 = vector.load %arg5[%c0_74, %c0_75, %c0_76] : memref<1x8x128xf32, #tpu.memory_space<vmem>>, vector<1x8x128xf32>
    %82 = vector.shape_cast %81 : vector<1x8x128xf32> to vector<8x128xf32>
    %83 = vector.shape_cast %80 : vector<8x128xf32> to vector<1x8x128xf32>
    tpu.vector_store %arg5[%c0_74, %c0_75, %c0_76], %83 {strides = array<i32>} : memref<1x8x128xf32, #tpu.memory_space<vmem>>, vector<1x8x128xf32>,
    return
  }
  func.func @transform_0(%arg0: i32, %arg1: i32) -> (i32, i32, i32, i32) {
    %c1_i32 = arith.constant 1 : i32
    %0 = arith.muli %arg0, %c1_i32 : i32
    %1 = arith.addi %0, %arg1 : i32
    %c0_i32 = arith.constant 0 : i32
    %c0_i32_0 = arith.constant 0 : i32
    %c0_i32_1 = arith.constant 0 : i32
    %c0_i32_2 = arith.constant 0 : i32
    return %1, %c0_i32, %c0_i32_0, %c0_i32_1 : i32, i32, i32, i32
  }
  func.func @transform_1(%arg0: i32, %arg1: i32) -> (i32, i32, i32) {
    %c0_i32 = arith.constant 0 : i32
    %c0_i32_0 = arith.constant 0 : i32
    %c0_i32_1 = arith.constant 0 : i32
    %c0_i32_2 = arith.constant 0 : i32
    return %c0_i32, %c0_i32_0, %c0_i32_1 : i32, i32, i32
  }
  func.func @transform_2(%arg0: i32, %arg1: i32) -> (i32, i32, i32) {
    %c1_i32 = arith.constant 1 : i32
    %0 = arith.muli %arg0, %c1_i32 : i32
    %1 = arith.addi %0, %arg1 : i32
    %c0_i32 = arith.constant 0 : i32
    %c0_i32_0 = arith.constant 0 : i32
    %c0_i32_1 = arith.constant 0 : i32
    return %1, %c0_i32, %c0_i32_0 : i32, i32, i32
  }
  func.func @transform_3(%arg0: i32, %arg1: i32) -> (i32, i32, i32) {
    %c0_i32 = arith.constant 0 : i32
    %c0_i32_0 = arith.constant 0 : i32
    %c0_i32_1 = arith.constant 0 : i32
    return %arg0, %c0_i32, %c0_i32_0 : i32, i32, i32
  }
}

module attributes {stable_mosaic.version = 11 : i64} {
  func.func @kernel(%arg0: i32, %arg1: memref<128x128xbf16, #tpu.memory_space<vmem>>, %arg2: memref<8x128xf32, #tpu.memory_space<vmem>>, %arg3: memref<128x128xbf16, #tpu.memory_space<vmem>>, %arg4: memref<128x128xbf16, #tpu.memory_space<vmem>>) attributes {dimension_semantics = [#tpu.dimension_semantics<parallel>], iteration_bounds = array<i64: 1>, scalar_prefetch = 0 : i64, scratch_operands = 0 : i64, tpu.core_type = #tpu.core_type<tc>, window_params = [{transform_indices = @transform_0, window_bounds = array<i64: 128, 128>}, {pipeline_mode = #tpu.pipeline_mode<synchronous>, transform_indices = @transform_1, window_bounds = array<i64: 8, 128>}, {transform_indices = @transform_2, window_bounds = array<i64: 128, 128>}, {transform_indices = @transform_3, window_bounds = array<i64: 128, 128>}]} {
    %c0 = arith.constant 0 : index
    %c0_0 = arith.constant 0 : index
    %0 = vector.load %arg2[%c0, %c0_0] : memref<8x128xf32, #tpu.memory_space<vmem>>, vector<8x128xf32>
    %c0_1 = arith.constant 0 : index
    %c0_2 = arith.constant 0 : index
    %1 = vector.load %arg1[%c0_1, %c0_2] : memref<128x128xbf16, #tpu.memory_space<vmem>>, vector<128x128xbf16>
    %2 = arith.extf %1 : vector<128x128xbf16> to vector<128x128xf32>
    %3 = vector.extract_strided_slice %0 {offsets = [0, 0], sizes = [1, 128], strides = [1, 1]} : vector<8x128xf32> to vector<1x128xf32>
    %4 = vector.broadcast %3 : vector<1x128xf32> to vector<128x128xf32>
    %5 = arith.mulf %2, %4 : vector<128x128xf32>
    %6 = vector.extract_strided_slice %0 {offsets = [1, 0], sizes = [1, 128], strides = [1, 1]} : vector<8x128xf32> to vector<1x128xf32>
    %7 = vector.broadcast %6 : vector<1x128xf32> to vector<128x128xf32>
    %8 = arith.addf %5, %7 : vector<128x128xf32>
    %c0_3 = arith.constant 0 : index
    %c0_4 = arith.constant 0 : index
    %9 = vector.load %arg3[%c0_3, %c0_4] : memref<128x128xbf16, #tpu.memory_space<vmem>>, vector<128x128xbf16>
    %10 = arith.extf %9 : vector<128x128xbf16> to vector<128x128xf32>
    %11 = vector.extract_strided_slice %0 {offsets = [2, 0], sizes = [1, 128], strides = [1, 1]} : vector<8x128xf32> to vector<1x128xf32>
    %12 = vector.broadcast %11 : vector<1x128xf32> to vector<128x128xf32>
    %13 = arith.mulf %10, %12 : vector<128x128xf32>
    %14 = vector.extract_strided_slice %0 {offsets = [3, 0], sizes = [1, 128], strides = [1, 1]} : vector<8x128xf32> to vector<1x128xf32>
    %15 = vector.broadcast %14 : vector<1x128xf32> to vector<128x128xf32>
    %16 = arith.addf %13, %15 : vector<128x128xf32>
    %17 = arith.addf %8, %16 : vector<128x128xf32>
    %cst = arith.constant 0.000000e+00 : f32
    %18 = vector.broadcast %cst : f32 to vector<128x128xf32>
    %19 = arith.maximumf %17, %18 : vector<128x128xf32>
    %20 = arith.truncf %19 : vector<128x128xf32> to vector<128x128xbf16>
    %c0_5 = arith.constant 0 : index
    %c0_6 = arith.constant 0 : index
    %21 = vector.load %arg4[%c0_5, %c0_6] : memref<128x128xbf16, #tpu.memory_space<vmem>>, vector<128x128xbf16>
    tpu.vector_store %arg4[%c0_5, %c0_6], %20 {strides = array<i32>} : memref<128x128xbf16, #tpu.memory_space<vmem>>, vector<128x128xbf16>,
    return
  }
  func.func @transform_0(%arg0: i32) -> (i32, i32) {
    %c0_i32 = arith.constant 0 : i32
    %c0_i32_0 = arith.constant 0 : i32
    return %arg0, %c0_i32 : i32, i32
  }
  func.func @transform_1(%arg0: i32) -> (i32, i32) {
    %c0_i32 = arith.constant 0 : i32
    %c0_i32_0 = arith.constant 0 : i32
    %c0_i32_1 = arith.constant 0 : i32
    return %c0_i32, %c0_i32_0 : i32, i32
  }
  func.func @transform_2(%arg0: i32) -> (i32, i32) {
    %c0_i32 = arith.constant 0 : i32
    %c0_i32_0 = arith.constant 0 : i32
    return %arg0, %c0_i32 : i32, i32
  }
  func.func @transform_3(%arg0: i32) -> (i32, i32) {
    %c0_i32 = arith.constant 0 : i32
    %c0_i32_0 = arith.constant 0 : i32
    return %arg0, %c0_i32 : i32, i32
  }
}

</mosaic_0001>

<llo_original>
// kernel: _lambda_.9
$region0: #{_lambda_.9}
  #allocation0 [shape = 'u32[]', space=smem, size = 0x4, offset = 0x4, fixed_abs, tag = 'smem constant byte address 0x4 - core index']
  #allocation1 [shape = 'u32[144,128]{1,0:T(1,128)}', space=vmem, size = 0x12000, scoped, tag = 'internal scratch']
  %s0 = inlined_call_operand.vmem [shape: bf16[128,128], index: 0, kind: input, shape index: {}]
  %s1 = inlined_call_operand.vmem [shape: f32[8,128], index: 1, kind: input, shape index: {}]
  %s2 = inlined_call_operand.vmem [shape: bf16[128,128], index: 2, kind: output, shape index: {}]
  %s3 = sld [smem:[#allocation0]]
  $region18: #{_lambda_.9} parent=0
    _
  %s5 = ssub.s32 1, %s3
  %s6 = scalar_select 0, %s5, %s3
  // Predicated region
  $region2: #{_lambda_.9} parent=0 // pred_check
    _
  $region3: #{_lambda_.9} parent=0 // pred_check_branch
    %8 = sbr.rel (0) target = $region5
  $region4: #{_lambda_.9} parent=0 // pred_region
    _
  $region5: #{_lambda_.9} parent=0 // pred_fallthru
    _
  // Predicated region
  $region6: #{_lambda_.9} parent=0 // pred_check
    _
  $region7: #{_lambda_.9} parent=0 // pred_check_branch
    %10 = sbr.rel (0) target = $region9
  $region8: #{_lambda_.9} parent=0 // pred_region
    _
  $region9: #{_lambda_.9} parent=0 // pred_fallthru
    _
  %v11 = vld [vmem:[%s1] sm:$0xff]
  %v12 = vld [vmem:[%s0] sm:$0xf]
  %v13 = vld [vmem:[%s0 + $0x4] sm:$0xf]
  %v14 = vld [vmem:[%s0 + $0x8] sm:$0xf]
  %v15 = vld [vmem:[%s0 + $0xc] sm:$0xf]
  %v16 = vld [vmem:[%s0 + $0x10] sm:$0xf]
  %v17 = vld [vmem:[%s0 + $0x14] sm:$0xf]
  %v18 = vld [vmem:[%s0 + $0x18] sm:$0xf]
  %v19 = vld [vmem:[%s0 + $0x1c] sm:$0xf]
  %v20 = vld [vmem:[%s0 + $0x20] sm:$0xf]
  %v21 = vld [vmem:[%s0 + $0x24] sm:$0xf]
  %v22 = vld [vmem:[%s0 + $0x28] sm:$0xf]
  %v23 = vld [vmem:[%s0 + $0x2c] sm:$0xf]
  %v24 = vld [vmem:[%s0 + $0x30] sm:$0xf]
  %v25 = vld [vmem:[%s0 + $0x34] sm:$0xf]
  %v26 = vld [vmem:[%s0 + $0x38] sm:$0xf]
  %v27 = vld [vmem:[%s0 + $0x3c] sm:$0xf]
  %v28 = vunpack.c.l.bf16 %v12
  %v29 = vunpack.c.l.bf16 %v13
  %v30 = vunpack.c.l.bf16 %v14
  %v31 = vunpack.c.l.bf16 %v15
  %v32 = vunpack.c.l.bf16 %v16
  %v33 = vunpack.c.l.bf16 %v17
  %v34 = vunpack.c.l.bf16 %v18
  %v35 = vunpack.c.l.bf16 %v19
  %v36 = vunpack.c.l.bf16 %v20
  %v37 = vunpack.c.l.bf16 %v21
  %v38 = vunpack.c.l.bf16 %v22
  %v39 = vunpack.c.l.bf16 %v23
  %v40 = vunpack.c.l.bf16 %v24
  %v41 = vunpack.c.l.bf16 %v25
  %v42 = vunpack.c.l.bf16 %v26
  %v43 = vunpack.c.l.bf16 %v27
  %v44 = vlaneseq
  %v45 = vshrl.u32 %v44, 7
  %v46 = vsub.s32 0, %v45
  %v47 = vrot.slane %v11, %v46
  %v48 = vmul.f32 %v28, %v47
  %v49 = vmul.f32 %v29, %v47
  %v50 = vmul.f32 %v30, %v47
  %v51 = vmul.f32 %v31, %v47
  %v52 = vmul.f32 %v32, %v47
  %v53 = vmul.f32 %v33, %v47
  %v54 = vmul.f32 %v34, %v47
  %v55 = vmul.f32 %v35, %v47
  %v56 = vmul.f32 %v36, %v47
  %v57 = vmul.f32 %v37, %v47
  %v58 = vmul.f32 %v38, %v47
  %v59 = vmul.f32 %v39, %v47
  %v60 = vmul.f32 %v40, %v47
  %v61 = vmul.f32 %v41, %v47
  %v62 = vmul.f32 %v42, %v47
  %v63 = vmul.f32 %v43, %v47
  %v64 = vlaneseq
  %v65 = vshrl.u32 %v64, 7
  %v66 = vsub.s32 1, %v65
  %v67 = vrot.slane %v11, %v66
  %v68 = vadd.f32 %v48, %v67
  %v69 = vadd.f32 %v49, %v67
  %v70 = vadd.f32 %v50, %v67
  %v71 = vadd.f32 %v51, %v67
  %v72 = vadd.f32 %v52, %v67
  %v73 = vadd.f32 %v53, %v67
  %v74 = vadd.f32 %v54, %v67
  %v75 = vadd.f32 %v55, %v67
  %v76 = vadd.f32 %v56, %v67
  %v77 = vadd.f32 %v57, %v67
  %v78 = vadd.f32 %v58, %v67
  %v79 = vadd.f32 %v59, %v67
  %v80 = vadd.f32 %v60, %v67
  %v81 = vadd.f32 %v61, %v67
  %v82 = vadd.f32 %v62, %v67
  %v83 = vadd.f32 %v63, %v67
  %v84 = vmax.f32 %v68, 0.0
  %v85 = vmax.f32 %v69, 0.0
  %v86 = vmax.f32 %v70, 0.0
  %v87 = vmax.f32 %v71, 0.0
  %v88 = vmax.f32 %v72, 0.0
  %v89 = vmax.f32 %v73, 0.0
  %v90 = vmax.f32 %v74, 0.0
  %v91 = vmax.f32 %v75, 0.0
  %v92 = vmax.f32 %v76, 0.0
  %v93 = vmax.f32 %v77, 0.0
  %v94 = vmax.f32 %v78, 0.0
  %v95 = vmax.f32 %v79, 0.0
  %v96 = vmax.f32 %v80, 0.0
  %v97 = vmax.f32 %v81, 0.0
  %v98 = vmax.f32 %v82, 0.0
  %v99 = vmax.f32 %v83, 0.0
  %v100 = vpack.c.bf16 %v85, %v84
  %v101 = vpack.c.bf16 %v87, %v86
  %v102 = vpack.c.bf16 %v89, %v88
  %v103 = vpack.c.bf16 %v91, %v90
  %v104 = vpack.c.bf16 %v93, %v92
  %v105 = vpack.c.bf16 %v95, %v94
  %v106 = vpack.c.bf16 %v97, %v96
  %v107 = vpack.c.bf16 %v99, %v98
  %v116 = vunpack.c.l.b16 %v100
  %v117 = vunpack.c.h.b16 %v100
  %v118 = vunpack.c.l.b16 %v101
  %v119 = vunpack.c.h.b16 %v101
  %v120 = vunpack.c.l.b16 %v102
  %v121 = vunpack.c.h.b16 %v102
  %v122 = vunpack.c.l.b16 %v103
  %v123 = vunpack.c.h.b16 %v103
  %v124 = vunpack.c.l.b16 %v104
  %v125 = vunpack.c.h.b16 %v104
  %v126 = vunpack.c.l.b16 %v105
  %v127 = vunpack.c.h.b16 %v105
  %v128 = vunpack.c.l.b16 %v106
  %v129 = vunpack.c.h.b16 %v106
  %v130 = vunpack.c.l.b16 %v107
  %v131 = vunpack.c.h.b16 %v107
  %v132 = vpack.c.b16 %v116, %v116
  %v133 = vpack.c.b16 %v117, %v117
  %v134 = vpack.c.b16 %v118, %v118
  %v135 = vpack.c.b16 %v119, %v119
  %v136 = vpack.c.b16 %v120, %v120
  %v137 = vpack.c.b16 %v121, %v121
  %v138 = vpack.c.b16 %v122, %v122
  %v139 = vpack.c.b16 %v123, %v123
  %v140 = vpack.c.b16 %v124, %v124
  %v141 = vpack.c.b16 %v125, %v125
  %v142 = vpack.c.b16 %v126, %v126
  %v143 = vpack.c.b16 %v127, %v127
  %v144 = vpack.c.b16 %v128, %v128
  %v145 = vpack.c.b16 %v129, %v129
  %v146 = vpack.c.b16 %v130, %v130
  %v147 = vpack.c.b16 %v131, %v131
  %164 = vst [vmem:[%s2] sm:$0xf] %v132
  %165 = vst [vmem:[%s2 + $0x4] sm:$0xf] %v133
  %166 = vst [vmem:[%s2 + $0x8] sm:$0xf] %v134
  %167 = vst [vmem:[%s2 + $0xc] sm:$0xf] %v135
  %168 = vst [vmem:[%s2 + $0x10] sm:$0xf] %v136
  %169 = vst [vmem:[%s2 + $0x14] sm:$0xf] %v137
  %170 = vst [vmem:[%s2 + $0x18] sm:$0xf] %v138
  %171 = vst [vmem:[%s2 + $0x1c] sm:$0xf] %v139
  %172 = vst [vmem:[%s2 + $0x20] sm:$0xf] %v140
  %173 = vst [vmem:[%s2 + $0x24] sm:$0xf] %v141
  %174 = vst [vmem:[%s2 + $0x28] sm:$0xf] %v142
  %175 = vst [vmem:[%s2 + $0x2c] sm:$0xf] %v143
  %176 = vst [vmem:[%s2 + $0x30] sm:$0xf] %v144
  %177 = vst [vmem:[%s2 + $0x34] sm:$0xf] %v145
  %178 = vst [vmem:[%s2 + $0x38] sm:$0xf] %v146
  %179 = vst [vmem:[%s2 + $0x3c] sm:$0xf] %v147
  // Predicated region
  $region10: #{_lambda_.9} parent=0 // pred_check
    _
  $region11: #{_lambda_.9} parent=0 // pred_check_branch
    %181 = sbr.rel (0) target = $region13
  $region12: #{_lambda_.9} parent=0 // pred_region
    _
  $region13: #{_lambda_.9} parent=0 // pred_fallthru
    _
  // Predicated region
  $region14: #{_lambda_.9} parent=0 // pred_check
    _
  $region15: #{_lambda_.9} parent=0 // pred_check_branch
    %183 = sbr.rel (0) target = $region17
  $region16: #{_lambda_.9} parent=0 // pred_region
    _
  $region17: #{_lambda_.9} parent=0 // pred_fallthru
    _

// kernel: _lambda_.11
$region0: #{_lambda_.11}
  #allocation0 [shape = 'u32[]', space=smem, size = 0x4, offset = 0x4, fixed_abs, tag = 'smem constant byte address 0x4 - core index']
  #allocation1 [shape = 'u32[144,128]{1,0:T(1,128)}', space=vmem, size = 0x12000, scoped, tag = 'internal scratch']
  %s0 = inlined_call_operand.vmem [shape: bf16[128,128], index: 0, kind: input, shape index: {}]
  %s1 = inlined_call_operand.vmem [shape: f32[8,128], index: 1, kind: input, shape index: {}]
  %s2 = inlined_call_operand.vmem [shape: bf16[128,128], index: 2, kind: input, shape index: {}]
  %s3 = inlined_call_operand.vmem [shape: bf16[128,128], index: 3, kind: output, shape index: {}]
  %s4 = sld [smem:[#allocation0]]
  $region22: #{_lambda_.11} parent=0
    _
  %s6 = ssub.s32 1, %s4
  %s7 = scalar_select 0, %s6, %s4
  // Predicated region
  $region2: #{_lambda_.11} parent=0 // pred_check
    _
  $region3: #{_lambda_.11} parent=0 // pred_check_branch
    %9 = sbr.rel (0) target = $region5
  $region4: #{_lambda_.11} parent=0 // pred_region
    _
  $region5: #{_lambda_.11} parent=0 // pred_fallthru
    _
  // Predicated region
  $region6: #{_lambda_.11} parent=0 // pred_check
    _
  $region7: #{_lambda_.11} parent=0 // pred_check_branch
    %11 = sbr.rel (0) target = $region9
  $region8: #{_lambda_.11} parent=0 // pred_region
    _
  $region9: #{_lambda_.11} parent=0 // pred_fallthru
    _
  // Predicated region
  $region10: #{_lambda_.11} parent=0 // pred_check
    _
  $region11: #{_lambda_.11} parent=0 // pred_check_branch
    %13 = sbr.rel (0) target = $region13
  $region12: #{_lambda_.11} parent=0 // pred_region
    _
  $region13: #{_lambda_.11} parent=0 // pred_fallthru
    _
  %v14 = vld [vmem:[%s1] sm:$0xff]
  %v15 = vld [vmem:[%s0] sm:$0xf]
  %v16 = vld [vmem:[%s0 + $0x4] sm:$0xf]
  %v17 = vld [vmem:[%s0 + $0x8] sm:$0xf]
  %v18 = vld [vmem:[%s0 + $0xc] sm:$0xf]
  %v19 = vld [vmem:[%s0 + $0x10] sm:$0xf]
  %v20 = vld [vmem:[%s0 + $0x14] sm:$0xf]
  %v21 = vld [vmem:[%s0 + $0x18] sm:$0xf]
  %v22 = vld [vmem:[%s0 + $0x1c] sm:$0xf]
  %v23 = vld [vmem:[%s0 + $0x20] sm:$0xf]
  %v24 = vld [vmem:[%s0 + $0x24] sm:$0xf]
  %v25 = vld [vmem:[%s0 + $0x28] sm:$0xf]
  %v26 = vld [vmem:[%s0 + $0x2c] sm:$0xf]
  %v27 = vld [vmem:[%s0 + $0x30] sm:$0xf]
  %v28 = vld [vmem:[%s0 + $0x34] sm:$0xf]
  %v29 = vld [vmem:[%s0 + $0x38] sm:$0xf]
  %v30 = vld [vmem:[%s0 + $0x3c] sm:$0xf]
  %v31 = vunpack.c.l.bf16 %v15
  %v32 = vunpack.c.l.bf16 %v16
  %v33 = vunpack.c.l.bf16 %v17
  %v34 = vunpack.c.l.bf16 %v18
  %v35 = vunpack.c.l.bf16 %v19
  %v36 = vunpack.c.l.bf16 %v20
  %v37 = vunpack.c.l.bf16 %v21
  %v38 = vunpack.c.l.bf16 %v22
  %v39 = vunpack.c.l.bf16 %v23
  %v40 = vunpack.c.l.bf16 %v24
  %v41 = vunpack.c.l.bf16 %v25
  %v42 = vunpack.c.l.bf16 %v26
  %v43 = vunpack.c.l.bf16 %v27
  %v44 = vunpack.c.l.bf16 %v28
  %v45 = vunpack.c.l.bf16 %v29
  %v46 = vunpack.c.l.bf16 %v30
  %v47 = vlaneseq
  %v48 = vshrl.u32 %v47, 7
  %v49 = vsub.s32 0, %v48
  %v50 = vrot.slane %v14, %v49
  %v51 = vmul.f32 %v31, %v50
  %v52 = vmul.f32 %v32, %v50
  %v53 = vmul.f32 %v33, %v50
  %v54 = vmul.f32 %v34, %v50
  %v55 = vmul.f32 %v35, %v50
  %v56 = vmul.f32 %v36, %v50
  %v57 = vmul.f32 %v37, %v50
  %v58 = vmul.f32 %v38, %v50
  %v59 = vmul.f32 %v39, %v50
  %v60 = vmul.f32 %v40, %v50
  %v61 = vmul.f32 %v41, %v50
  %v62 = vmul.f32 %v42, %v50
  %v63 = vmul.f32 %v43, %v50
  %v64 = vmul.f32 %v44, %v50
  %v65 = vmul.f32 %v45, %v50
  %v66 = vmul.f32 %v46, %v50
  %v67 = vlaneseq
  %v68 = vshrl.u32 %v67, 7
  %v69 = vsub.s32 1, %v68
  %v70 = vrot.slane %v14, %v69
  %v71 = vadd.f32 %v51, %v70
  %v72 = vadd.f32 %v52, %v70
  %v73 = vadd.f32 %v53, %v70
  %v74 = vadd.f32 %v54, %v70
  %v75 = vadd.f32 %v55, %v70
  %v76 = vadd.f32 %v56, %v70
  %v77 = vadd.f32 %v57, %v70
  %v78 = vadd.f32 %v58, %v70
  %v79 = vadd.f32 %v59, %v70
  %v80 = vadd.f32 %v60, %v70
  %v81 = vadd.f32 %v61, %v70
  %v82 = vadd.f32 %v62, %v70
  %v83 = vadd.f32 %v63, %v70
  %v84 = vadd.f32 %v64, %v70
  %v85 = vadd.f32 %v65, %v70
  %v86 = vadd.f32 %v66, %v70
  %v87 = vld [vmem:[%s2] sm:$0xf]
  %v88 = vld [vmem:[%s2 + $0x4] sm:$0xf]
  %v89 = vld [vmem:[%s2 + $0x8] sm:$0xf]
  %v90 = vld [vmem:[%s2 + $0xc] sm:$0xf]
  %v91 = vld [vmem:[%s2 + $0x10] sm:$0xf]
  %v92 = vld [vmem:[%s2 + $0x14] sm:$0xf]
  %v93 = vld [vmem:[%s2 + $0x18] sm:$0xf]
  %v94 = vld [vmem:[%s2 + $0x1c] sm:$0xf]
  %v95 = vld [vmem:[%s2 + $0x20] sm:$0xf]
  %v96 = vld [vmem:[%s2 + $0x24] sm:$0xf]
  %v97 = vld [vmem:[%s2 + $0x28] sm:$0xf]
  %v98 = vld [vmem:[%s2 + $0x2c] sm:$0xf]
  %v99 = vld [vmem:[%s2 + $0x30] sm:$0xf]
  %v100 = vld [vmem:[%s2 + $0x34] sm:$0xf]
  %v101 = vld [vmem:[%s2 + $0x38] sm:$0xf]
  %v102 = vld [vmem:[%s2 + $0x3c] sm:$0xf]
  %v103 = vunpack.c.l.bf16 %v87
  %v104 = vunpack.c.l.bf16 %v88
  %v105 = vunpack.c.l.bf16 %v89
  %v106 = vunpack.c.l.bf16 %v90
  %v107 = vunpack.c.l.bf16 %v91
  %v108 = vunpack.c.l.bf16 %v92
  %v109 = vunpack.c.l.bf16 %v93
  %v110 = vunpack.c.l.bf16 %v94
  %v111 = vunpack.c.l.bf16 %v95
  %v112 = vunpack.c.l.bf16 %v96
  %v113 = vunpack.c.l.bf16 %v97
  %v114 = vunpack.c.l.bf16 %v98
  %v115 = vunpack.c.l.bf16 %v99
  %v116 = vunpack.c.l.bf16 %v100
  %v117 = vunpack.c.l.bf16 %v101
  %v118 = vunpack.c.l.bf16 %v102
  %v119 = vlaneseq
  %v120 = vshrl.u32 %v119, 7
  %v121 = vsub.s32 2, %v120
  %v122 = vrot.slane %v14, %v121
  %v123 = vmul.f32 %v103, %v122
  %v124 = vmul.f32 %v104, %v122
  %v125 = vmul.f32 %v105, %v122
  %v126 = vmul.f32 %v106, %v122
  %v127 = vmul.f32 %v107, %v122
  %v128 = vmul.f32 %v108, %v122
  %v129 = vmul.f32 %v109, %v122
  %v130 = vmul.f32 %v110, %v122
  %v131 = vmul.f32 %v111, %v122
  %v132 = vmul.f32 %v112, %v122
  %v133 = vmul.f32 %v113, %v122
  %v134 = vmul.f32 %v114, %v122
  %v135 = vmul.f32 %v115, %v122
  %v136 = vmul.f32 %v116, %v122
  %v137 = vmul.f32 %v117, %v122
  %v138 = vmul.f32 %v118, %v122
  %v139 = vlaneseq
  %v140 = vshrl.u32 %v139, 7
  %v141 = vsub.s32 3, %v140
  %v142 = vrot.slane %v14, %v141
  %v143 = vadd.f32 %v123, %v142
  %v144 = vadd.f32 %v124, %v142
  %v145 = vadd.f32 %v125, %v142
  %v146 = vadd.f32 %v126, %v142
  %v147 = vadd.f32 %v127, %v142
  %v148 = vadd.f32 %v128, %v142
  %v149 = vadd.f32 %v129, %v142
  %v150 = vadd.f32 %v130, %v142
  %v151 = vadd.f32 %v131, %v142
  %v152 = vadd.f32 %v132, %v142
  %v153 = vadd.f32 %v133, %v142
  %v154 = vadd.f32 %v134, %v142
  %v155 = vadd.f32 %v135, %v142
  %v156 = vadd.f32 %v136, %v142
  %v157 = vadd.f32 %v137, %v142
  %v158 = vadd.f32 %v138, %v142
  %v159 = vadd.f32 %v71, %v143
  %v160 = vadd.f32 %v72, %v144
  %v161 = vadd.f32 %v73, %v145
  %v162 = vadd.f32 %v74, %v146
  %v163 = vadd.f32 %v75, %v147
  %v164 = vadd.f32 %v76, %v148
  %v165 = vadd.f32 %v77, %v149
  %v166 = vadd.f32 %v78, %v150
  %v167 = vadd.f32 %v79, %v151
  %v168 = vadd.f32 %v80, %v152
  %v169 = vadd.f32 %v81, %v153
  %v170 = vadd.f32 %v82, %v154
  %v171 = vadd.f32 %v83, %v155
  %v172 = vadd.f32 %v84, %v156
  %v173 = vadd.f32 %v85, %v157
  %v174 = vadd.f32 %v86, %v158
  %v175 = vmax.f32 %v159, 0.0
  %v176 = vmax.f32 %v160, 0.0
  %v177 = vmax.f32 %v161, 0.0
  %v178 = vmax.f32 %v162, 0.0
  %v179 = vmax.f32 %v163, 0.0
  %v180 = vmax.f32 %v164, 0.0
  %v181 = vmax.f32 %v165, 0.0
  %v182 = vmax.f32 %v166, 0.0
  %v183 = vmax.f32 %v167, 0.0
  %v184 = vmax.f32 %v168, 0.0
  %v185 = vmax.f32 %v169, 0.0
  %v186 = vmax.f32 %v170, 0.0
  %v187 = vmax.f32 %v171, 0.0
  %v188 = vmax.f32 %v172, 0.0
  %v189 = vmax.f32 %v173, 0.0
  %v190 = vmax.f32 %v174, 0.0
  %v191 = vpack.c.bf16 %v176, %v175
  %v192 = vpack.c.bf16 %v178, %v177
  %v193 = vpack.c.bf16 %v180, %v179
  %v194 = vpack.c.bf16 %v182, %v181
  %v195 = vpack.c.bf16 %v184, %v183
  %v196 = vpack.c.bf16 %v186, %v185
  %v197 = vpack.c.bf16 %v188, %v187
  %v198 = vpack.c.bf16 %v190, %v189
  %v207 = vunpack.c.l.b16 %v191
  %v208 = vunpack.c.h.b16 %v191
  %v209 = vunpack.c.l.b16 %v192
  %v210 = vunpack.c.h.b16 %v192
  %v211 = vunpack.c.l.b16 %v193
  %v212 = vunpack.c.h.b16 %v193
  %v213 = vunpack.c.l.b16 %v194
  %v214 = vunpack.c.h.b16 %v194
  %v215 = vunpack.c.l.b16 %v195
  %v216 = vunpack.c.h.b16 %v195
  %v217 = vunpack.c.l.b16 %v196
  %v218 = vunpack.c.h.b16 %v196
  %v219 = vunpack.c.l.b16 %v197
  %v220 = vunpack.c.h.b16 %v197
  %v221 = vunpack.c.l.b16 %v198
  %v222 = vunpack.c.h.b16 %v198
  %v223 = vpack.c.b16 %v207, %v207
  %v224 = vpack.c.b16 %v208, %v208
  %v225 = vpack.c.b16 %v209, %v209
  %v226 = vpack.c.b16 %v210, %v210
  %v227 = vpack.c.b16 %v211, %v211
  %v228 = vpack.c.b16 %v212, %v212
  %v229 = vpack.c.b16 %v213, %v213
  %v230 = vpack.c.b16 %v214, %v214
  %v231 = vpack.c.b16 %v215, %v215
  %v232 = vpack.c.b16 %v216, %v216
  %v233 = vpack.c.b16 %v217, %v217
  %v234 = vpack.c.b16 %v218, %v218
  %v235 = vpack.c.b16 %v219, %v219
  %v236 = vpack.c.b16 %v220, %v220
  %v237 = vpack.c.b16 %v221, %v221
  %v238 = vpack.c.b16 %v222, %v222
  %255 = vst [vmem:[%s3] sm:$0xf] %v223
  %256 = vst [vmem:[%s3 + $0x4] sm:$0xf] %v224
  %257 = vst [vmem:[%s3 + $0x8] sm:$0xf] %v225
  %258 = vst [vmem:[%s3 + $0xc] sm:$0xf] %v226
  %259 = vst [vmem:[%s3 + $0x10] sm:$0xf] %v227
  %260 = vst [vmem:[%s3 + $0x14] sm:$0xf] %v228
  %261 = vst [vmem:[%s3 + $0x18] sm:$0xf] %v229
  %262 = vst [vmem:[%s3 + $0x1c] sm:$0xf] %v230
  %263 = vst [vmem:[%s3 + $0x20] sm:$0xf] %v231
  %264 = vst [vmem:[%s3 + $0x24] sm:$0xf] %v232
  %265 = vst [vmem:[%s3 + $0x28] sm:$0xf] %v233
  %266 = vst [vmem:[%s3 + $0x2c] sm:$0xf] %v234
  %267 = vst [vmem:[%s3 + $0x30] sm:$0xf] %v235
  %268 = vst [vmem:[%s3 + $0x34] sm:$0xf] %v236
  %269 = vst [vmem:[%s3 + $0x38] sm:$0xf] %v237
  %270 = vst [vmem:[%s3 + $0x3c] sm:$0xf] %v238
  // Predicated region
  $region14: #{_lambda_.11} parent=0 // pred_check
    _
  $region15: #{_lambda_.11} parent=0 // pred_check_branch
    %272 = sbr.rel (0) target = $region17
  $region16: #{_lambda_.11} parent=0 // pred_region
    _
  $region17: #{_lambda_.11} parent=0 // pred_fallthru
    _
  // Predicated region
  $region18: #{_lambda_.11} parent=0 // pred_check
    _
  $region19: #{_lambda_.11} parent=0 // pred_check_branch
    %274 = sbr.rel (0) target = $region21
  $region20: #{_lambda_.11} parent=0 // pred_region
    _
  $region21: #{_lambda_.11} parent=0 // pred_fallthru
    _

// kernel: _lambda_.8
$region0: #{_lambda_.8}
  #allocation0 [shape = 'u32[]', space=smem, size = 0x4, offset = 0x4, fixed_abs, tag = 'smem constant byte address 0x4 - core index']
  #allocation1 [shape = 'u32[144,128]{1,0:T(1,128)}', space=vmem, size = 0x12000, scoped, tag = 'internal scratch']
  %s0 = inlined_call_operand.vmem [shape: bf16[8,9,9,128], index: 0, kind: input, shape index: {}]
  %s1 = inlined_call_operand.vmem [shape: bf16[9,128,128], index: 1, kind: input, shape index: {}]
  %s2 = inlined_call_operand.vmem [shape: bf16[128,128], index: 2, kind: input, shape index: {}]
  %s3 = inlined_call_operand.vmem [shape: bf16[2,64,128], index: 3, kind: output, shape index: {0}]
  %s4 = inlined_call_operand.vmem [shape: bf16[2,64,128], index: 4, kind: output, shape index: {1}]
  %s5 = inlined_call_operand.vmem [shape: f32[2,8,128], index: 5, kind: output, shape index: {2}]
  %6 = xla_tuple %s3, %s4, %s5
  %s7 = sld [smem:[#allocation0]]
  $region65: #{_lambda_.8} parent=0
    _
  %s9 = ssub.s32 1, %s7
  %s10 = scalar_select 0, %s9, %s7
  loop: start=0, step=1, limit=4
  $region2: #{_lambda_.8} parent=0 // loop_pre_header
    _
  $region3: #{_lambda_.8} parent=0 // loop_header
    %s12 = sphi 0, %s16
    %p13 = scmp.ge.s32.totalorder %s12, 4
    %s19 = sphi 0, %s31
    %s20 = sphi 0, %s27
    %s21 = sphi 0, %s19
    %s22 = sphi 0, %s20
    %s23 = sphi 0, %s21
    %s24 = sphi 0, %s22
    %s36 = sphi 0, %s38
    %s39 = sphi 0, %s36
    %s40 = sphi 0, %s39
    %s56 = sphi 0, %s40
    %s60 = sphi 0, %s60
    %s62 = sphi 0, %s60
    %s63 = sphi 0, %s62
    %s77 = sphi 0, %s63
    %s81 = sphi 0, %s81
    %s83 = sphi 0, %s81
    %s84 = sphi 0, %s83
    %s98 = sphi 0, %s84
    %s106 = sphi 0, %s108
    %s109 = sphi 0, %s106
    %s110 = sphi 0, %s109
    %s126 = sphi 0, %s110
    %s134 = sphi 0, %s136
    %s137 = sphi 0, %s134
    %s138 = sphi 0, %s137
    %s154 = sphi 0, %s138
    %s160 = sphi 0, %s162
    %s163 = sphi 0, %s160
    %s164 = sphi 0, %s163
    %s180 = sphi 0, %s164
  $region4: #{_lambda_.8} parent=0 // loop_header_branch
    %15 = sbr.rel (%p13) target = $region8
  $region5: #{_lambda_.8} parent=0 // loop_body
    %s17 = ssub.s32 %s12, 1
    %s18 = ssub.s32 %s12, 2
    %s25 = sadd.s32 1, %s20
    %p26 = scmp.ge.s32.totalorder %s25, 1
    %s27 = scalar_select %p26, 0, %s25
    %s28 = sadd.s32 1, %s19
    %s29 = scalar_select %p26, %s28, %s19
    %p30 = scmp.ge.s32.totalorder %s29, 2
    %s31 = scalar_select %p30, 0, %s29
    %s32 = sadd.s32 %s19, %s20
    %s33 = sadd.s32 %s31, %s27
    %s34 = ssub.s32 %s32, %s33
    %p35 = scmp.eq.s32.totalorder %s34, 0
    %s37 = sadd.s32 %s36, 1
    %s38 = scalar_select %p35, %s36, %s37
    %p41 = pneg %p35
    %p42 = scmp.eq.s32.totalorder %s12, 1
    %p43 = por %p41, %p42
    %p44 = scmp.ne.s32.totalorder %s36, %s39
    %p45 = scmp.eq.s32.totalorder %s12, 0
    %p46 = por %p44, %p45
    %p47 = scmp.ne.s32.totalorder %s36, %s39
    %p48 = scmp.eq.s32.totalorder %s17, 1
    %p49 = por %p47, %p48
    %p50 = scmp.ne.s32.totalorder %s39, %s40
    %p51 = scmp.eq.s32.totalorder %s17, 0
    %p52 = por %p50, %p51
    %p53 = scmp.ne.s32.totalorder %s39, %s40
    %p54 = scmp.eq.s32.totalorder %s18, 1
    %p55 = por %p53, %p54
    %p57 = scmp.ne.s32.totalorder %s40, %s56
    %p58 = scmp.eq.s32.totalorder %s18, 0
    %p59 = por %p57, %p58
    %s61 = sadd.s32 %s60, 1
    %p64 = scmp.eq.s32.totalorder %s12, 1
    %p65 = scmp.ne.s32.totalorder %s60, %s62
    %p66 = scmp.eq.s32.totalorder %s12, 0
    %p67 = por %p65, %p66
    %p68 = scmp.ne.s32.totalorder %s60, %s62
    %p69 = scmp.eq.s32.totalorder %s17, 1
    %p70 = por %p68, %p69
    %p71 = scmp.ne.s32.totalorder %s62, %s63
    %p72 = scmp.eq.s32.totalorder %s17, 0
    %p73 = por %p71, %p72
    %p74 = scmp.ne.s32.totalorder %s62, %s63
    %p75 = scmp.eq.s32.totalorder %s18, 1
    %p76 = por %p74, %p75
    %p78 = scmp.ne.s32.totalorder %s63, %s77
    %p79 = scmp.eq.s32.totalorder %s18, 0
    %p80 = por %p78, %p79
    %s82 = sadd.s32 %s81, 1
    %p85 = scmp.eq.s32.totalorder %s12, 1
    %p86 = scmp.ne.s32.totalorder %s81, %s83
    %p87 = scmp.eq.s32.totalorder %s12, 0
    %p88 = por %p86, %p87
    %p89 = scmp.ne.s32.totalorder %s81, %s83
    %p90 = scmp.eq.s32.totalorder %s17, 1
    %p91 = por %p89, %p90
    %p92 = scmp.ne.s32.totalorder %s83, %s84
    %p93 = scmp.eq.s32.totalorder %s17, 0
    %p94 = por %p92, %p93
    %p95 = scmp.ne.s32.totalorder %s83, %s84
    %p96 = scmp.eq.s32.totalorder %s18, 1
    %p97 = por %p95, %p96
    %p99 = scmp.ne.s32.totalorder %s84, %s98
    %p100 = scmp.eq.s32.totalorder %s18, 0
    %p101 = por %p99, %p100
    %s102 = sadd.s32 %s19, %s20
    %s103 = sadd.s32 %s31, %s27
    %s104 = ssub.s32 %s102, %s103
    %p105 = scmp.eq.s32.totalorder %s104, 0
    %s107 = sadd.s32 %s106, 1
    %s108 = scalar_select %p105, %s106, %s107
    %p111 = pneg %p105
    %p112 = scmp.eq.s32.totalorder %s12, 1
    %p113 = por %p111, %p112
    %p114 = scmp.ne.s32.totalorder %s106, %s109
    %p115 = scmp.eq.s32.totalorder %s12, 0
    %p116 = por %p114, %p115
    %p117 = scmp.ne.s32.totalorder %s106, %s109
    %p118 = scmp.eq.s32.totalorder %s17, 1
    %p119 = por %p117, %p118
    %p120 = scmp.ne.s32.totalorder %s109, %s110
    %p121 = scmp.eq.s32.totalorder %s17, 0
    %p122 = por %p120, %p121
    %p123 = scmp.ne.s32.totalorder %s109, %s110
    %p124 = scmp.eq.s32.totalorder %s18, 1
    %p125 = por %p123, %p124
    %p127 = scmp.ne.s32.totalorder %s110, %s126
    %p128 = scmp.eq.s32.totalorder %s18, 0
    %p129 = por %p127, %p128
    %s130 = sadd.s32 %s19, %s20
    %s131 = sadd.s32 %s31, %s27
    %s132 = ssub.s32 %s130, %s131
    %p133 = scmp.eq.s32.totalorder %s132, 0
    %s135 = sadd.s32 %s134, 1
    %s136 = scalar_select %p133, %s134, %s135
    %p139 = pneg %p133
    %p140 = scmp.eq.s32.totalorder %s12, 1
    %p141 = por %p139, %p140
    %p142 = scmp.ne.s32.totalorder %s134, %s137
    %p143 = scmp.eq.s32.totalorder %s12, 0
    %p144 = por %p142, %p143
    %p145 = scmp.ne.s32.totalorder %s134, %s137
    %p146 = scmp.eq.s32.totalorder %s17, 1
    %p147 = por %p145, %p146
    %p148 = scmp.ne.s32.totalorder %s137, %s138
    %p149 = scmp.eq.s32.totalorder %s17, 0
    %p150 = por %p148, %p149
    %p151 = scmp.ne.s32.totalorder %s137, %s138
    %p152 = scmp.eq.s32.totalorder %s18, 1
    %p153 = por %p151, %p152
    %p155 = scmp.ne.s32.totalorder %s138, %s154
    %p156 = scmp.eq.s32.totalorder %s18, 0
    %p157 = por %p155, %p156
    %s158 = ssub.s32 %s19, %s31
    %p159 = scmp.eq.s32.totalorder %s158, 0
    %s161 = sadd.s32 %s160, 1
    %s162 = scalar_select %p159, %s160, %s161
    %p165 = pneg %p159
    %p166 = scmp.eq.s32.totalorder %s12, 1
    %p167 = por %p165, %p166
    %p168 = scmp.ne.s32.totalorder %s160, %s163
    %p169 = scmp.eq.s32.totalorder %s12, 0
    %p170 = por %p168, %p169
    %p171 = scmp.ne.s32.totalorder %s160, %s163
    %p172 = scmp.eq.s32.totalorder %s17, 1
    %p173 = por %p171, %p172
    %p174 = scmp.ne.s32.totalorder %s163, %s164
    %p175 = scmp.eq.s32.totalorder %s17, 0
    %p176 = por %p174, %p175
    %p177 = scmp.ne.s32.totalorder %s163, %s164
    %p178 = scmp.eq.s32.totalorder %s18, 1
    %p179 = por %p177, %p178
    %p181 = scmp.ne.s32.totalorder %s164, %s180
    %p182 = scmp.eq.s32.totalorder %s18, 0
    %p183 = por %p181, %p182
    %p184 = scmp.le.s32.totalorder 1, %s12
    %p185 = scmp.lt.s32.totalorder %s12, 3
    %p186 = pnand %p184, %p185
    %p187 = pneg %p186
    // Predicated region
    $region9: #{_lambda_.8} parent=5 // pred_check
      _
    $region10: #{_lambda_.8} parent=5 // pred_check_branch
      %189 = sbr.rel (%p186) target = $region12
    $region11: #{_lambda_.8} parent=5 // pred_region
      %s190 = ssub.s32 %s12, 1
      // Predicated region
      $region13: #{_lambda_.8} parent=11 // pred_check
        %p191 = pneg %p73
      $region14: #{_lambda_.8} parent=11 // pred_check_branch
        %193 = sbr.rel (%p191) target = $region16
      $region15: #{_lambda_.8} parent=11 // pred_region
        _
      $region16: #{_lambda_.8} parent=11 // pred_fallthru
        _
      // Predicated region
      $region17: #{_lambda_.8} parent=11 // pred_check
        %p194 = pneg %p94
      $region18: #{_lambda_.8} parent=11 // pred_check_branch
        %196 = sbr.rel (%p194) target = $region20
      $region19: #{_lambda_.8} parent=11 // pred_region
        _
      $region20: #{_lambda_.8} parent=11 // pred_fallthru
        _
    $region12: #{_lambda_.8} parent=5 // pred_fallthru
      _
    %p197 = scmp.lt.s32.totalorder %s12, 2
    // Predicated region
    $region21: #{_lambda_.8} parent=5 // pred_check
      %p198 = pneg %p197
    $region22: #{_lambda_.8} parent=5 // pred_check_branch
      %200 = sbr.rel (%p198) target = $region24
    $region23: #{_lambda_.8} parent=5 // pred_region
      // Predicated region
      $region25: #{_lambda_.8} parent=23 // pred_check
        %p201 = pneg %p46
      $region26: #{_lambda_.8} parent=23 // pred_check_branch
        %203 = sbr.rel (%p201) target = $region28
      $region27: #{_lambda_.8} parent=23 // pred_region
        %s204 = sadd.s32 %s19, %s20
        %s205 = smul.u32 4, %s204
        %p206 = scmp.lt.s32.totalorder %s205, 7
        %s207 = scalar_select %p206, %s205, 7
        %s208 = smul.addr %s207, 18
        %s209 = smul.addr %s208, 4
        %s210 = scalar_lea.vmem %s0, %s209
        %s211 = sadd.s32 %s19, %s20
        %s212 = smul.u32 4, %s211
      $region28: #{_lambda_.8} parent=23 // pred_fallthru
        _
    $region24: #{_lambda_.8} parent=5 // pred_fallthru
      _
    %p213 = scmp.le.s32.totalorder 1, %s12
    %p214 = scmp.lt.s32.totalorder %s12, 3
    %p215 = pnand %p213, %p214
    %p216 = pneg %p215
    // Predicated region
    $region29: #{_lambda_.8} parent=5 // pred_check
      _
    $region30: #{_lambda_.8} parent=5 // pred_check_branch
      %218 = sbr.rel (%p215) target = $region32
    $region31: #{_lambda_.8} parent=5 // pred_region
      %s219 = ssub.s32 %s12, 1
      %s220 = sadd.s32 %s21, %s22
      %s221 = smul.u32 4, %s220
      %p222 = scmp.lt.s32.totalorder %s221, 7
      %s223 = scalar_select %p222, %s221, 7
      %s224 = smul.addr %s223, 18
      %s225 = smul.addr %s224, 4
      %s226 = scalar_lea.vmem %s0, %s225
      %p227 = pneg %p52
      %p228 = pneg %p49
      %p229 = pneg %p73
      %p230 = pneg %p70
      %p231 = pneg %p94
      %p232 = pneg %p91
      %p233 = pneg %p122
      %p234 = pneg %p119
      %s235 = sadd.s32 %s21, %s22
      %p236 = scmp.lt.s32.totalorder %s235, 1
      %s237 = scalar_select %p236, %s235, 1
      %s238 = smul.addr %s237, 8
      %s239 = smul.addr %s238, 4
      %s240 = scalar_lea.vmem %s3, %s239
      %p241 = pneg %p150
      %p242 = pneg %p147
      %s243 = sadd.s32 %s21, %s22
      %p244 = scmp.lt.s32.totalorder %s243, 1
      %s245 = scalar_select %p244, %s243, 1
      %s246 = smul.addr %s245, 8
      %s247 = smul.addr %s246, 4
      %s248 = scalar_lea.vmem %s4, %s247
      %p249 = pneg %p176
      %p250 = pneg %p173
      %p251 = scmp.lt.s32.totalorder %s21, 1
      %s252 = scalar_select %p251, %s21, 1
      %s253 = smul.addr %s252, 8
      %s254 = scalar_lea.vmem %s5, %s253
      %s255 = sadd.s32 %s21, %s22
      %s256 = smul.u32 4, %s255
      %p257 = scmp.lt.s32.totalorder %s256, 7
      %s258 = scalar_select %p257, %s256, 7
      %s259 = smul.addr %s258, 18
      %s260 = smul.addr %s259, 4
      %s261 = scalar_lea.vmem %s0, %s260
      %s262 = sadd.s32 %s21, %s22
      %s263 = smul.u32 4, %s262
      %s264 = sadd.s32 %s21, %s22
      %p265 = scmp.lt.s32.totalorder %s264, 1
      %s266 = scalar_select %p265, %s264, 1
      %s267 = smul.addr %s266, 8
      %s268 = smul.addr %s267, 4
      %s269 = scalar_lea.vmem %s3, %s268
      %s270 = sadd.s32 %s21, %s22
      %s271 = sadd.s32 %s21, %s22
      %p272 = scmp.lt.s32.totalorder %s271, 1
      %s273 = scalar_select %p272, %s271, 1
      %s274 = smul.addr %s273, 8
      %s275 = smul.addr %s274, 4
      %s276 = scalar_lea.vmem %s4, %s275
      %s277 = sadd.s32 %s21, %s22
      %p278 = scmp.lt.s32.totalorder %s21, 1
      %s279 = scalar_select %p278, %s21, 1
      %s280 = smul.addr %s279, 8
      %s281 = scalar_lea.vmem %s5, %s280
      %p283 = scmp.eq.s32.totalorder %s22, 0
      // Predicated region
      $region33: #{_lambda_.8} parent=31 // pred_check
        %p284 = pneg %p283
      $region34: #{_lambda_.8} parent=31 // pred_check_branch
        %286 = sbr.rel (%p284) target = $region36
      $region35: #{_lambda_.8} parent=31 // pred_region
        %287 = vst [vmem:[%s281] sm:$0xff] 0.0
      $region36: #{_lambda_.8} parent=31 // pred_fallthru
        _
      %v288 = vld [vmem:[%s261] sm:$0xf]
      %v289 = vld [vmem:[%s261 + $0x8] sm:$0xf]
      %v290 = vld [vmem:[%s261 + $0x10] sm:$0xf]
      %v291 = vld [vmem:[%s261 + $0x18] sm:$0xf]
      %v292 = vld [vmem:[%s261 + $0x20] sm:$0xf]
      %v293 = vld [vmem:[%s261 + $0x28] sm:$0xf]
      %v294 = vld [vmem:[%s261 + $0x30] sm:$0xf]
      %v295 = vld [vmem:[%s261 + $0x38] sm:$0xf]
      %v296 = vld [vmem:[%s1] sm:$0xf]
      %v297 = vld [vmem:[%s1 + $0x4] sm:$0xf]
      %v298 = vld [vmem:[%s1 + $0x8] sm:$0xf]
      %v299 = vld [vmem:[%s1 + $0xc] sm:$0xf]
      %v300 = vld [vmem:[%s1 + $0x10] sm:$0xf]
      %v301 = vld [vmem:[%s1 + $0x14] sm:$0xf]
      %v302 = vld [vmem:[%s1 + $0x18] sm:$0xf]
      %v303 = vld [vmem:[%s1 + $0x1c] sm:$0xf]
      %v304 = vld [vmem:[%s1 + $0x20] sm:$0xf]
      %v305 = vld [vmem:[%s1 + $0x24] sm:$0xf]
      %v306 = vld [vmem:[%s1 + $0x28] sm:$0xf]
      %v307 = vld [vmem:[%s1 + $0x2c] sm:$0xf]
      %v308 = vld [vmem:[%s1 + $0x30] sm:$0xf]
      %v309 = vld [vmem:[%s1 + $0x34] sm:$0xf]
      %v310 = vld [vmem:[%s1 + $0x38] sm:$0xf]
      %v311 = vld [vmem:[%s1 + $0x3c] sm:$0xf]
      %s312 = scalar_lea.vmem %s261, 72
      %v313 = vld [vmem:[%s312] sm:$0xf]
      %v314 = vld [vmem:[%s312 + $0x8] sm:$0xf]
      %v315 = vld [vmem:[%s312 + $0x10] sm:$0xf]
      %v316 = vld [vmem:[%s312 + $0x18] sm:$0xf]
      %v317 = vld [vmem:[%s312 + $0x20] sm:$0xf]
      %v318 = vld [vmem:[%s312 + $0x28] sm:$0xf]
      %v319 = vld [vmem:[%s312 + $0x30] sm:$0xf]
      %v320 = vld [vmem:[%s312 + $0x38] sm:$0xf]
      %s321 = scalar_lea.vmem %s1, 64
      %v322 = vld [vmem:[%s321] sm:$0xf]
      %v323 = vld [vmem:[%s321 + $0x4] sm:$0xf]
      %v324 = vld [vmem:[%s321 + $0x8] sm:$0xf]
      %v325 = vld [vmem:[%s321 + $0xc] sm:$0xf]
      %v326 = vld [vmem:[%s321 + $0x10] sm:$0xf]
      %v327 = vld [vmem:[%s321 + $0x14] sm:$0xf]
      %v328 = vld [vmem:[%s321 + $0x18] sm:$0xf]
      %v329 = vld [vmem:[%s321 + $0x1c] sm:$0xf]
      %v330 = vld [vmem:[%s321 + $0x20] sm:$0xf]
      %v331 = vld [vmem:[%s321 + $0x24] sm:$0xf]
      %v332 = vld [vmem:[%s321 + $0x28] sm:$0xf]
      %v333 = vld [vmem:[%s321 + $0x2c] sm:$0xf]
      %v334 = vld [vmem:[%s321 + $0x30] sm:$0xf]
      %v335 = vld [vmem:[%s321 + $0x34] sm:$0xf]
      %v336 = vld [vmem:[%s321 + $0x38] sm:$0xf]
      %v337 = vld [vmem:[%s321 + $0x3c] sm:$0xf]
      %v346 = vunpack.c.l.b16 %v313
      %v347 = vunpack.c.l.b16 %v314
      %v348 = vunpack.c.l.b16 %v315
      %v349 = vunpack.c.l.b16 %v316
      %v350 = vunpack.c.l.b16 %v317
      %v351 = vunpack.c.l.b16 %v318
      %v352 = vunpack.c.l.b16 %v319
      %v353 = vunpack.c.l.b16 %v320
      %v354 = vpack.c.b16 %v347, %v346
      %v355 = vpack.c.b16 %v349, %v348
      %v356 = vpack.c.b16 %v351, %v350
      %v357 = vpack.c.b16 %v353, %v352
      %v378 = vunpack.c.l.b16 %v322
      %v379 = vunpack.c.l.b16 %v323
      %v380 = vunpack.c.l.b16 %v324
      %v381 = vunpack.c.l.b16 %v325
      %v382 = vunpack.c.l.b16 %v326
      %v383 = vunpack.c.l.b16 %v327
      %v384 = vunpack.c.l.b16 %v328
      %v385 = vunpack.c.l.b16 %v329
      %v386 = vunpack.c.l.b16 %v330
      %v387 = vunpack.c.l.b16 %v331
      %v388 = vunpack.c.l.b16 %v332
      %v389 = vunpack.c.l.b16 %v333
      %v390 = vunpack.c.l.b16 %v334
      %v391 = vunpack.c.l.b16 %v335
      %v392 = vunpack.c.l.b16 %v336
      %v393 = vunpack.c.l.b16 %v337
      %v394 = vpack.c.b16 %v379, %v378
      %v395 = vpack.c.b16 %v381, %v380
      %v396 = vpack.c.b16 %v383, %v382
      %v397 = vpack.c.b16 %v385, %v384
      %v398 = vpack.c.b16 %v387, %v386
      %v399 = vpack.c.b16 %v389, %v388
      %v400 = vpack.c.b16 %v391, %v390
      %v401 = vpack.c.b16 %v393, %v392
      %410 = vmatprep.subr.bf16.mxu0 0
      %411 = vmatpush1.bf16.msra.mxu0 %v401
      %412 = vmatprep.subr.bf16.mxu0 0
      %413 = vmatpush1.bf16.msra.mxu0 %v400
      %414 = vmatprep.subr.bf16.mxu0 0
      %415 = vmatpush1.bf16.msra.mxu0 %v399
      %416 = vmatprep.subr.bf16.mxu0 0
      %417 = vmatpush1.bf16.msra.mxu0 %v398
      %418 = vmatprep.subr.bf16.mxu0 0
      %419 = vmatpush1.bf16.msra.mxu0 %v397
      %420 = vmatprep.subr.bf16.mxu0 0
      %421 = vmatpush1.bf16.msra.mxu0 %v396
      %422 = vmatprep.subr.bf16.mxu0 0
      %423 = vmatpush1.bf16.msra.mxu0 %v395
      %424 = vmatprep.subr.bf16.mxu0 0
      %425 = vmatpush1.bf16.msra.mxu0 %v394
      %426 = vmatprep.subr.bf16.mxu0 0
      %427 = vmatpush2.bf16.msra.mxu0 0
      %428 = vmatprep.subr.bf16.mxu0 0
      %429 = vmatpush2.bf16.msra.mxu0 0
      %430 = vmatprep.subr.bf16.mxu0 0
      %431 = vmatpush2.bf16.msra.mxu0 0
      %432 = vmatprep.subr.bf16.mxu0 0
      %433 = vmatpush2.bf16.msra.mxu0 0
      %434 = vmatprep.subr.bf16.mxu0 0
      %435 = vmatpush2.bf16.msra.mxu0 0
      %436 = vmatprep.subr.bf16.mxu0 0
      %437 = vmatpush2.bf16.msra.mxu0 0
      %438 = vmatprep.subr.bf16.mxu0 0
      %439 = vmatpush2.bf16.msra.mxu0 0
      %440 = vmatprep.subr.bf16.mxu0 0
      %441 = vmatpush2.bf16.msra.mxu0 0
      %442 = vmatprep.mubr.bf16.mxu0 0
      %443 = vmatmul.mubr.bf16.gmra.mxu0 %v354
      %v444 = vpop.f32.mrf.mxu0
      %v445 = vadd.f32 0.0, %v444
      %v446 = vpop.f32.mrf.mxu0
      %v447 = vpop.f32.mrf.mxu0
      %v448 = vadd.f32 0.0, %v447
      %v449 = vpop.f32.mrf.mxu0
      %450 = vmatprep.mubr.bf16.mxu0 0
      %451 = vmatmul.mubr.bf16.gmra.mxu0 %v355
      %v452 = vpop.f32.mrf.mxu0
      %v453 = vadd.f32 0.0, %v452
      %v454 = vpop.f32.mrf.mxu0
      %v455 = vpop.f32.mrf.mxu0
      %v456 = vadd.f32 0.0, %v455
      %v457 = vpop.f32.mrf.mxu0
      %458 = vmatprep.mubr.bf16.mxu0 0
      %459 = vmatmul.mubr.bf16.gmra.mxu0 %v356
      %v460 = vpop.f32.mrf.mxu0
      %v461 = vadd.f32 0.0, %v460
      %v462 = vpop.f32.mrf.mxu0
      %v463 = vpop.f32.mrf.mxu0
      %v464 = vadd.f32 0.0, %v463
      %v465 = vpop.f32.mrf.mxu0
      %466 = vmatprep.mubr.bf16.mxu0 0
      %467 = vmatmul.mubr.bf16.gmra.mxu0 %v357
      %v468 = vpop.f32.mrf.mxu0
      %v469 = vadd.f32 0.0, %v468
      %v470 = vpop.f32.mrf.mxu0
      %v471 = vpop.f32.mrf.mxu0
      %v472 = vadd.f32 0.0, %v471
      %v473 = vpop.f32.mrf.mxu0
      %474 = vdwg.mxu0
      %v483 = vunpack.c.l.b16 %v288
      %v484 = vunpack.c.l.b16 %v289
      %v485 = vunpack.c.l.b16 %v290
      %v486 = vunpack.c.l.b16 %v291
      %v487 = vunpack.c.l.b16 %v292
      %v488 = vunpack.c.l.b16 %v293
      %v489 = vunpack.c.l.b16 %v294
      %v490 = vunpack.c.l.b16 %v295
      %v491 = vpack.c.b16 %v484, %v483
      %v492 = vpack.c.b16 %v486, %v485
      %v493 = vpack.c.b16 %v488, %v487
      %v494 = vpack.c.b16 %v490, %v489
      %v515 = vunpack.c.l.b16 %v296
      %v516 = vunpack.c.l.b16 %v297
      %v517 = vunpack.c.l.b16 %v298
      %v518 = vunpack.c.l.b16 %v299
      %v519 = vunpack.c.l.b16 %v300
      %v520 = vunpack.c.l.b16 %v301
      %v521 = vunpack.c.l.b16 %v302
      %v522 = vunpack.c.l.b16 %v303
      %v523 = vunpack.c.l.b16 %v304
      %v524 = vunpack.c.l.b16 %v305
      %v525 = vunpack.c.l.b16 %v306
      %v526 = vunpack.c.l.b16 %v307
      %v527 = vunpack.c.l.b16 %v308
      %v528 = vunpack.c.l.b16 %v309
      %v529 = vunpack.c.l.b16 %v310
      %v530 = vunpack.c.l.b16 %v311
      %v531 = vpack.c.b16 %v516, %v515
      %v532 = vpack.c.b16 %v518, %v517
      %v533 = vpack.c.b16 %v520, %v519
      %v534 = vpack.c.b16 %v522, %v521
      %v535 = vpack.c.b16 %v524, %v523
      %v536 = vpack.c.b16 %v526, %v525
      %v537 = vpack.c.b16 %v528, %v527
      %v538 = vpack.c.b16 %v530, %v529
      %547 = vmatprep.subr.bf16.mxu0 0
      %548 = vmatpush1.bf16.msra.mxu0 %v538
      %549 = vmatprep.subr.bf16.mxu0 0
      %550 = vmatpush1.bf16.msra.mxu0 %v537
      %551 = vmatprep.subr.bf16.mxu0 0
      %552 = vmatpush1.bf16.msra.mxu0 %v536
      %553 = vmatprep.subr.bf16.mxu0 0
      %554 = vmatpush1.bf16.msra.mxu0 %v535
      %555 = vmatprep.subr.bf16.mxu0 0
      %556 = vmatpush1.bf16.msra.mxu0 %v534
      %557 = vmatprep.subr.bf16.mxu0 0
      %558 = vmatpush1.bf16.msra.mxu0 %v533
      %559 = vmatprep.subr.bf16.mxu0 0
      %560 = vmatpush1.bf16.msra.mxu0 %v532
      %561 = vmatprep.subr.bf16.mxu0 0
      %562 = vmatpush1.bf16.msra.mxu0 %v531
      %563 = vmatprep.subr.bf16.mxu0 0
      %564 = vmatpush2.bf16.msra.mxu0 0
      %565 = vmatprep.subr.bf16.mxu0 0
      %566 = vmatpush2.bf16.msra.mxu0 0
      %567 = vmatprep.subr.bf16.mxu0 0
      %568 = vmatpush2.bf16.msra.mxu0 0
      %569 = vmatprep.subr.bf16.mxu0 0
      %570 = vmatpush2.bf16.msra.mxu0 0
      %571 = vmatprep.subr.bf16.mxu0 0
      %572 = vmatpush2.bf16.msra.mxu0 0
      %573 = vmatprep.subr.bf16.mxu0 0
      %574 = vmatpush2.bf16.msra.mxu0 0
      %575 = vmatprep.subr.bf16.mxu0 0
      %576 = vmatpush2.bf16.msra.mxu0 0
      %577 = vmatprep.subr.bf16.mxu0 0
      %578 = vmatpush2.bf16.msra.mxu0 0
      %579 = vmatprep.mubr.bf16.mxu0 0
      %580 = vmatmul.mubr.bf16.gmra.mxu0 %v491
      %v581 = vpop.f32.mrf.mxu0
      %v582 = vadd.f32 %v445, %v581
      %v583 = vpop.f32.mrf.mxu0
      %v584 = vpop.f32.mrf.mxu0
      %v585 = vadd.f32 %v448, %v584
      %v586 = vpop.f32.mrf.mxu0
      %587 = vmatprep.mubr.bf16.mxu0 0
      %588 = vmatmul.mubr.bf16.gmra.mxu0 %v492
      %v589 = vpop.f32.mrf.mxu0
      %v590 = vadd.f32 %v453, %v589
      %v591 = vpop.f32.mrf.mxu0
      %v592 = vpop.f32.mrf.mxu0
      %v593 = vadd.f32 %v456, %v592
      %v594 = vpop.f32.mrf.mxu0
      %595 = vmatprep.mubr.bf16.mxu0 0
      %596 = vmatmul.mubr.bf16.gmra.mxu0 %v493
      %v597 = vpop.f32.mrf.mxu0
      %v598 = vadd.f32 %v461, %v597
      %v599 = vpop.f32.mrf.mxu0
      %v600 = vpop.f32.mrf.mxu0
      %v601 = vadd.f32 %v464, %v600
      %v602 = vpop.f32.mrf.mxu0
      %603 = vmatprep.mubr.bf16.mxu0 0
      %604 = vmatmul.mubr.bf16.gmra.mxu0 %v494
      %v605 = vpop.f32.mrf.mxu0
      %v606 = vadd.f32 %v469, %v605
      %v607 = vpop.f32.mrf.mxu0
      %v608 = vpop.f32.mrf.mxu0
      %v609 = vadd.f32 %v472, %v608
      %v610 = vpop.f32.mrf.mxu0
      %611 = vdwg.mxu0
      %v612 = vld [vmem:[%s261] sm:$0xf]
      %v613 = vld [vmem:[%s261 + $0x4] sm:$0x1]
      %v614 = vld [vmem:[%s261 + $0x8] sm:$0xf]
      %v615 = vld [vmem:[%s261 + $0xc] sm:$0x1]
      %v616 = vld [vmem:[%s261 + $0x10] sm:$0xf]
      %v617 = vld [vmem:[%s261 + $0x14] sm:$0x1]
      %v618 = vld [vmem:[%s261 + $0x18] sm:$0xf]
      %v619 = vld [vmem:[%s261 + $0x1c] sm:$0x1]
      %v620 = vld [vmem:[%s261 + $0x20] sm:$0xf]
      %v621 = vld [vmem:[%s261 + $0x24] sm:$0x1]
      %v622 = vld [vmem:[%s261 + $0x28] sm:$0xf]
      %v623 = vld [vmem:[%s261 + $0x2c] sm:$0x1]
      %v624 = vld [vmem:[%s261 + $0x30] sm:$0xf]
      %v625 = vld [vmem:[%s261 + $0x34] sm:$0x1]
      %v626 = vld [vmem:[%s261 + $0x38] sm:$0xf]
      %v627 = vld [vmem:[%s261 + $0x3c] sm:$0x1]
      %vm628 = vsmask.f32 3328
      %vm629 = vsmask.f32 7440
      %vm630 = vmor %vm628, %vm629
      %v632 = vshrl.u32 %v612, 16
      %v634 = vrot.slane %v632, 4
      %v635 = vshll.u32 %v612, 16
      %v637 = vrot.slane %v635, 5
      %v638 = vor.u32 %v634, %v637
      %v639 = vrot.slane %v638, 4
      %v641 = vshll.u32 %v613, 16
      %v643 = vrot.slane %v641, 5
      %v644 = vsel %vm630, %v639, %v643
      %v646 = vshrl.u32 %v614, 16
      %v648 = vrot.slane %v646, 4
      %v649 = vshll.u32 %v614, 16
      %v651 = vrot.slane %v649, 5
      %v652 = vor.u32 %v648, %v651
      %v653 = vrot.slane %v652, 4
      %v655 = vshll.u32 %v615, 16
      %v657 = vrot.slane %v655, 5
      %v658 = vsel %vm630, %v653, %v657
      %v660 = vshrl.u32 %v616, 16
      %v662 = vrot.slane %v660, 4
      %v663 = vshll.u32 %v616, 16
      %v665 = vrot.slane %v663, 5
      %v666 = vor.u32 %v662, %v665
      %v667 = vrot.slane %v666, 4
      %v669 = vshll.u32 %v617, 16
      %v671 = vrot.slane %v669, 5
      %v672 = vsel %vm630, %v667, %v671
      %v674 = vshrl.u32 %v618, 16
      %v676 = vrot.slane %v674, 4
      %v677 = vshll.u32 %v618, 16
      %v679 = vrot.slane %v677, 5
      %v680 = vor.u32 %v676, %v679
      %v681 = vrot.slane %v680, 4
      %v683 = vshll.u32 %v619, 16
      %v685 = vrot.slane %v683, 5
      %v686 = vsel %vm630, %v681, %v685
      %v688 = vshrl.u32 %v620, 16
      %v690 = vrot.slane %v688, 4
      %v691 = vshll.u32 %v620, 16
      %v693 = vrot.slane %v691, 5
      %v694 = vor.u32 %v690, %v693
      %v695 = vrot.slane %v694, 4
      %v697 = vshll.u32 %v621, 16
      %v699 = vrot.slane %v697, 5
      %v700 = vsel %vm630, %v695, %v699
      %v702 = vshrl.u32 %v622, 16
      %v704 = vrot.slane %v702, 4
      %v705 = vshll.u32 %v622, 16
      %v707 = vrot.slane %v705, 5
      %v708 = vor.u32 %v704, %v707
      %v709 = vrot.slane %v708, 4
      %v711 = vshll.u32 %v623, 16
      %v713 = vrot.slane %v711, 5
      %v714 = vsel %vm630, %v709, %v713
      %v716 = vshrl.u32 %v624, 16
      %v718 = vrot.slane %v716, 4
      %v719 = vshll.u32 %v624, 16
      %v721 = vrot.slane %v719, 5
      %v722 = vor.u32 %v718, %v721
      %v723 = vrot.slane %v722, 4
      %v725 = vshll.u32 %v625, 16
      %v727 = vrot.slane %v725, 5
      %v728 = vsel %vm630, %v723, %v727
      %v730 = vshrl.u32 %v626, 16
      %v732 = vrot.slane %v730, 4
      %v733 = vshll.u32 %v626, 16
      %v735 = vrot.slane %v733, 5
      %v736 = vor.u32 %v732, %v735
      %v737 = vrot.slane %v736, 4
      %v739 = vshll.u32 %v627, 16
      %v741 = vrot.slane %v739, 5
      %v742 = vsel %vm630, %v737, %v741
      %s743 = scalar_lea.vmem %s1, 128
      %v744 = vld [vmem:[%s743] sm:$0xf]
      %v745 = vld [vmem:[%s743 + $0x4] sm:$0xf]
      %v746 = vld [vmem:[%s743 + $0x8] sm:$0xf]
      %v747 = vld [vmem:[%s743 + $0xc] sm:$0xf]
      %v748 = vld [vmem:[%s743 + $0x10] sm:$0xf]
      %v749 = vld [vmem:[%s743 + $0x14] sm:$0xf]
      %v750 = vld [vmem:[%s743 + $0x18] sm:$0xf]
      %v751 = vld [vmem:[%s743 + $0x1c] sm:$0xf]
      %v752 = vld [vmem:[%s743 + $0x20] sm:$0xf]
      %v753 = vld [vmem:[%s743 + $0x24] sm:$0xf]
      %v754 = vld [vmem:[%s743 + $0x28] sm:$0xf]
      %v755 = vld [vmem:[%s743 + $0x2c] sm:$0xf]
      %v756 = vld [vmem:[%s743 + $0x30] sm:$0xf]
      %v757 = vld [vmem:[%s743 + $0x34] sm:$0xf]
      %v758 = vld [vmem:[%s743 + $0x38] sm:$0xf]
      %v759 = vld [vmem:[%s743 + $0x3c] sm:$0xf]
      %v760 = vunpack.c.l.b16 %v644
      %v761 = vunpack.c.l.b16 %v658
      %v762 = vunpack.c.l.b16 %v672
      %v763 = vunpack.c.l.b16 %v686
      %v764 = vunpack.c.l.b16 %v700
      %v765 = vunpack.c.l.b16 %v714
      %v766 = vunpack.c.l.b16 %v728
      %v767 = vunpack.c.l.b16 %v742
      %v768 = vpack.c.b16 %v761, %v760
      %v769 = vpack.c.b16 %v763, %v762
      %v770 = vpack.c.b16 %v765, %v764
      %v771 = vpack.c.b16 %v767, %v766
      %v792 = vunpack.c.l.b16 %v744
      %v793 = vunpack.c.l.b16 %v745
      %v794 = vunpack.c.l.b16 %v746
      %v795 = vunpack.c.l.b16 %v747
      %v796 = vunpack.c.l.b16 %v748
      %v797 = vunpack.c.l.b16 %v749
      %v798 = vunpack.c.l.b16 %v750
      %v799 = vunpack.c.l.b16 %v751
      %v800 = vunpack.c.l.b16 %v752
      %v801 = vunpack.c.l.b16 %v753
      %v802 = vunpack.c.l.b16 %v754
      %v803 = vunpack.c.l.b16 %v755
      %v804 = vunpack.c.l.b16 %v756
      %v805 = vunpack.c.l.b16 %v757
      %v806 = vunpack.c.l.b16 %v758
      %v807 = vunpack.c.l.b16 %v759
      %v808 = vpack.c.b16 %v793, %v792
      %v809 = vpack.c.b16 %v795, %v794
      %v810 = vpack.c.b16 %v797, %v796
      %v811 = vpack.c.b16 %v799, %v798
      %v812 = vpack.c.b16 %v801, %v800
      %v813 = vpack.c.b16 %v803, %v802
      %v814 = vpack.c.b16 %v805, %v804
      %v815 = vpack.c.b16 %v807, %v806
      %824 = vmatprep.subr.bf16.mxu0 0
      %825 = vmatpush1.bf16.msra.mxu0 %v815
      %826 = vmatprep.subr.bf16.mxu0 0
      %827 = vmatpush1.bf16.msra.mxu0 %v814
      %828 = vmatprep.subr.bf16.mxu0 0
      %829 = vmatpush1.bf16.msra.mxu0 %v813
      %830 = vmatprep.subr.bf16.mxu0 0
      %831 = vmatpush1.bf16.msra.mxu0 %v812
      %832 = vmatprep.subr.bf16.mxu0 0
      %833 = vmatpush1.bf16.msra.mxu0 %v811
      %834 = vmatprep.subr.bf16.mxu0 0
      %835 = vmatpush1.bf16.msra.mxu0 %v810
      %836 = vmatprep.subr.bf16.mxu0 0
      %837 = vmatpush1.bf16.msra.mxu0 %v809
      %838 = vmatprep.subr.bf16.mxu0 0
      %839 = vmatpush1.bf16.msra.mxu0 %v808
      %840 = vmatprep.subr.bf16.mxu0 0
      %841 = vmatpush2.bf16.msra.mxu0 0
      %842 = vmatprep.subr.bf16.mxu0 0
      %843 = vmatpush2.bf16.msra.mxu0 0
      %844 = vmatprep.subr.bf16.mxu0 0
      %845 = vmatpush2.bf16.msra.mxu0 0
      %846 = vmatprep.subr.bf16.mxu0 0
      %847 = vmatpush2.bf16.msra.mxu0 0
      %848 = vmatprep.subr.bf16.mxu0 0
      %849 = vmatpush2.bf16.msra.mxu0 0
      %850 = vmatprep.subr.bf16.mxu0 0
      %851 = vmatpush2.bf16.msra.mxu0 0
      %852 = vmatprep.subr.bf16.mxu0 0
      %853 = vmatpush2.bf16.msra.mxu0 0
      %854 = vmatprep.subr.bf16.mxu0 0
      %855 = vmatpush2.bf16.msra.mxu0 0
      %856 = vmatprep.mubr.bf16.mxu0 0
      %857 = vmatmul.mubr.bf16.gmra.mxu0 %v768
      %v858 = vpop.f32.mrf.mxu0
      %v859 = vadd.f32 0.0, %v858
      %v860 = vpop.f32.mrf.mxu0
      %v861 = vpop.f32.mrf.mxu0
      %v862 = vadd.f32 0.0, %v861
      %v863 = vpop.f32.mrf.mxu0
      %864 = vmatprep.mubr.bf16.mxu0 0
      %865 = vmatmul.mubr.bf16.gmra.mxu0 %v769
      %v866 = vpop.f32.mrf.mxu0
      %v867 = vadd.f32 0.0, %v866
      %v868 = vpop.f32.mrf.mxu0
      %v869 = vpop.f32.mrf.mxu0
      %v870 = vadd.f32 0.0, %v869
      %v871 = vpop.f32.mrf.mxu0
      %872 = vmatprep.mubr.bf16.mxu0 0
      %873 = vmatmul.mubr.bf16.gmra.mxu0 %v770
      %v874 = vpop.f32.mrf.mxu0
      %v875 = vadd.f32 0.0, %v874
      %v876 = vpop.f32.mrf.mxu0
      %v877 = vpop.f32.mrf.mxu0
      %v878 = vadd.f32 0.0, %v877
      %v879 = vpop.f32.mrf.mxu0
      %880 = vmatprep.mubr.bf16.mxu0 0
      %881 = vmatmul.mubr.bf16.gmra.mxu0 %v771
      %v882 = vpop.f32.mrf.mxu0
      %v883 = vadd.f32 0.0, %v882
      %v884 = vpop.f32.mrf.mxu0
      %v885 = vpop.f32.mrf.mxu0
      %v886 = vadd.f32 0.0, %v885
      %v887 = vpop.f32.mrf.mxu0
      %888 = vdwg.mxu0
      %v889 = vadd.f32 %v582, %v859
      %v890 = vadd.f32 %v585, %v862
      %v891 = vadd.f32 %v590, %v867
      %v892 = vadd.f32 %v593, %v870
      %v893 = vadd.f32 %v598, %v875
      %v894 = vadd.f32 %v601, %v878
      %v895 = vadd.f32 %v606, %v883
      %v896 = vadd.f32 %v609, %v886
      %s897 = scalar_lea.vmem %s261, 144
      %v898 = vld [vmem:[%s897] sm:$0xf]
      %v899 = vld [vmem:[%s897 + $0x8] sm:$0xf]
      %v900 = vld [vmem:[%s897 + $0x10] sm:$0xf]
      %v901 = vld [vmem:[%s897 + $0x18] sm:$0xf]
      %v902 = vld [vmem:[%s897 + $0x20] sm:$0xf]
      %v903 = vld [vmem:[%s897 + $0x28] sm:$0xf]
      %v904 = vld [vmem:[%s897 + $0x30] sm:$0xf]
      %v905 = vld [vmem:[%s897 + $0x38] sm:$0xf]
      %s906 = scalar_lea.vmem %s1, 192
      %v907 = vld [vmem:[%s906] sm:$0xf]
      %v908 = vld [vmem:[%s906 + $0x4] sm:$0xf]
      %v909 = vld [vmem:[%s906 + $0x8] sm:$0xf]
      %v910 = vld [vmem:[%s906 + $0xc] sm:$0xf]
      %v911 = vld [vmem:[%s906 + $0x10] sm:$0xf]
      %v912 = vld [vmem:[%s906 + $0x14] sm:$0xf]
      %v913 = vld [vmem:[%s906 + $0x18] sm:$0xf]
      %v914 = vld [vmem:[%s906 + $0x1c] sm:$0xf]
      %v915 = vld [vmem:[%s906 + $0x20] sm:$0xf]
      %v916 = vld [vmem:[%s906 + $0x24] sm:$0xf]
      %v917 = vld [vmem:[%s906 + $0x28] sm:$0xf]
      %v918 = vld [vmem:[%s906 + $0x2c] sm:$0xf]
      %v919 = vld [vmem:[%s906 + $0x30] sm:$0xf]
      %v920 = vld [vmem:[%s906 + $0x34] sm:$0xf]
      %v921 = vld [vmem:[%s906 + $0x38] sm:$0xf]
      %v922 = vld [vmem:[%s906 + $0x3c] sm:$0xf]
      %v931 = vunpack.c.l.b16 %v898
      %v932 = vunpack.c.l.b16 %v899
      %v933 = vunpack.c.l.b16 %v900
      %v934 = vunpack.c.l.b16 %v901
      %v935 = vunpack.c.l.b16 %v902
      %v936 = vunpack.c.l.b16 %v903
      %v937 = vunpack.c.l.b16 %v904
      %v938 = vunpack.c.l.b16 %v905
      %v939 = vpack.c.b16 %v932, %v931
      %v940 = vpack.c.b16 %v934, %v933
      %v941 = vpack.c.b16 %v936, %v935
      %v942 = vpack.c.b16 %v938, %v937
      %v963 = vunpack.c.l.b16 %v907
      %v964 = vunpack.c.l.b16 %v908
      %v965 = vunpack.c.l.b16 %v909
      %v966 = vunpack.c.l.b16 %v910
      %v967 = vunpack.c.l.b16 %v911
      %v968 = vunpack.c.l.b16 %v912
      %v969 = vunpack.c.l.b16 %v913
      %v970 = vunpack.c.l.b16 %v914
      %v971 = vunpack.c.l.b16 %v915
      %v972 = vunpack.c.l.b16 %v916
      %v973 = vunpack.c.l.b16 %v917
      %v974 = vunpack.c.l.b16 %v918
      %v975 = vunpack.c.l.b16 %v919
      %v976 = vunpack.c.l.b16 %v920
      %v977 = vunpack.c.l.b16 %v921
      %v978 = vunpack.c.l.b16 %v922
      %v979 = vpack.c.b16 %v964, %v963
      %v980 = vpack.c.b16 %v966, %v965
      %v981 = vpack.c.b16 %v968, %v967
      %v982 = vpack.c.b16 %v970, %v969
      %v983 = vpack.c.b16 %v972, %v971
      %v984 = vpack.c.b16 %v974, %v973
      %v985 = vpack.c.b16 %v976, %v975
      %v986 = vpack.c.b16 %v978, %v977
      %995 = vmatprep.subr.bf16.mxu0 0
      %996 = vmatpush1.bf16.msra.mxu0 %v986
      %997 = vmatprep.subr.bf16.mxu0 0
      %998 = vmatpush1.bf16.msra.mxu0 %v985
      %999 = vmatprep.subr.bf16.mxu0 0
      %1000 = vmatpush1.bf16.msra.mxu0 %v984
      %1001 = vmatprep.subr.bf16.mxu0 0
      %1002 = vmatpush1.bf16.msra.mxu0 %v983
      %1003 = vmatprep.subr.bf16.mxu0 0
      %1004 = vmatpush1.bf16.msra.mxu0 %v982
      %1005 = vmatprep.subr.bf16.mxu0 0
      %1006 = vmatpush1.bf16.msra.mxu0 %v981
      %1007 = vmatprep.subr.bf16.mxu0 0
      %1008 = vmatpush1.bf16.msra.mxu0 %v980
      %1009 = vmatprep.subr.bf16.mxu0 0
      %1010 = vmatpush1.bf16.msra.mxu0 %v979
      %1011 = vmatprep.subr.bf16.mxu0 0
      %1012 = vmatpush2.bf16.msra.mxu0 0
      %1013 = vmatprep.subr.bf16.mxu0 0
      %1014 = vmatpush2.bf16.msra.mxu0 0
      %1015 = vmatprep.subr.bf16.mxu0 0
      %1016 = vmatpush2.bf16.msra.mxu0 0
      %1017 = vmatprep.subr.bf16.mxu0 0
      %1018 = vmatpush2.bf16.msra.mxu0 0
      %1019 = vmatprep.subr.bf16.mxu0 0
      %1020 = vmatpush2.bf16.msra.mxu0 0
      %1021 = vmatprep.subr.bf16.mxu0 0
      %1022 = vmatpush2.bf16.msra.mxu0 0
      %1023 = vmatprep.subr.bf16.mxu0 0
      %1024 = vmatpush2.bf16.msra.mxu0 0
      %1025 = vmatprep.subr.bf16.mxu0 0
      %1026 = vmatpush2.bf16.msra.mxu0 0
      %1027 = vmatprep.mubr.bf16.mxu0 0
      %1028 = vmatmul.mubr.bf16.gmra.mxu0 %v939
      %v1029 = vpop.f32.mrf.mxu0
      %v1030 = vadd.f32 0.0, %v1029
      %v1031 = vpop.f32.mrf.mxu0
      %v1032 = vpop.f32.mrf.mxu0
      %v1033 = vadd.f32 0.0, %v1032
      %v1034 = vpop.f32.mrf.mxu0
      %1035 = vmatprep.mubr.bf16.mxu0 0
      %1036 = vmatmul.mubr.bf16.gmra.mxu0 %v940
      %v1037 = vpop.f32.mrf.mxu0
      %v1038 = vadd.f32 0.0, %v1037
      %v1039 = vpop.f32.mrf.mxu0
      %v1040 = vpop.f32.mrf.mxu0
      %v1041 = vadd.f32 0.0, %v1040
      %v1042 = vpop.f32.mrf.mxu0
      %1043 = vmatprep.mubr.bf16.mxu0 0
      %1044 = vmatmul.mubr.bf16.gmra.mxu0 %v941
      %v1045 = vpop.f32.mrf.mxu0
      %v1046 = vadd.f32 0.0, %v1045
      %v1047 = vpop.f32.mrf.mxu0
      %v1048 = vpop.f32.mrf.mxu0
      %v1049 = vadd.f32 0.0, %v1048
      %v1050 = vpop.f32.mrf.mxu0
      %1051 = vmatprep.mubr.bf16.mxu0 0
      %1052 = vmatmul.mubr.bf16.gmra.mxu0 %v942
      %v1053 = vpop.f32.mrf.mxu0
      %v1054 = vadd.f32 0.0, %v1053
      %v1055 = vpop.f32.mrf.mxu0
      %v1056 = vpop.f32.mrf.mxu0
      %v1057 = vadd.f32 0.0, %v1056
      %v1058 = vpop.f32.mrf.mxu0
      %1059 = vdwg.mxu0
      %v1060 = vadd.f32 %v889, %v1030
      %v1061 = vadd.f32 %v890, %v1033
      %v1062 = vadd.f32 %v891, %v1038
      %v1063 = vadd.f32 %v892, %v1041
      %v1064 = vadd.f32 %v893, %v1046
      %v1065 = vadd.f32 %v894, %v1049
      %v1066 = vadd.f32 %v895, %v1054
      %v1067 = vadd.f32 %v896, %v1057
      %s1068 = scalar_lea.vmem %s261, 216
      %v1069 = vld [vmem:[%s1068] sm:$0xf]
      %v1070 = vld [vmem:[%s1068 + $0x8] sm:$0xf]
      %v1071 = vld [vmem:[%s1068 + $0x10] sm:$0xf]
      %v1072 = vld [vmem:[%s1068 + $0x18] sm:$0xf]
      %v1073 = vld [vmem:[%s1068 + $0x20] sm:$0xf]
      %v1074 = vld [vmem:[%s1068 + $0x28] sm:$0xf]
      %v1075 = vld [vmem:[%s1068 + $0x30] sm:$0xf]
      %v1076 = vld [vmem:[%s1068 + $0x38] sm:$0xf]
      %s1077 = scalar_lea.vmem %s1, 256
      %v1078 = vld [vmem:[%s1077] sm:$0xf]
      %v1079 = vld [vmem:[%s1077 + $0x4] sm:$0xf]
      %v1080 = vld [vmem:[%s1077 + $0x8] sm:$0xf]
      %v1081 = vld [vmem:[%s1077 + $0xc] sm:$0xf]
      %v1082 = vld [vmem:[%s1077 + $0x10] sm:$0xf]
      %v1083 = vld [vmem:[%s1077 + $0x14] sm:$0xf]
      %v1084 = vld [vmem:[%s1077 + $0x18] sm:$0xf]
      %v1085 = vld [vmem:[%s1077 + $0x1c] sm:$0xf]
      %v1086 = vld [vmem:[%s1077 + $0x20] sm:$0xf]
      %v1087 = vld [vmem:[%s1077 + $0x24] sm:$0xf]
      %v1088 = vld [vmem:[%s1077 + $0x28] sm:$0xf]
      %v1089 = vld [vmem:[%s1077 + $0x2c] sm:$0xf]
      %v1090 = vld [vmem:[%s1077 + $0x30] sm:$0xf]
      %v1091 = vld [vmem:[%s1077 + $0x34] sm:$0xf]
      %v1092 = vld [vmem:[%s1077 + $0x38] sm:$0xf]
      %v1093 = vld [vmem:[%s1077 + $0x3c] sm:$0xf]
      %v1102 = vunpack.c.l.b16 %v1069
      %v1103 = vunpack.c.l.b16 %v1070
      %v1104 = vunpack.c.l.b16 %v1071
      %v1105 = vunpack.c.l.b16 %v1072
      %v1106 = vunpack.c.l.b16 %v1073
      %v1107 = vunpack.c.l.b16 %v1074
      %v1108 = vunpack.c.l.b16 %v1075
      %v1109 = vunpack.c.l.b16 %v1076
      %v1110 = vpack.c.b16 %v1103, %v1102
      %v1111 = vpack.c.b16 %v1105, %v1104
      %v1112 = vpack.c.b16 %v1107, %v1106
      %v1113 = vpack.c.b16 %v1109, %v1108
      %v1134 = vunpack.c.l.b16 %v1078
      %v1135 = vunpack.c.l.b16 %v1079
      %v1136 = vunpack.c.l.b16 %v1080
      %v1137 = vunpack.c.l.b16 %v1081
      %v1138 = vunpack.c.l.b16 %v1082
      %v1139 = vunpack.c.l.b16 %v1083
      %v1140 = vunpack.c.l.b16 %v1084
      %v1141 = vunpack.c.l.b16 %v1085
      %v1142 = vunpack.c.l.b16 %v1086
      %v1143 = vunpack.c.l.b16 %v1087
      %v1144 = vunpack.c.l.b16 %v1088
      %v1145 = vunpack.c.l.b16 %v1089
      %v1146 = vunpack.c.l.b16 %v1090
      %v1147 = vunpack.c.l.b16 %v1091
      %v1148 = vunpack.c.l.b16 %v1092
      %v1149 = vunpack.c.l.b16 %v1093
      %v1150 = vpack.c.b16 %v1135, %v1134
      %v1151 = vpack.c.b16 %v1137, %v1136
      %v1152 = vpack.c.b16 %v1139, %v1138
      %v1153 = vpack.c.b16 %v1141, %v1140
      %v1154 = vpack.c.b16 %v1143, %v1142
      %v1155 = vpack.c.b16 %v1145, %v1144
      %v1156 = vpack.c.b16 %v1147, %v1146
      %v1157 = vpack.c.b16 %v1149, %v1148
      %1166 = vmatprep.subr.bf16.mxu0 0
      %1167 = vmatpush1.bf16.msra.mxu0 %v1157
      %1168 = vmatprep.subr.bf16.mxu0 0
      %1169 = vmatpush1.bf16.msra.mxu0 %v1156
      %1170 = vmatprep.subr.bf16.mxu0 0
      %1171 = vmatpush1.bf16.msra.mxu0 %v1155
      %1172 = vmatprep.subr.bf16.mxu0 0
      %1173 = vmatpush1.bf16.msra.mxu0 %v1154
      %1174 = vmatprep.subr.bf16.mxu0 0
      %1175 = vmatpush1.bf16.msra.mxu0 %v1153
      %1176 = vmatprep.subr.bf16.mxu0 0
      %1177 = vmatpush1.bf16.msra.mxu0 %v1152
      %1178 = vmatprep.subr.bf16.mxu0 0
      %1179 = vmatpush1.bf16.msra.mxu0 %v1151
      %1180 = vmatprep.subr.bf16.mxu0 0
      %1181 = vmatpush1.bf16.msra.mxu0 %v1150
      %1182 = vmatprep.subr.bf16.mxu0 0
      %1183 = vmatpush2.bf16.msra.mxu0 0
      %1184 = vmatprep.subr.bf16.mxu0 0
      %1185 = vmatpush2.bf16.msra.mxu0 0
      %1186 = vmatprep.subr.bf16.mxu0 0
      %1187 = vmatpush2.bf16.msra.mxu0 0
      %1188 = vmatprep.subr.bf16.mxu0 0
      %1189 = vmatpush2.bf16.msra.mxu0 0
      %1190 = vmatprep.subr.bf16.mxu0 0
      %1191 = vmatpush2.bf16.msra.mxu0 0
      %1192 = vmatprep.subr.bf16.mxu0 0
      %1193 = vmatpush2.bf16.msra.mxu0 0
      %1194 = vmatprep.subr.bf16.mxu0 0
      %1195 = vmatpush2.bf16.msra.mxu0 0
      %1196 = vmatprep.subr.bf16.mxu0 0
      %1197 = vmatpush2.bf16.msra.mxu0 0
      %1198 = vmatprep.mubr.bf16.mxu0 0
      %1199 = vmatmul.mubr.bf16.gmra.mxu0 %v1110
      %v1200 = vpop.f32.mrf.mxu0
      %v1201 = vadd.f32 0.0, %v1200
      %v1202 = vpop.f32.mrf.mxu0
      %v1203 = vpop.f32.mrf.mxu0
      %v1204 = vadd.f32 0.0, %v1203
      %v1205 = vpop.f32.mrf.mxu0
      %1206 = vmatprep.mubr.bf16.mxu0 0
      %1207 = vmatmul.mubr.bf16.gmra.mxu0 %v1111
      %v1208 = vpop.f32.mrf.mxu0
      %v1209 = vadd.f32 0.0, %v1208
      %v1210 = vpop.f32.mrf.mxu0
      %v1211 = vpop.f32.mrf.mxu0
      %v1212 = vadd.f32 0.0, %v1211
      %v1213 = vpop.f32.mrf.mxu0
      %1214 = vmatprep.mubr.bf16.mxu0 0
      %1215 = vmatmul.mubr.bf16.gmra.mxu0 %v1112
      %v1216 = vpop.f32.mrf.mxu0
      %v1217 = vadd.f32 0.0, %v1216
      %v1218 = vpop.f32.mrf.mxu0
      %v1219 = vpop.f32.mrf.mxu0
      %v1220 = vadd.f32 0.0, %v1219
      %v1221 = vpop.f32.mrf.mxu0
      %1222 = vmatprep.mubr.bf16.mxu0 0
      %1223 = vmatmul.mubr.bf16.gmra.mxu0 %v1113
      %v1224 = vpop.f32.mrf.mxu0
      %v1225 = vadd.f32 0.0, %v1224
      %v1226 = vpop.f32.mrf.mxu0
      %v1227 = vpop.f32.mrf.mxu0
      %v1228 = vadd.f32 0.0, %v1227
      %v1229 = vpop.f32.mrf.mxu0
      %1230 = vdwg.mxu0
      %v1231 = vadd.f32 %v1060, %v1201
      %v1232 = vadd.f32 %v1061, %v1204
      %v1233 = vadd.f32 %v1062, %v1209
      %v1234 = vadd.f32 %v1063, %v1212
      %v1235 = vadd.f32 %v1064, %v1217
      %v1236 = vadd.f32 %v1065, %v1220
      %v1237 = vadd.f32 %v1066, %v1225
      %v1238 = vadd.f32 %v1067, %v1228
      %v1239 = vld [vmem:[%s897] sm:$0xf]
      %v1240 = vld [vmem:[%s897 + $0x4] sm:$0x1]
      %v1241 = vld [vmem:[%s897 + $0x8] sm:$0xf]
      %v1242 = vld [vmem:[%s897 + $0xc] sm:$0x1]
      %v1243 = vld [vmem:[%s897 + $0x10] sm:$0xf]
      %v1244 = vld [vmem:[%s897 + $0x14] sm:$0x1]
      %v1245 = vld [vmem:[%s897 + $0x18] sm:$0xf]
      %v1246 = vld [vmem:[%s897 + $0x1c] sm:$0x1]
      %v1247 = vld [vmem:[%s897 + $0x20] sm:$0xf]
      %v1248 = vld [vmem:[%s897 + $0x24] sm:$0x1]
      %v1249 = vld [vmem:[%s897 + $0x28] sm:$0xf]
      %v1250 = vld [vmem:[%s897 + $0x2c] sm:$0x1]
      %v1251 = vld [vmem:[%s897 + $0x30] sm:$0xf]
      %v1252 = vld [vmem:[%s897 + $0x34] sm:$0x1]
      %v1253 = vld [vmem:[%s897 + $0x38] sm:$0xf]
      %v1254 = vld [vmem:[%s897 + $0x3c] sm:$0x1]
      %v1256 = vshrl.u32 %v1239, 16
      %v1258 = vrot.slane %v1256, 4
      %v1259 = vshll.u32 %v1239, 16
      %v1261 = vrot.slane %v1259, 5
      %v1262 = vor.u32 %v1258, %v1261
      %v1263 = vrot.slane %v1262, 4
      %v1265 = vshll.u32 %v1240, 16
      %v1267 = vrot.slane %v1265, 5
      %v1268 = vsel %vm630, %v1263, %v1267
      %v1270 = vshrl.u32 %v1241, 16
      %v1272 = vrot.slane %v1270, 4
      %v1273 = vshll.u32 %v1241, 16
      %v1275 = vrot.slane %v1273, 5
      %v1276 = vor.u32 %v1272, %v1275
      %v1277 = vrot.slane %v1276, 4
      %v1279 = vshll.u32 %v1242, 16
      %v1281 = vrot.slane %v1279, 5
      %v1282 = vsel %vm630, %v1277, %v1281
      %v1284 = vshrl.u32 %v1243, 16
      %v1286 = vrot.slane %v1284, 4
      %v1287 = vshll.u32 %v1243, 16
      %v1289 = vrot.slane %v1287, 5
      %v1290 = vor.u32 %v1286, %v1289
      %v1291 = vrot.slane %v1290, 4
      %v1293 = vshll.u32 %v1244, 16
      %v1295 = vrot.slane %v1293, 5
      %v1296 = vsel %vm630, %v1291, %v1295
      %v1298 = vshrl.u32 %v1245, 16
      %v1300 = vrot.slane %v1298, 4
      %v1301 = vshll.u32 %v1245, 16
      %v1303 = vrot.slane %v1301, 5
      %v1304 = vor.u32 %v1300, %v1303
      %v1305 = vrot.slane %v1304, 4
      %v1307 = vshll.u32 %v1246, 16
      %v1309 = vrot.slane %v1307, 5
      %v1310 = vsel %vm630, %v1305, %v1309
      %v1312 = vshrl.u32 %v1247, 16
      %v1314 = vrot.slane %v1312, 4
      %v1315 = vshll.u32 %v1247, 16
      %v1317 = vrot.slane %v1315, 5
      %v1318 = vor.u32 %v1314, %v1317
      %v1319 = vrot.slane %v1318, 4
      %v1321 = vshll.u32 %v1248, 16
      %v1323 = vrot.slane %v1321, 5
      %v1324 = vsel %vm630, %v1319, %v1323
      %v1326 = vshrl.u32 %v1249, 16
      %v1328 = vrot.slane %v1326, 4
      %v1329 = vshll.u32 %v1249, 16
      %v1331 = vrot.slane %v1329, 5
      %v1332 = vor.u32 %v1328, %v1331
      %v1333 = vrot.slane %v1332, 4
      %v1335 = vshll.u32 %v1250, 16
      %v1337 = vrot.slane %v1335, 5
      %v1338 = vsel %vm630, %v1333, %v1337
      %v1340 = vshrl.u32 %v1251, 16
      %v1342 = vrot.slane %v1340, 4
      %v1343 = vshll.u32 %v1251, 16
      %v1345 = vrot.slane %v1343, 5
      %v1346 = vor.u32 %v1342, %v1345
      %v1347 = vrot.slane %v1346, 4
      %v1349 = vshll.u32 %v1252, 16
      %v1351 = vrot.slane %v1349, 5
      %v1352 = vsel %vm630, %v1347, %v1351
      %v1354 = vshrl.u32 %v1253, 16
      %v1356 = vrot.slane %v1354, 4
      %v1357 = vshll.u32 %v1253, 16
      %v1359 = vrot.slane %v1357, 5
      %v1360 = vor.u32 %v1356, %v1359
      %v1361 = vrot.slane %v1360, 4
      %v1363 = vshll.u32 %v1254, 16
      %v1365 = vrot.slane %v1363, 5
      %v1366 = vsel %vm630, %v1361, %v1365
      %s1367 = scalar_lea.vmem %s1, 320
      %v1368 = vld [vmem:[%s1367] sm:$0xf]
      %v1369 = vld [vmem:[%s1367 + $0x4] sm:$0xf]
      %v1370 = vld [vmem:[%s1367 + $0x8] sm:$0xf]
      %v1371 = vld [vmem:[%s1367 + $0xc] sm:$0xf]
      %v1372 = vld [vmem:[%s1367 + $0x10] sm:$0xf]
      %v1373 = vld [vmem:[%s1367 + $0x14] sm:$0xf]
      %v1374 = vld [vmem:[%s1367 + $0x18] sm:$0xf]
      %v1375 = vld [vmem:[%s1367 + $0x1c] sm:$0xf]
      %v1376 = vld [vmem:[%s1367 + $0x20] sm:$0xf]
      %v1377 = vld [vmem:[%s1367 + $0x24] sm:$0xf]
      %v1378 = vld [vmem:[%s1367 + $0x28] sm:$0xf]
      %v1379 = vld [vmem:[%s1367 + $0x2c] sm:$0xf]
      %v1380 = vld [vmem:[%s1367 + $0x30] sm:$0xf]
      %v1381 = vld [vmem:[%s1367 + $0x34] sm:$0xf]
      %v1382 = vld [vmem:[%s1367 + $0x38] sm:$0xf]
      %v1383 = vld [vmem:[%s1367 + $0x3c] sm:$0xf]
      %v1384 = vunpack.c.l.b16 %v1268
      %v1385 = vunpack.c.l.b16 %v1282
      %v1386 = vunpack.c.l.b16 %v1296
      %v1387 = vunpack.c.l.b16 %v1310
      %v1388 = vunpack.c.l.b16 %v1324
      %v1389 = vunpack.c.l.b16 %v1338
      %v1390 = vunpack.c.l.b16 %v1352
      %v1391 = vunpack.c.l.b16 %v1366
      %v1392 = vpack.c.b16 %v1385, %v1384
      %v1393 = vpack.c.b16 %v1387, %v1386
      %v1394 = vpack.c.b16 %v1389, %v1388
      %v1395 = vpack.c.b16 %v1391, %v1390
      %v1416 = vunpack.c.l.b16 %v1368
      %v1417 = vunpack.c.l.b16 %v1369
      %v1418 = vunpack.c.l.b16 %v1370
      %v1419 = vunpack.c.l.b16 %v1371
      %v1420 = vunpack.c.l.b16 %v1372
      %v1421 = vunpack.c.l.b16 %v1373
      %v1422 = vunpack.c.l.b16 %v1374
      %v1423 = vunpack.c.l.b16 %v1375
      %v1424 = vunpack.c.l.b16 %v1376
      %v1425 = vunpack.c.l.b16 %v1377
      %v1426 = vunpack.c.l.b16 %v1378
      %v1427 = vunpack.c.l.b16 %v1379
      %v1428 = vunpack.c.l.b16 %v1380
      %v1429 = vunpack.c.l.b16 %v1381
      %v1430 = vunpack.c.l.b16 %v1382
      %v1431 = vunpack.c.l.b16 %v1383
      %v1432 = vpack.c.b16 %v1417, %v1416
      %v1433 = vpack.c.b16 %v1419, %v1418
      %v1434 = vpack.c.b16 %v1421, %v1420
      %v1435 = vpack.c.b16 %v1423, %v1422
      %v1436 = vpack.c.b16 %v1425, %v1424
      %v1437 = vpack.c.b16 %v1427, %v1426
      %v1438 = vpack.c.b16 %v1429, %v1428
      %v1439 = vpack.c.b16 %v1431, %v1430
      %1448 = vmatprep.subr.bf16.mxu0 0
      %1449 = vmatpush1.bf16.msra.mxu0 %v1439
      %1450 = vmatprep.subr.bf16.mxu0 0
      %1451 = vmatpush1.bf16.msra.mxu0 %v1438
      %1452 = vmatprep.subr.bf16.mxu0 0
      %1453 = vmatpush1.bf16.msra.mxu0 %v1437
      %1454 = vmatprep.subr.bf16.mxu0 0
      %1455 = vmatpush1.bf16.msra.mxu0 %v1436
      %1456 = vmatprep.subr.bf16.mxu0 0
      %1457 = vmatpush1.bf16.msra.mxu0 %v1435
      %1458 = vmatprep.subr.bf16.mxu0 0
      %1459 = vmatpush1.bf16.msra.mxu0 %v1434
      %1460 = vmatprep.subr.bf16.mxu0 0
      %1461 = vmatpush1.bf16.msra.mxu0 %v1433
      %1462 = vmatprep.subr.bf16.mxu0 0
      %1463 = vmatpush1.bf16.msra.mxu0 %v1432
      %1464 = vmatprep.subr.bf16.mxu0 0
      %1465 = vmatpush2.bf16.msra.mxu0 0
      %1466 = vmatprep.subr.bf16.mxu0 0
      %1467 = vmatpush2.bf16.msra.mxu0 0
      %1468 = vmatprep.subr.bf16.mxu0 0
      %1469 = vmatpush2.bf16.msra.mxu0 0
      %1470 = vmatprep.subr.bf16.mxu0 0
      %1471 = vmatpush2.bf16.msra.mxu0 0
      %1472 = vmatprep.subr.bf16.mxu0 0
      %1473 = vmatpush2.bf16.msra.mxu0 0
      %1474 = vmatprep.subr.bf16.mxu0 0
      %1475 = vmatpush2.bf16.msra.mxu0 0
      %1476 = vmatprep.subr.bf16.mxu0 0
      %1477 = vmatpush2.bf16.msra.mxu0 0
      %1478 = vmatprep.subr.bf16.mxu0 0
      %1479 = vmatpush2.bf16.msra.mxu0 0
      %1480 = vmatprep.mubr.bf16.mxu0 0
      %1481 = vmatmul.mubr.bf16.gmra.mxu0 %v1392
      %v1482 = vpop.f32.mrf.mxu0
      %v1483 = vadd.f32 0.0, %v1482
      %v1484 = vpop.f32.mrf.mxu0
      %v1485 = vpop.f32.mrf.mxu0
      %v1486 = vadd.f32 0.0, %v1485
      %v1487 = vpop.f32.mrf.mxu0
      %1488 = vmatprep.mubr.bf16.mxu0 0
      %1489 = vmatmul.mubr.bf16.gmra.mxu0 %v1393
      %v1490 = vpop.f32.mrf.mxu0
      %v1491 = vadd.f32 0.0, %v1490
      %v1492 = vpop.f32.mrf.mxu0
      %v1493 = vpop.f32.mrf.mxu0
      %v1494 = vadd.f32 0.0, %v1493
      %v1495 = vpop.f32.mrf.mxu0
      %1496 = vmatprep.mubr.bf16.mxu0 0
      %1497 = vmatmul.mubr.bf16.gmra.mxu0 %v1394
      %v1498 = vpop.f32.mrf.mxu0
      %v1499 = vadd.f32 0.0, %v1498
      %v1500 = vpop.f32.mrf.mxu0
      %v1501 = vpop.f32.mrf.mxu0
      %v1502 = vadd.f32 0.0, %v1501
      %v1503 = vpop.f32.mrf.mxu0
      %1504 = vmatprep.mubr.bf16.mxu0 0
      %1505 = vmatmul.mubr.bf16.gmra.mxu0 %v1395
      %v1506 = vpop.f32.mrf.mxu0
      %v1507 = vadd.f32 0.0, %v1506
      %v1508 = vpop.f32.mrf.mxu0
      %v1509 = vpop.f32.mrf.mxu0
      %v1510 = vadd.f32 0.0, %v1509
      %v1511 = vpop.f32.mrf.mxu0
      %1512 = vdwg.mxu0
      %v1513 = vadd.f32 %v1231, %v1483
      %v1514 = vadd.f32 %v1232, %v1486
      %v1515 = vadd.f32 %v1233, %v1491
      %v1516 = vadd.f32 %v1234, %v1494
      %v1517 = vadd.f32 %v1235, %v1499
      %v1518 = vadd.f32 %v1236, %v1502
      %v1519 = vadd.f32 %v1237, %v1507
      %v1520 = vadd.f32 %v1238, %v1510
      %s1521 = scalar_lea.vmem %s261, 8
      %v1522 = vld [vmem:[%s1521] sm:$0xf]
      %v1523 = vld [vmem:[%s1521 + $0x8] sm:$0xf]
      %v1524 = vld [vmem:[%s1521 + $0x10] sm:$0xf]
      %v1525 = vld [vmem:[%s1521 + $0x18] sm:$0xf]
      %v1526 = vld [vmem:[%s1521 + $0x20] sm:$0xf]
      %v1527 = vld [vmem:[%s1521 + $0x28] sm:$0xf]
      %v1528 = vld [vmem:[%s1521 + $0x30] sm:$0xf]
      %v1529 = vld [vmem:[%s1521 + $0x38] sm:$0xf]
      %s1530 = scalar_lea.vmem %s1, 384
      %v1531 = vld [vmem:[%s1530] sm:$0xf]
      %v1532 = vld [vmem:[%s1530 + $0x4] sm:$0xf]
      %v1533 = vld [vmem:[%s1530 + $0x8] sm:$0xf]
      %v1534 = vld [vmem:[%s1530 + $0xc] sm:$0xf]
      %v1535 = vld [vmem:[%s1530 + $0x10] sm:$0xf]
      %v1536 = vld [vmem:[%s1530 + $0x14] sm:$0xf]
      %v1537 = vld [vmem:[%s1530 + $0x18] sm:$0xf]
      %v1538 = vld [vmem:[%s1530 + $0x1c] sm:$0xf]
      %v1539 = vld [vmem:[%s1530 + $0x20] sm:$0xf]
      %v1540 = vld [vmem:[%s1530 + $0x24] sm:$0xf]
      %v1541 = vld [vmem:[%s1530 + $0x28] sm:$0xf]
      %v1542 = vld [vmem:[%s1530 + $0x2c] sm:$0xf]
      %v1543 = vld [vmem:[%s1530 + $0x30] sm:$0xf]
      %v1544 = vld [vmem:[%s1530 + $0x34] sm:$0xf]
      %v1545 = vld [vmem:[%s1530 + $0x38] sm:$0xf]
      %v1546 = vld [vmem:[%s1530 + $0x3c] sm:$0xf]
      %v1555 = vunpack.c.l.b16 %v1522
      %v1556 = vunpack.c.l.b16 %v1523
      %v1557 = vunpack.c.l.b16 %v1524
      %v1558 = vunpack.c.l.b16 %v1525
      %v1559 = vunpack.c.l.b16 %v1526
      %v1560 = vunpack.c.l.b16 %v1527
      %v1561 = vunpack.c.l.b16 %v1528
      %v1562 = vunpack.c.l.b16 %v1529
      %v1563 = vpack.c.b16 %v1556, %v1555
      %v1564 = vpack.c.b16 %v1558, %v1557
      %v1565 = vpack.c.b16 %v1560, %v1559
      %v1566 = vpack.c.b16 %v1562, %v1561
      %v1587 = vunpack.c.l.b16 %v1531
      %v1588 = vunpack.c.l.b16 %v1532
      %v1589 = vunpack.c.l.b16 %v1533
      %v1590 = vunpack.c.l.b16 %v1534
      %v1591 = vunpack.c.l.b16 %v1535
      %v1592 = vunpack.c.l.b16 %v1536
      %v1593 = vunpack.c.l.b16 %v1537
      %v1594 = vunpack.c.l.b16 %v1538
      %v1595 = vunpack.c.l.b16 %v1539
      %v1596 = vunpack.c.l.b16 %v1540
      %v1597 = vunpack.c.l.b16 %v1541
      %v1598 = vunpack.c.l.b16 %v1542
      %v1599 = vunpack.c.l.b16 %v1543
      %v1600 = vunpack.c.l.b16 %v1544
      %v1601 = vunpack.c.l.b16 %v1545
      %v1602 = vunpack.c.l.b16 %v1546
      %v1603 = vpack.c.b16 %v1588, %v1587
      %v1604 = vpack.c.b16 %v1590, %v1589
      %v1605 = vpack.c.b16 %v1592, %v1591
      %v1606 = vpack.c.b16 %v1594, %v1593
      %v1607 = vpack.c.b16 %v1596, %v1595
      %v1608 = vpack.c.b16 %v1598, %v1597
      %v1609 = vpack.c.b16 %v1600, %v1599
      %v1610 = vpack.c.b16 %v1602, %v1601
      %1619 = vmatprep.subr.bf16.mxu0 0
      %1620 = vmatpush1.bf16.msra.mxu0 %v1610
      %1621 = vmatprep.subr.bf16.mxu0 0
      %1622 = vmatpush1.bf16.msra.mxu0 %v1609
      %1623 = vmatprep.subr.bf16.mxu0 0
      %1624 = vmatpush1.bf16.msra.mxu0 %v1608
      %1625 = vmatprep.subr.bf16.mxu0 0
      %1626 = vmatpush1.bf16.msra.mxu0 %v1607
      %1627 = vmatprep.subr.bf16.mxu0 0
      %1628 = vmatpush1.bf16.msra.mxu0 %v1606
      %1629 = vmatprep.subr.bf16.mxu0 0
      %1630 = vmatpush1.bf16.msra.mxu0 %v1605
      %1631 = vmatprep.subr.bf16.mxu0 0
      %1632 = vmatpush1.bf16.msra.mxu0 %v1604
      %1633 = vmatprep.subr.bf16.mxu0 0
      %1634 = vmatpush1.bf16.msra.mxu0 %v1603
      %1635 = vmatprep.subr.bf16.mxu0 0
      %1636 = vmatpush2.bf16.msra.mxu0 0
      %1637 = vmatprep.subr.bf16.mxu0 0
      %1638 = vmatpush2.bf16.msra.mxu0 0
      %1639 = vmatprep.subr.bf16.mxu0 0
      %1640 = vmatpush2.bf16.msra.mxu0 0
      %1641 = vmatprep.subr.bf16.mxu0 0
      %1642 = vmatpush2.bf16.msra.mxu0 0
      %1643 = vmatprep.subr.bf16.mxu0 0
      %1644 = vmatpush2.bf16.msra.mxu0 0
      %1645 = vmatprep.subr.bf16.mxu0 0
      %1646 = vmatpush2.bf16.msra.mxu0 0
      %1647 = vmatprep.subr.bf16.mxu0 0
      %1648 = vmatpush2.bf16.msra.mxu0 0
      %1649 = vmatprep.subr.bf16.mxu0 0
      %1650 = vmatpush2.bf16.msra.mxu0 0
      %1651 = vmatprep.mubr.bf16.mxu0 0
      %1652 = vmatmul.mubr.bf16.gmra.mxu0 %v1563
      %v1653 = vpop.f32.mrf.mxu0
      %v1654 = vadd.f32 0.0, %v1653
      %v1655 = vpop.f32.mrf.mxu0
      %v1656 = vpop.f32.mrf.mxu0
      %v1657 = vadd.f32 0.0, %v1656
      %v1658 = vpop.f32.mrf.mxu0
      %1659 = vmatprep.mubr.bf16.mxu0 0
      %1660 = vmatmul.mubr.bf16.gmra.mxu0 %v1564
      %v1661 = vpop.f32.mrf.mxu0
      %v1662 = vadd.f32 0.0, %v1661
      %v1663 = vpop.f32.mrf.mxu0
      %v1664 = vpop.f32.mrf.mxu0
      %v1665 = vadd.f32 0.0, %v1664
      %v1666 = vpop.f32.mrf.mxu0
      %1667 = vmatprep.mubr.bf16.mxu0 0
      %1668 = vmatmul.mubr.bf16.gmra.mxu0 %v1565
      %v1669 = vpop.f32.mrf.mxu0
      %v1670 = vadd.f32 0.0, %v1669
      %v1671 = vpop.f32.mrf.mxu0
      %v1672 = vpop.f32.mrf.mxu0
      %v1673 = vadd.f32 0.0, %v1672
      %v1674 = vpop.f32.mrf.mxu0
      %1675 = vmatprep.mubr.bf16.mxu0 0
      %1676 = vmatmul.mubr.bf16.gmra.mxu0 %v1566
      %v1677 = vpop.f32.mrf.mxu0
      %v1678 = vadd.f32 0.0, %v1677
      %v1679 = vpop.f32.mrf.mxu0
      %v1680 = vpop.f32.mrf.mxu0
      %v1681 = vadd.f32 0.0, %v1680
      %v1682 = vpop.f32.mrf.mxu0
      %1683 = vdwg.mxu0
      %v1684 = vadd.f32 %v1513, %v1654
      %v1685 = vadd.f32 %v1514, %v1657
      %v1686 = vadd.f32 %v1515, %v1662
      %v1687 = vadd.f32 %v1516, %v1665
      %v1688 = vadd.f32 %v1517, %v1670
      %v1689 = vadd.f32 %v1518, %v1673
      %v1690 = vadd.f32 %v1519, %v1678
      %v1691 = vadd.f32 %v1520, %v1681
      %s1692 = scalar_lea.vmem %s261, 80
      %v1693 = vld [vmem:[%s1692] sm:$0xf]
      %v1694 = vld [vmem:[%s1692 + $0x8] sm:$0xf]
      %v1695 = vld [vmem:[%s1692 + $0x10] sm:$0xf]
      %v1696 = vld [vmem:[%s1692 + $0x18] sm:$0xf]
      %v1697 = vld [vmem:[%s1692 + $0x20] sm:$0xf]
      %v1698 = vld [vmem:[%s1692 + $0x28] sm:$0xf]
      %v1699 = vld [vmem:[%s1692 + $0x30] sm:$0xf]
      %v1700 = vld [vmem:[%s1692 + $0x38] sm:$0xf]
      %s1701 = scalar_lea.vmem %s1, 448
      %v1702 = vld [vmem:[%s1701] sm:$0xf]
      %v1703 = vld [vmem:[%s1701 + $0x4] sm:$0xf]
      %v1704 = vld [vmem:[%s1701 + $0x8] sm:$0xf]
      %v1705 = vld [vmem:[%s1701 + $0xc] sm:$0xf]
      %v1706 = vld [vmem:[%s1701 + $0x10] sm:$0xf]
      %v1707 = vld [vmem:[%s1701 + $0x14] sm:$0xf]
      %v1708 = vld [vmem:[%s1701 + $0x18] sm:$0xf]
      %v1709 = vld [vmem:[%s1701 + $0x1c] sm:$0xf]
      %v1710 = vld [vmem:[%s1701 + $0x20] sm:$0xf]
      %v1711 = vld [vmem:[%s1701 + $0x24] sm:$0xf]
      %v1712 = vld [vmem:[%s1701 + $0x28] sm:$0xf]
      %v1713 = vld [vmem:[%s1701 + $0x2c] sm:$0xf]
      %v1714 = vld [vmem:[%s1701 + $0x30] sm:$0xf]
      %v1715 = vld [vmem:[%s1701 + $0x34] sm:$0xf]
      %v1716 = vld [vmem:[%s1701 + $0x38] sm:$0xf]
      %v1717 = vld [vmem:[%s1701 + $0x3c] sm:$0xf]
      %v1726 = vunpack.c.l.b16 %v1693
      %v1727 = vunpack.c.l.b16 %v1694
      %v1728 = vunpack.c.l.b16 %v1695
      %v1729 = vunpack.c.l.b16 %v1696
      %v1730 = vunpack.c.l.b16 %v1697
      %v1731 = vunpack.c.l.b16 %v1698
      %v1732 = vunpack.c.l.b16 %v1699
      %v1733 = vunpack.c.l.b16 %v1700
      %v1734 = vpack.c.b16 %v1727, %v1726
      %v1735 = vpack.c.b16 %v1729, %v1728
      %v1736 = vpack.c.b16 %v1731, %v1730
      %v1737 = vpack.c.b16 %v1733, %v1732
      %v1758 = vunpack.c.l.b16 %v1702
      %v1759 = vunpack.c.l.b16 %v1703
      %v1760 = vunpack.c.l.b16 %v1704
      %v1761 = vunpack.c.l.b16 %v1705
      %v1762 = vunpack.c.l.b16 %v1706
      %v1763 = vunpack.c.l.b16 %v1707
      %v1764 = vunpack.c.l.b16 %v1708
      %v1765 = vunpack.c.l.b16 %v1709
      %v1766 = vunpack.c.l.b16 %v1710
      %v1767 = vunpack.c.l.b16 %v1711
      %v1768 = vunpack.c.l.b16 %v1712
      %v1769 = vunpack.c.l.b16 %v1713
      %v1770 = vunpack.c.l.b16 %v1714
      %v1771 = vunpack.c.l.b16 %v1715
      %v1772 = vunpack.c.l.b16 %v1716
      %v1773 = vunpack.c.l.b16 %v1717
      %v1774 = vpack.c.b16 %v1759, %v1758
      %v1775 = vpack.c.b16 %v1761, %v1760
      %v1776 = vpack.c.b16 %v1763, %v1762
      %v1777 = vpack.c.b16 %v1765, %v1764
      %v1778 = vpack.c.b16 %v1767, %v1766
      %v1779 = vpack.c.b16 %v1769, %v1768
      %v1780 = vpack.c.b16 %v1771, %v1770
      %v1781 = vpack.c.b16 %v1773, %v1772
      %1790 = vmatprep.subr.bf16.mxu0 0
      %1791 = vmatpush1.bf16.msra.mxu0 %v1781
      %1792 = vmatprep.subr.bf16.mxu0 0
      %1793 = vmatpush1.bf16.msra.mxu0 %v1780
      %1794 = vmatprep.subr.bf16.mxu0 0
      %1795 = vmatpush1.bf16.msra.mxu0 %v1779
      %1796 = vmatprep.subr.bf16.mxu0 0
      %1797 = vmatpush1.bf16.msra.mxu0 %v1778
      %1798 = vmatprep.subr.bf16.mxu0 0
      %1799 = vmatpush1.bf16.msra.mxu0 %v1777
      %1800 = vmatprep.subr.bf16.mxu0 0
      %1801 = vmatpush1.bf16.msra.mxu0 %v1776
      %1802 = vmatprep.subr.bf16.mxu0 0
      %1803 = vmatpush1.bf16.msra.mxu0 %v1775
      %1804 = vmatprep.subr.bf16.mxu0 0
      %1805 = vmatpush1.bf16.msra.mxu0 %v1774
      %1806 = vmatprep.subr.bf16.mxu0 0
      %1807 = vmatpush2.bf16.msra.mxu0 0
      %1808 = vmatprep.subr.bf16.mxu0 0
      %1809 = vmatpush2.bf16.msra.mxu0 0
      %1810 = vmatprep.subr.bf16.mxu0 0
      %1811 = vmatpush2.bf16.msra.mxu0 0
      %1812 = vmatprep.subr.bf16.mxu0 0
      %1813 = vmatpush2.bf16.msra.mxu0 0
      %1814 = vmatprep.subr.bf16.mxu0 0
      %1815 = vmatpush2.bf16.msra.mxu0 0
      %1816 = vmatprep.subr.bf16.mxu0 0
      %1817 = vmatpush2.bf16.msra.mxu0 0
      %1818 = vmatprep.subr.bf16.mxu0 0
      %1819 = vmatpush2.bf16.msra.mxu0 0
      %1820 = vmatprep.subr.bf16.mxu0 0
      %1821 = vmatpush2.bf16.msra.mxu0 0
      %1822 = vmatprep.mubr.bf16.mxu0 0
      %1823 = vmatmul.mubr.bf16.gmra.mxu0 %v1734
      %v1824 = vpop.f32.mrf.mxu0
      %v1825 = vadd.f32 0.0, %v1824
      %v1826 = vpop.f32.mrf.mxu0
      %v1827 = vpop.f32.mrf.mxu0
      %v1828 = vadd.f32 0.0, %v1827
      %v1829 = vpop.f32.mrf.mxu0
      %1830 = vmatprep.mubr.bf16.mxu0 0
      %1831 = vmatmul.mubr.bf16.gmra.mxu0 %v1735
      %v1832 = vpop.f32.mrf.mxu0
      %v1833 = vadd.f32 0.0, %v1832
      %v1834 = vpop.f32.mrf.mxu0
      %v1835 = vpop.f32.mrf.mxu0
      %v1836 = vadd.f32 0.0, %v1835
      %v1837 = vpop.f32.mrf.mxu0
      %1838 = vmatprep.mubr.bf16.mxu0 0
      %1839 = vmatmul.mubr.bf16.gmra.mxu0 %v1736
      %v1840 = vpop.f32.mrf.mxu0
      %v1841 = vadd.f32 0.0, %v1840
      %v1842 = vpop.f32.mrf.mxu0
      %v1843 = vpop.f32.mrf.mxu0
      %v1844 = vadd.f32 0.0, %v1843
      %v1845 = vpop.f32.mrf.mxu0
      %1846 = vmatprep.mubr.bf16.mxu0 0
      %1847 = vmatmul.mubr.bf16.gmra.mxu0 %v1737
      %v1848 = vpop.f32.mrf.mxu0
      %v1849 = vadd.f32 0.0, %v1848
      %v1850 = vpop.f32.mrf.mxu0
      %v1851 = vpop.f32.mrf.mxu0
      %v1852 = vadd.f32 0.0, %v1851
      %v1853 = vpop.f32.mrf.mxu0
      %1854 = vdwg.mxu0
      %v1855 = vadd.f32 %v1684, %v1825
      %v1856 = vadd.f32 %v1685, %v1828
      %v1857 = vadd.f32 %v1686, %v1833
      %v1858 = vadd.f32 %v1687, %v1836
      %v1859 = vadd.f32 %v1688, %v1841
      %v1860 = vadd.f32 %v1689, %v1844
      %v1861 = vadd.f32 %v1690, %v1849
      %v1862 = vadd.f32 %v1691, %v1852
      %v1863 = vld [vmem:[%s1521] sm:$0xf]
      %v1864 = vld [vmem:[%s1521 + $0x4] sm:$0x1]
      %v1865 = vld [vmem:[%s1521 + $0x8] sm:$0xf]
      %v1866 = vld [vmem:[%s1521 + $0xc] sm:$0x1]
      %v1867 = vld [vmem:[%s1521 + $0x10] sm:$0xf]
      %v1868 = vld [vmem:[%s1521 + $0x14] sm:$0x1]
      %v1869 = vld [vmem:[%s1521 + $0x18] sm:$0xf]
      %v1870 = vld [vmem:[%s1521 + $0x1c] sm:$0x1]
      %v1871 = vld [vmem:[%s1521 + $0x20] sm:$0xf]
      %v1872 = vld [vmem:[%s1521 + $0x24] sm:$0x1]
      %v1873 = vld [vmem:[%s1521 + $0x28] sm:$0xf]
      %v1874 = vld [vmem:[%s1521 + $0x2c] sm:$0x1]
      %v1875 = vld [vmem:[%s1521 + $0x30] sm:$0xf]
      %v1876 = vld [vmem:[%s1521 + $0x34] sm:$0x1]
      %v1877 = vld [vmem:[%s1521 + $0x38] sm:$0xf]
      %v1878 = vld [vmem:[%s1521 + $0x3c] sm:$0x1]
      %v1880 = vshrl.u32 %v1863, 16
      %v1882 = vrot.slane %v1880, 4
      %v1883 = vshll.u32 %v1863, 16
      %v1885 = vrot.slane %v1883, 5
      %v1886 = vor.u32 %v1882, %v1885
      %v1887 = vrot.slane %v1886, 4
      %v1889 = vshll.u32 %v1864, 16
      %v1891 = vrot.slane %v1889, 5
      %v1892 = vsel %vm630, %v1887, %v1891
      %v1894 = vshrl.u32 %v1865, 16
      %v1896 = vrot.slane %v1894, 4
      %v1897 = vshll.u32 %v1865, 16
      %v1899 = vrot.slane %v1897, 5
      %v1900 = vor.u32 %v1896, %v1899
      %v1901 = vrot.slane %v1900, 4
      %v1903 = vshll.u32 %v1866, 16
      %v1905 = vrot.slane %v1903, 5
      %v1906 = vsel %vm630, %v1901, %v1905
      %v1908 = vshrl.u32 %v1867, 16
      %v1910 = vrot.slane %v1908, 4
      %v1911 = vshll.u32 %v1867, 16
      %v1913 = vrot.slane %v1911, 5
      %v1914 = vor.u32 %v1910, %v1913
      %v1915 = vrot.slane %v1914, 4
      %v1917 = vshll.u32 %v1868, 16
      %v1919 = vrot.slane %v1917, 5
      %v1920 = vsel %vm630, %v1915, %v1919
      %v1922 = vshrl.u32 %v1869, 16
      %v1924 = vrot.slane %v1922, 4
      %v1925 = vshll.u32 %v1869, 16
      %v1927 = vrot.slane %v1925, 5
      %v1928 = vor.u32 %v1924, %v1927
      %v1929 = vrot.slane %v1928, 4
      %v1931 = vshll.u32 %v1870, 16
      %v1933 = vrot.slane %v1931, 5
      %v1934 = vsel %vm630, %v1929, %v1933
      %v1936 = vshrl.u32 %v1871, 16
      %v1938 = vrot.slane %v1936, 4
      %v1939 = vshll.u32 %v1871, 16
      %v1941 = vrot.slane %v1939, 5
      %v1942 = vor.u32 %v1938, %v1941
      %v1943 = vrot.slane %v1942, 4
      %v1945 = vshll.u32 %v1872, 16
      %v1947 = vrot.slane %v1945, 5
      %v1948 = vsel %vm630, %v1943, %v1947
      %v1950 = vshrl.u32 %v1873, 16
      %v1952 = vrot.slane %v1950, 4
      %v1953 = vshll.u32 %v1873, 16
      %v1955 = vrot.slane %v1953, 5
      %v1956 = vor.u32 %v1952, %v1955
      %v1957 = vrot.slane %v1956, 4
      %v1959 = vshll.u32 %v1874, 16
      %v1961 = vrot.slane %v1959, 5
      %v1962 = vsel %vm630, %v1957, %v1961
      %v1964 = vshrl.u32 %v1875, 16
      %v1966 = vrot.slane %v1964, 4
      %v1967 = vshll.u32 %v1875, 16
      %v1969 = vrot.slane %v1967, 5
      %v1970 = vor.u32 %v1966, %v1969
      %v1971 = vrot.slane %v1970, 4
      %v1973 = vshll.u32 %v1876, 16
      %v1975 = vrot.slane %v1973, 5
      %v1976 = vsel %vm630, %v1971, %v1975
      %v1978 = vshrl.u32 %v1877, 16
      %v1980 = vrot.slane %v1978, 4
      %v1981 = vshll.u32 %v1877, 16
      %v1983 = vrot.slane %v1981, 5
      %v1984 = vor.u32 %v1980, %v1983
      %v1985 = vrot.slane %v1984, 4
      %v1987 = vshll.u32 %v1878, 16
      %v1989 = vrot.slane %v1987, 5
      %v1990 = vsel %vm630, %v1985, %v1989
      %s1991 = scalar_lea.vmem %s1, 512
      %v1992 = vld [vmem:[%s1991] sm:$0xf]
      %v1993 = vld [vmem:[%s1991 + $0x4] sm:$0xf]
      %v1994 = vld [vmem:[%s1991 + $0x8] sm:$0xf]
      %v1995 = vld [vmem:[%s1991 + $0xc] sm:$0xf]
      %v1996 = vld [vmem:[%s1991 + $0x10] sm:$0xf]
      %v1997 = vld [vmem:[%s1991 + $0x14] sm:$0xf]
      %v1998 = vld [vmem:[%s1991 + $0x18] sm:$0xf]
      %v1999 = vld [vmem:[%s1991 + $0x1c] sm:$0xf]
      %v2000 = vld [vmem:[%s1991 + $0x20] sm:$0xf]
      %v2001 = vld [vmem:[%s1991 + $0x24] sm:$0xf]
      %v2002 = vld [vmem:[%s1991 + $0x28] sm:$0xf]
      %v2003 = vld [vmem:[%s1991 + $0x2c] sm:$0xf]
      %v2004 = vld [vmem:[%s1991 + $0x30] sm:$0xf]
      %v2005 = vld [vmem:[%s1991 + $0x34] sm:$0xf]
      %v2006 = vld [vmem:[%s1991 + $0x38] sm:$0xf]
      %v2007 = vld [vmem:[%s1991 + $0x3c] sm:$0xf]
      %v2008 = vunpack.c.l.b16 %v1892
      %v2009 = vunpack.c.l.b16 %v1906
      %v2010 = vunpack.c.l.b16 %v1920
      %v2011 = vunpack.c.l.b16 %v1934
      %v2012 = vunpack.c.l.b16 %v1948
      %v2013 = vunpack.c.l.b16 %v1962
      %v2014 = vunpack.c.l.b16 %v1976
      %v2015 = vunpack.c.l.b16 %v1990
      %v2016 = vpack.c.b16 %v2009, %v2008
      %v2017 = vpack.c.b16 %v2011, %v2010
      %v2018 = vpack.c.b16 %v2013, %v2012
      %v2019 = vpack.c.b16 %v2015, %v2014
      %v2040 = vunpack.c.l.b16 %v1992
      %v2041 = vunpack.c.l.b16 %v1993
      %v2042 = vunpack.c.l.b16 %v1994
      %v2043 = vunpack.c.l.b16 %v1995
      %v2044 = vunpack.c.l.b16 %v1996
      %v2045 = vunpack.c.l.b16 %v1997
      %v2046 = vunpack.c.l.b16 %v1998
      %v2047 = vunpack.c.l.b16 %v1999
      %v2048 = vunpack.c.l.b16 %v2000
      %v2049 = vunpack.c.l.b16 %v2001
      %v2050 = vunpack.c.l.b16 %v2002
      %v2051 = vunpack.c.l.b16 %v2003
      %v2052 = vunpack.c.l.b16 %v2004
      %v2053 = vunpack.c.l.b16 %v2005
      %v2054 = vunpack.c.l.b16 %v2006
      %v2055 = vunpack.c.l.b16 %v2007
      %v2056 = vpack.c.b16 %v2041, %v2040
      %v2057 = vpack.c.b16 %v2043, %v2042
      %v2058 = vpack.c.b16 %v2045, %v2044
      %v2059 = vpack.c.b16 %v2047, %v2046
      %v2060 = vpack.c.b16 %v2049, %v2048
      %v2061 = vpack.c.b16 %v2051, %v2050
      %v2062 = vpack.c.b16 %v2053, %v2052
      %v2063 = vpack.c.b16 %v2055, %v2054
      %2072 = vmatprep.subr.bf16.mxu0 0
      %2073 = vmatpush1.bf16.msra.mxu0 %v2063
      %2074 = vmatprep.subr.bf16.mxu0 0
      %2075 = vmatpush1.bf16.msra.mxu0 %v2062
      %2076 = vmatprep.subr.bf16.mxu0 0
      %2077 = vmatpush1.bf16.msra.mxu0 %v2061
      %2078 = vmatprep.subr.bf16.mxu0 0
      %2079 = vmatpush1.bf16.msra.mxu0 %v2060
      %2080 = vmatprep.subr.bf16.mxu0 0
      %2081 = vmatpush1.bf16.msra.mxu0 %v2059
      %2082 = vmatprep.subr.bf16.mxu0 0
      %2083 = vmatpush1.bf16.msra.mxu0 %v2058
      %2084 = vmatprep.subr.bf16.mxu0 0
      %2085 = vmatpush1.bf16.msra.mxu0 %v2057
      %2086 = vmatprep.subr.bf16.mxu0 0
      %2087 = vmatpush1.bf16.msra.mxu0 %v2056
      %2088 = vmatprep.subr.bf16.mxu0 0
      %2089 = vmatpush2.bf16.msra.mxu0 0
      %2090 = vmatprep.subr.bf16.mxu0 0
      %2091 = vmatpush2.bf16.msra.mxu0 0
      %2092 = vmatprep.subr.bf16.mxu0 0
      %2093 = vmatpush2.bf16.msra.mxu0 0
      %2094 = vmatprep.subr.bf16.mxu0 0
      %2095 = vmatpush2.bf16.msra.mxu0 0
      %2096 = vmatprep.subr.bf16.mxu0 0
      %2097 = vmatpush2.bf16.msra.mxu0 0
      %2098 = vmatprep.subr.bf16.mxu0 0
      %2099 = vmatpush2.bf16.msra.mxu0 0
      %2100 = vmatprep.subr.bf16.mxu0 0
      %2101 = vmatpush2.bf16.msra.mxu0 0
      %2102 = vmatprep.subr.bf16.mxu0 0
      %2103 = vmatpush2.bf16.msra.mxu0 0
      %2104 = vmatprep.mubr.bf16.mxu0 0
      %2105 = vmatmul.mubr.bf16.gmra.mxu0 %v2016
      %v2106 = vpop.f32.mrf.mxu0
      %v2107 = vadd.f32 0.0, %v2106
      %v2108 = vpop.f32.mrf.mxu0
      %v2109 = vpop.f32.mrf.mxu0
      %v2110 = vadd.f32 0.0, %v2109
      %v2111 = vpop.f32.mrf.mxu0
      %2112 = vmatprep.mubr.bf16.mxu0 0
      %2113 = vmatmul.mubr.bf16.gmra.mxu0 %v2017
      %v2114 = vpop.f32.mrf.mxu0
      %v2115 = vadd.f32 0.0, %v2114
      %v2116 = vpop.f32.mrf.mxu0
      %v2117 = vpop.f32.mrf.mxu0
      %v2118 = vadd.f32 0.0, %v2117
      %v2119 = vpop.f32.mrf.mxu0
      %2120 = vmatprep.mubr.bf16.mxu0 0
      %2121 = vmatmul.mubr.bf16.gmra.mxu0 %v2018
      %v2122 = vpop.f32.mrf.mxu0
      %v2123 = vadd.f32 0.0, %v2122
      %v2124 = vpop.f32.mrf.mxu0
      %v2125 = vpop.f32.mrf.mxu0
      %v2126 = vadd.f32 0.0, %v2125
      %v2127 = vpop.f32.mrf.mxu0
      %2128 = vmatprep.mubr.bf16.mxu0 0
      %2129 = vmatmul.mubr.bf16.gmra.mxu0 %v2019
      %v2130 = vpop.f32.mrf.mxu0
      %v2131 = vadd.f32 0.0, %v2130
      %v2132 = vpop.f32.mrf.mxu0
      %v2133 = vpop.f32.mrf.mxu0
      %v2134 = vadd.f32 0.0, %v2133
      %v2135 = vpop.f32.mrf.mxu0
      %2136 = vdwg.mxu0
      %v2137 = vadd.f32 %v1855, %v2107
      %v2138 = vadd.f32 %v1856, %v2110
      %v2139 = vadd.f32 %v1857, %v2115
      %v2140 = vadd.f32 %v1858, %v2118
      %v2141 = vadd.f32 %v1859, %v2123
      %v2142 = vadd.f32 %v1860, %v2126
      %v2143 = vadd.f32 %v1861, %v2131
      %v2144 = vadd.f32 %v1862, %v2134
      %v2145 = vpack.c.bf16 %v2138, %v2137
      %v2146 = vpack.c.bf16 %v2140, %v2139
      %v2147 = vpack.c.bf16 %v2142, %v2141
      %v2148 = vpack.c.bf16 %v2144, %v2143
      %v2153 = vunpack.c.l.b16 %v2145
      %v2154 = vunpack.c.h.b16 %v2145
      %v2155 = vunpack.c.l.b16 %v2146
      %v2156 = vunpack.c.h.b16 %v2146
      %v2157 = vunpack.c.l.b16 %v2147
      %v2158 = vunpack.c.h.b16 %v2147
      %v2159 = vunpack.c.l.b16 %v2148
      %v2160 = vunpack.c.h.b16 %v2148
      %v2161 = vpack.c.b16 %v2153, %v2153
      %v2162 = vpack.c.b16 %v2154, %v2154
      %v2163 = vpack.c.b16 %v2155, %v2155
      %v2164 = vpack.c.b16 %v2156, %v2156
      %v2165 = vpack.c.b16 %v2157, %v2157
      %v2166 = vpack.c.b16 %v2158, %v2158
      %v2167 = vpack.c.b16 %v2159, %v2159
      %v2168 = vpack.c.b16 %v2160, %v2160
      %2177 = vst [vmem:[%s269] sm:$0xf] %v2161
      %2178 = vst [vmem:[%s269 + $0x4] sm:$0xf] %v2162
      %2179 = vst [vmem:[%s269 + $0x8] sm:$0xf] %v2163
      %2180 = vst [vmem:[%s269 + $0xc] sm:$0xf] %v2164
      %2181 = vst [vmem:[%s269 + $0x10] sm:$0xf] %v2165
      %2182 = vst [vmem:[%s269 + $0x14] sm:$0xf] %v2166
      %2183 = vst [vmem:[%s269 + $0x18] sm:$0xf] %v2167
      %2184 = vst [vmem:[%s269 + $0x1c] sm:$0xf] %v2168
      %v2185 = vadd.f32 %v2137, %v2138
      %v2186 = vadd.f32 %v2185, %v2139
      %v2187 = vadd.f32 %v2186, %v2140
      %v2188 = vadd.f32 %v2187, %v2141
      %v2189 = vadd.f32 %v2188, %v2142
      %v2190 = vadd.f32 %v2189, %v2143
      %v2191 = vadd.f32 %v2190, %v2144
      %v2192 = vrot.slane %v2191, 4
      %v2193 = vadd.f32 %v2191, %v2192
      %v2194 = vrot.slane %v2193, 2
      %v2195 = vadd.f32 %v2193, %v2194
      %v2196 = vrot.slane %v2195, 1
      %v2197 = vadd.f32 %v2195, %v2196
      %v2198 = vmul.f32 %v2137, %v2137
      %v2199 = vmul.f32 %v2138, %v2138
      %v2200 = vmul.f32 %v2139, %v2139
      %v2201 = vmul.f32 %v2140, %v2140
      %v2202 = vmul.f32 %v2141, %v2141
      %v2203 = vmul.f32 %v2142, %v2142
      %v2204 = vmul.f32 %v2143, %v2143
      %v2205 = vmul.f32 %v2144, %v2144
      %v2206 = vadd.f32 %v2198, %v2199
      %v2207 = vadd.f32 %v2206, %v2200
      %v2208 = vadd.f32 %v2207, %v2201
      %v2209 = vadd.f32 %v2208, %v2202
      %v2210 = vadd.f32 %v2209, %v2203
      %v2211 = vadd.f32 %v2210, %v2204
      %v2212 = vadd.f32 %v2211, %v2205
      %v2213 = vrot.slane %v2212, 4
      %v2214 = vadd.f32 %v2212, %v2213
      %v2215 = vrot.slane %v2214, 2
      %v2216 = vadd.f32 %v2214, %v2215
      %v2217 = vrot.slane %v2216, 1
      %v2218 = vadd.f32 %v2216, %v2217
      %v2219 = vld [vmem:[%s1068] sm:$0xf]
      %v2220 = vld [vmem:[%s1068 + $0x8] sm:$0xf]
      %v2221 = vld [vmem:[%s1068 + $0x10] sm:$0xf]
      %v2222 = vld [vmem:[%s1068 + $0x18] sm:$0xf]
      %v2223 = vld [vmem:[%s1068 + $0x20] sm:$0xf]
      %v2224 = vld [vmem:[%s1068 + $0x28] sm:$0xf]
      %v2225 = vld [vmem:[%s1068 + $0x30] sm:$0xf]
      %v2226 = vld [vmem:[%s1068 + $0x38] sm:$0xf]
      %v2227 = vld [vmem:[%s2] sm:$0xf]
      %v2228 = vld [vmem:[%s2 + $0x4] sm:$0xf]
      %v2229 = vld [vmem:[%s2 + $0x8] sm:$0xf]
      %v2230 = vld [vmem:[%s2 + $0xc] sm:$0xf]
      %v2231 = vld [vmem:[%s2 + $0x10] sm:$0xf]
      %v2232 = vld [vmem:[%s2 + $0x14] sm:$0xf]
      %v2233 = vld [vmem:[%s2 + $0x18] sm:$0xf]
      %v2234 = vld [vmem:[%s2 + $0x1c] sm:$0xf]
      %v2235 = vld [vmem:[%s2 + $0x20] sm:$0xf]
      %v2236 = vld [vmem:[%s2 + $0x24] sm:$0xf]
      %v2237 = vld [vmem:[%s2 + $0x28] sm:$0xf]
      %v2238 = vld [vmem:[%s2 + $0x2c] sm:$0xf]
      %v2239 = vld [vmem:[%s2 + $0x30] sm:$0xf]
      %v2240 = vld [vmem:[%s2 + $0x34] sm:$0xf]
      %v2241 = vld [vmem:[%s2 + $0x38] sm:$0xf]
      %v2242 = vld [vmem:[%s2 + $0x3c] sm:$0xf]
      %v2251 = vunpack.c.l.b16 %v2219
      %v2252 = vunpack.c.l.b16 %v2220
      %v2253 = vunpack.c.l.b16 %v2221
      %v2254 = vunpack.c.l.b16 %v2222
      %v2255 = vunpack.c.l.b16 %v2223
      %v2256 = vunpack.c.l.b16 %v2224
      %v2257 = vunpack.c.l.b16 %v2225
      %v2258 = vunpack.c.l.b16 %v2226
      %v2259 = vpack.c.b16 %v2252, %v2251
      %v2260 = vpack.c.b16 %v2254, %v2253
      %v2261 = vpack.c.b16 %v2256, %v2255
      %v2262 = vpack.c.b16 %v2258, %v2257
      %v2283 = vunpack.c.l.b16 %v2227
      %v2284 = vunpack.c.l.b16 %v2228
      %v2285 = vunpack.c.l.b16 %v2229
      %v2286 = vunpack.c.l.b16 %v2230
      %v2287 = vunpack.c.l.b16 %v2231
      %v2288 = vunpack.c.l.b16 %v2232
      %v2289 = vunpack.c.l.b16 %v2233
      %v2290 = vunpack.c.l.b16 %v2234
      %v2291 = vunpack.c.l.b16 %v2235
      %v2292 = vunpack.c.l.b16 %v2236
      %v2293 = vunpack.c.l.b16 %v2237
      %v2294 = vunpack.c.l.b16 %v2238
      %v2295 = vunpack.c.l.b16 %v2239
      %v2296 = vunpack.c.l.b16 %v2240
      %v2297 = vunpack.c.l.b16 %v2241
      %v2298 = vunpack.c.l.b16 %v2242
      %v2299 = vpack.c.b16 %v2284, %v2283
      %v2300 = vpack.c.b16 %v2286, %v2285
      %v2301 = vpack.c.b16 %v2288, %v2287
      %v2302 = vpack.c.b16 %v2290, %v2289
      %v2303 = vpack.c.b16 %v2292, %v2291
      %v2304 = vpack.c.b16 %v2294, %v2293
      %v2305 = vpack.c.b16 %v2296, %v2295
      %v2306 = vpack.c.b16 %v2298, %v2297
      %2315 = vmatprep.subr.bf16.mxu0 0
      %2316 = vmatpush1.bf16.msra.mxu0 %v2306
      %2317 = vmatprep.subr.bf16.mxu0 0
      %2318 = vmatpush1.bf16.msra.mxu0 %v2305
      %2319 = vmatprep.subr.bf16.mxu0 0
      %2320 = vmatpush1.bf16.msra.mxu0 %v2304
      %2321 = vmatprep.subr.bf16.mxu0 0
      %2322 = vmatpush1.bf16.msra.mxu0 %v2303
      %2323 = vmatprep.subr.bf16.mxu0 0
      %2324 = vmatpush1.bf16.msra.mxu0 %v2302
      %2325 = vmatprep.subr.bf16.mxu0 0
      %2326 = vmatpush1.bf16.msra.mxu0 %v2301
      %2327 = vmatprep.subr.bf16.mxu0 0
      %2328 = vmatpush1.bf16.msra.mxu0 %v2300
      %2329 = vmatprep.subr.bf16.mxu0 0
      %2330 = vmatpush1.bf16.msra.mxu0 %v2299
      %2331 = vmatprep.subr.bf16.mxu0 0
      %2332 = vmatpush2.bf16.msra.mxu0 0
      %2333 = vmatprep.subr.bf16.mxu0 0
      %2334 = vmatpush2.bf16.msra.mxu0 0
      %2335 = vmatprep.subr.bf16.mxu0 0
      %2336 = vmatpush2.bf16.msra.mxu0 0
      %2337 = vmatprep.subr.bf16.mxu0 0
      %2338 = vmatpush2.bf16.msra.mxu0 0
      %2339 = vmatprep.subr.bf16.mxu0 0
      %2340 = vmatpush2.bf16.msra.mxu0 0
      %2341 = vmatprep.subr.bf16.mxu0 0
      %2342 = vmatpush2.bf16.msra.mxu0 0
      %2343 = vmatprep.subr.bf16.mxu0 0
      %2344 = vmatpush2.bf16.msra.mxu0 0
      %2345 = vmatprep.subr.bf16.mxu0 0
      %2346 = vmatpush2.bf16.msra.mxu0 0
      %2347 = vmatprep.mubr.bf16.mxu0 0
      %2348 = vmatmul.mubr.bf16.gmra.mxu0 %v2259
      %v2349 = vpop.f32.mrf.mxu0
      %v2350 = vadd.f32 0.0, %v2349
      %v2351 = vpop.f32.mrf.mxu0
      %v2352 = vpop.f32.mrf.mxu0
      %v2353 = vadd.f32 0.0, %v2352
      %v2354 = vpop.f32.mrf.mxu0
      %2355 = vmatprep.mubr.bf16.mxu0 0
      %2356 = vmatmul.mubr.bf16.gmra.mxu0 %v2260
      %v2357 = vpop.f32.mrf.mxu0
      %v2358 = vadd.f32 0.0, %v2357
      %v2359 = vpop.f32.mrf.mxu0
      %v2360 = vpop.f32.mrf.mxu0
      %v2361 = vadd.f32 0.0, %v2360
      %v2362 = vpop.f32.mrf.mxu0
      %2363 = vmatprep.mubr.bf16.mxu0 0
      %2364 = vmatmul.mubr.bf16.gmra.mxu0 %v2261
      %v2365 = vpop.f32.mrf.mxu0
      %v2366 = vadd.f32 0.0, %v2365
      %v2367 = vpop.f32.mrf.mxu0
      %v2368 = vpop.f32.mrf.mxu0
      %v2369 = vadd.f32 0.0, %v2368
      %v2370 = vpop.f32.mrf.mxu0
      %2371 = vmatprep.mubr.bf16.mxu0 0
      %2372 = vmatmul.mubr.bf16.gmra.mxu0 %v2262
      %v2373 = vpop.f32.mrf.mxu0
      %v2374 = vadd.f32 0.0, %v2373
      %v2375 = vpop.f32.mrf.mxu0
      %v2376 = vpop.f32.mrf.mxu0
      %v2377 = vadd.f32 0.0, %v2376
      %v2378 = vpop.f32.mrf.mxu0
      %2379 = vdwg.mxu0
      %v2380 = vpack.c.bf16 %v2353, %v2350
      %v2381 = vpack.c.bf16 %v2361, %v2358
      %v2382 = vpack.c.bf16 %v2369, %v2366
      %v2383 = vpack.c.bf16 %v2377, %v2374
      %v2388 = vunpack.c.l.b16 %v2380
      %v2389 = vunpack.c.h.b16 %v2380
      %v2390 = vunpack.c.l.b16 %v2381
      %v2391 = vunpack.c.h.b16 %v2381
      %v2392 = vunpack.c.l.b16 %v2382
      %v2393 = vunpack.c.h.b16 %v2382
      %v2394 = vunpack.c.l.b16 %v2383
      %v2395 = vunpack.c.h.b16 %v2383
      %v2396 = vpack.c.b16 %v2388, %v2388
      %v2397 = vpack.c.b16 %v2389, %v2389
      %v2398 = vpack.c.b16 %v2390, %v2390
      %v2399 = vpack.c.b16 %v2391, %v2391
      %v2400 = vpack.c.b16 %v2392, %v2392
      %v2401 = vpack.c.b16 %v2393, %v2393
      %v2402 = vpack.c.b16 %v2394, %v2394
      %v2403 = vpack.c.b16 %v2395, %v2395
      %2412 = vst [vmem:[%s276] sm:$0xf] %v2396
      %2413 = vst [vmem:[%s276 + $0x4] sm:$0xf] %v2397
      %2414 = vst [vmem:[%s276 + $0x8] sm:$0xf] %v2398
      %2415 = vst [vmem:[%s276 + $0xc] sm:$0xf] %v2399
      %2416 = vst [vmem:[%s276 + $0x10] sm:$0xf] %v2400
      %2417 = vst [vmem:[%s276 + $0x14] sm:$0xf] %v2401
      %2418 = vst [vmem:[%s276 + $0x18] sm:$0xf] %v2402
      %2419 = vst [vmem:[%s276 + $0x1c] sm:$0xf] %v2403
      %v2420 = vadd.f32 %v2350, %v2353
      %v2421 = vadd.f32 %v2420, %v2358
      %v2422 = vadd.f32 %v2421, %v2361
      %v2423 = vadd.f32 %v2422, %v2366
      %v2424 = vadd.f32 %v2423, %v2369
      %v2425 = vadd.f32 %v2424, %v2374
      %v2426 = vadd.f32 %v2425, %v2377
      %v2427 = vrot.slane %v2426, 4
      %v2428 = vadd.f32 %v2426, %v2427
      %v2429 = vrot.slane %v2428, 2
      %v2430 = vadd.f32 %v2428, %v2429
      %v2431 = vrot.slane %v2430, 1
      %v2432 = vadd.f32 %v2430, %v2431
      %v2433 = vmul.f32 %v2350, %v2350
      %v2434 = vmul.f32 %v2353, %v2353
      %v2435 = vmul.f32 %v2358, %v2358
      %v2436 = vmul.f32 %v2361, %v2361
      %v2437 = vmul.f32 %v2366, %v2366
      %v2438 = vmul.f32 %v2369, %v2369
      %v2439 = vmul.f32 %v2374, %v2374
      %v2440 = vmul.f32 %v2377, %v2377
      %v2441 = vadd.f32 %v2433, %v2434
      %v2442 = vadd.f32 %v2441, %v2435
      %v2443 = vadd.f32 %v2442, %v2436
      %v2444 = vadd.f32 %v2443, %v2437
      %v2445 = vadd.f32 %v2444, %v2438
      %v2446 = vadd.f32 %v2445, %v2439
      %v2447 = vadd.f32 %v2446, %v2440
      %v2448 = vrot.slane %v2447, 4
      %v2449 = vadd.f32 %v2447, %v2448
      %v2450 = vrot.slane %v2449, 2
      %v2451 = vadd.f32 %v2449, %v2450
      %v2452 = vrot.slane %v2451, 1
      %v2453 = vadd.f32 %v2451, %v2452
      %vm2454 = vcmask 1040384
      %v2455 = vsel %vm2454, %v2197, %v2218
      %vm2456 = vcmask 1041408
      %v2457 = vsel %vm2456, %v2455, %v2432
      %vm2458 = vcmask 1042432
      %v2459 = vsel %vm2458, %v2457, %v2453
      %vm2460 = vcmask 1043456
      %v2461 = vsel %vm2460, %v2459, 0.0
      %v2462 = vld [vmem:[%s281] sm:$0xff]
      %v2463 = vadd.f32 %v2462, %v2461
      %2464 = vst [vmem:[%s281] sm:$0xff] %v2463
      %s2465 = sadd.s32 %s21, %s22
      %p2466 = scmp.lt.s32.totalorder %s2465, 1
      %s2467 = scalar_select %p2466, %s2465, 1
      %s2468 = smul.addr %s2467, 8
      %s2469 = smul.addr %s2468, 4
      %s2470 = scalar_lea.vmem %s3, %s2469
      %s2471 = sadd.s32 %s21, %s22
      %p2472 = scmp.lt.s32.totalorder %s2471, 1
      %s2473 = scalar_select %p2472, %s2471, 1
      %s2474 = smul.addr %s2473, 8
      %s2475 = smul.addr %s2474, 4
      %s2476 = scalar_lea.vmem %s4, %s2475
      %p2477 = scmp.lt.s32.totalorder %s21, 1
      %s2478 = scalar_select %p2477, %s21, 1
      %s2479 = smul.addr %s2478, 8
      %s2480 = scalar_lea.vmem %s5, %s2479
      // Predicated region
      $region37: #{_lambda_.8} parent=31 // pred_check
        %p2481 = pneg %p119
      $region38: #{_lambda_.8} parent=31 // pred_check_branch
        %2483 = sbr.rel (%p2481) target = $region40
      $region39: #{_lambda_.8} parent=31 // pred_region
        %s2484 = sadd.s32 %s21, %s22
      $region40: #{_lambda_.8} parent=31 // pred_fallthru
        _
      // Predicated region
      $region41: #{_lambda_.8} parent=31 // pred_check
        %p2485 = pneg %p147
      $region42: #{_lambda_.8} parent=31 // pred_check_branch
        %2487 = sbr.rel (%p2485) target = $region44
      $region43: #{_lambda_.8} parent=31 // pred_region
        %s2488 = sadd.s32 %s21, %s22
      $region44: #{_lambda_.8} parent=31 // pred_fallthru
        _
      // Predicated region
      $region45: #{_lambda_.8} parent=31 // pred_check
        %p2489 = pneg %p173
      $region46: #{_lambda_.8} parent=31 // pred_check_branch
        %2491 = sbr.rel (%p2489) target = $region48
      $region47: #{_lambda_.8} parent=31 // pred_region
        _
      $region48: #{_lambda_.8} parent=31 // pred_fallthru
        _
    $region32: #{_lambda_.8} parent=5 // pred_fallthru
      _
    %p2492 = scmp.le.s32.totalorder 2, %s12
    // Predicated region
    $region49: #{_lambda_.8} parent=5 // pred_check
      %p2493 = pneg %p2492
    $region50: #{_lambda_.8} parent=5 // pred_check_branch
      %2495 = sbr.rel (%p2493) target = $region52
    $region51: #{_lambda_.8} parent=5 // pred_region
      %s2496 = ssub.s32 %s12, 2
      // Predicated region
      $region53: #{_lambda_.8} parent=51 // pred_check
        %p2497 = pneg %p125
      $region54: #{_lambda_.8} parent=51 // pred_check_branch
        %2499 = sbr.rel (%p2497) target = $region56
      $region55: #{_lambda_.8} parent=51 // pred_region
        %s2500 = sadd.s32 %s23, %s24
        %p2501 = scmp.lt.s32.totalorder %s2500, 1
        %s2502 = scalar_select %p2501, %s2500, 1
        %s2503 = smul.addr %s2502, 8
        %s2504 = smul.addr %s2503, 4
        %s2505 = scalar_lea.vmem %s3, %s2504
      $region56: #{_lambda_.8} parent=51 // pred_fallthru
        _
      // Predicated region
      $region57: #{_lambda_.8} parent=51 // pred_check
        %p2506 = pneg %p153
      $region58: #{_lambda_.8} parent=51 // pred_check_branch
        %2508 = sbr.rel (%p2506) target = $region60
      $region59: #{_lambda_.8} parent=51 // pred_region
        %s2509 = sadd.s32 %s23, %s24
        %p2510 = scmp.lt.s32.totalorder %s2509, 1
        %s2511 = scalar_select %p2510, %s2509, 1
        %s2512 = smul.addr %s2511, 8
        %s2513 = smul.addr %s2512, 4
        %s2514 = scalar_lea.vmem %s4, %s2513
      $region60: #{_lambda_.8} parent=51 // pred_fallthru
        _
      // Predicated region
      $region61: #{_lambda_.8} parent=51 // pred_check
        %p2515 = pneg %p179
      $region62: #{_lambda_.8} parent=51 // pred_check_branch
        %2517 = sbr.rel (%p2515) target = $region64
      $region63: #{_lambda_.8} parent=51 // pred_region
        %p2518 = scmp.lt.s32.totalorder %s23, 1
        %s2519 = scalar_select %p2518, %s23, 1
        %s2520 = smul.addr %s2519, 8
        %s2521 = scalar_lea.vmem %s5, %s2520
      $region64: #{_lambda_.8} parent=51 // pred_fallthru
        _
    $region52: #{_lambda_.8} parent=5 // pred_fallthru
      _
  $region6: #{_lambda_.8} parent=0 // loop_footer
    %s16 = sadd.s32 1, %s12
  $region7: #{_lambda_.8} parent=0 // loop_footer_branch
    %11 = sbr.rel target = $region3
  $region8: #{_lambda_.8} parent=0 // loop_exit
    _

// kernel: _lambda_.10
$region0: #{_lambda_.10}
  #allocation0 [shape = 'u32[]', space=smem, size = 0x4, offset = 0x4, fixed_abs, tag = 'smem constant byte address 0x4 - core index']
  #allocation1 [shape = 'u32[144,128]{1,0:T(1,128)}', space=vmem, size = 0x12000, scoped, tag = 'internal scratch']
  %s0 = inlined_call_operand.vmem [shape: bf16[2,10,10,128], index: 0, kind: input, shape index: {}]
  %s1 = inlined_call_operand.vmem [shape: bf16[9,128,128], index: 1, kind: input, shape index: {}]
  %s2 = inlined_call_operand.vmem [shape: bf16[2,64,128], index: 2, kind: output, shape index: {0}]
  %s3 = inlined_call_operand.vmem [shape: f32[2,8,128], index: 3, kind: output, shape index: {1}]
  %4 = xla_tuple %s2, %s3
  %s5 = sld [smem:[#allocation0]]
  $region53: #{_lambda_.10} parent=0
    _
  %s7 = ssub.s32 1, %s5
  %s8 = scalar_select 0, %s7, %s5
  loop: start=0, step=1, limit=4
  $region2: #{_lambda_.10} parent=0 // loop_pre_header
    _
  $region3: #{_lambda_.10} parent=0 // loop_header
    %s10 = sphi 0, %s14
    %p11 = scmp.ge.s32.totalorder %s10, 4
    %s17 = sphi 0, %s29
    %s18 = sphi 0, %s25
    %s19 = sphi 0, %s17
    %s20 = sphi 0, %s18
    %s21 = sphi 0, %s19
    %s22 = sphi 0, %s20
    %s34 = sphi 0, %s36
    %s37 = sphi 0, %s34
    %s38 = sphi 0, %s37
    %s54 = sphi 0, %s38
    %s58 = sphi 0, %s58
    %s60 = sphi 0, %s58
    %s61 = sphi 0, %s60
    %s75 = sphi 0, %s61
    %s83 = sphi 0, %s85
    %s86 = sphi 0, %s83
    %s87 = sphi 0, %s86
    %s103 = sphi 0, %s87
    %s109 = sphi 0, %s111
    %s112 = sphi 0, %s109
    %s113 = sphi 0, %s112
    %s129 = sphi 0, %s113
  $region4: #{_lambda_.10} parent=0 // loop_header_branch
    %13 = sbr.rel (%p11) target = $region8
  $region5: #{_lambda_.10} parent=0 // loop_body
    %s15 = ssub.s32 %s10, 1
    %s16 = ssub.s32 %s10, 2
    %s23 = sadd.s32 1, %s18
    %p24 = scmp.ge.s32.totalorder %s23, 1
    %s25 = scalar_select %p24, 0, %s23
    %s26 = sadd.s32 1, %s17
    %s27 = scalar_select %p24, %s26, %s17
    %p28 = scmp.ge.s32.totalorder %s27, 2
    %s29 = scalar_select %p28, 0, %s27
    %s30 = sadd.s32 %s17, %s18
    %s31 = sadd.s32 %s29, %s25
    %s32 = ssub.s32 %s30, %s31
    %p33 = scmp.eq.s32.totalorder %s32, 0
    %s35 = sadd.s32 %s34, 1
    %s36 = scalar_select %p33, %s34, %s35
    %p39 = pneg %p33
    %p40 = scmp.eq.s32.totalorder %s10, 1
    %p41 = por %p39, %p40
    %p42 = scmp.ne.s32.totalorder %s34, %s37
    %p43 = scmp.eq.s32.totalorder %s10, 0
    %p44 = por %p42, %p43
    %p45 = scmp.ne.s32.totalorder %s34, %s37
    %p46 = scmp.eq.s32.totalorder %s15, 1
    %p47 = por %p45, %p46
    %p48 = scmp.ne.s32.totalorder %s37, %s38
    %p49 = scmp.eq.s32.totalorder %s15, 0
    %p50 = por %p48, %p49
    %p51 = scmp.ne.s32.totalorder %s37, %s38
    %p52 = scmp.eq.s32.totalorder %s16, 1
    %p53 = por %p51, %p52
    %p55 = scmp.ne.s32.totalorder %s38, %s54
    %p56 = scmp.eq.s32.totalorder %s16, 0
    %p57 = por %p55, %p56
    %s59 = sadd.s32 %s58, 1
    %p62 = scmp.eq.s32.totalorder %s10, 1
    %p63 = scmp.ne.s32.totalorder %s58, %s60
    %p64 = scmp.eq.s32.totalorder %s10, 0
    %p65 = por %p63, %p64
    %p66 = scmp.ne.s32.totalorder %s58, %s60
    %p67 = scmp.eq.s32.totalorder %s15, 1
    %p68 = por %p66, %p67
    %p69 = scmp.ne.s32.totalorder %s60, %s61
    %p70 = scmp.eq.s32.totalorder %s15, 0
    %p71 = por %p69, %p70
    %p72 = scmp.ne.s32.totalorder %s60, %s61
    %p73 = scmp.eq.s32.totalorder %s16, 1
    %p74 = por %p72, %p73
    %p76 = scmp.ne.s32.totalorder %s61, %s75
    %p77 = scmp.eq.s32.totalorder %s16, 0
    %p78 = por %p76, %p77
    %s79 = sadd.s32 %s17, %s18
    %s80 = sadd.s32 %s29, %s25
    %s81 = ssub.s32 %s79, %s80
    %p82 = scmp.eq.s32.totalorder %s81, 0
    %s84 = sadd.s32 %s83, 1
    %s85 = scalar_select %p82, %s83, %s84
    %p88 = pneg %p82
    %p89 = scmp.eq.s32.totalorder %s10, 1
    %p90 = por %p88, %p89
    %p91 = scmp.ne.s32.totalorder %s83, %s86
    %p92 = scmp.eq.s32.totalorder %s10, 0
    %p93 = por %p91, %p92
    %p94 = scmp.ne.s32.totalorder %s83, %s86
    %p95 = scmp.eq.s32.totalorder %s15, 1
    %p96 = por %p94, %p95
    %p97 = scmp.ne.s32.totalorder %s86, %s87
    %p98 = scmp.eq.s32.totalorder %s15, 0
    %p99 = por %p97, %p98
    %p100 = scmp.ne.s32.totalorder %s86, %s87
    %p101 = scmp.eq.s32.totalorder %s16, 1
    %p102 = por %p100, %p101
    %p104 = scmp.ne.s32.totalorder %s87, %s103
    %p105 = scmp.eq.s32.totalorder %s16, 0
    %p106 = por %p104, %p105
    %s107 = ssub.s32 %s17, %s29
    %p108 = scmp.eq.s32.totalorder %s107, 0
    %s110 = sadd.s32 %s109, 1
    %s111 = scalar_select %p108, %s109, %s110
    %p114 = pneg %p108
    %p115 = scmp.eq.s32.totalorder %s10, 1
    %p116 = por %p114, %p115
    %p117 = scmp.ne.s32.totalorder %s109, %s112
    %p118 = scmp.eq.s32.totalorder %s10, 0
    %p119 = por %p117, %p118
    %p120 = scmp.ne.s32.totalorder %s109, %s112
    %p121 = scmp.eq.s32.totalorder %s15, 1
    %p122 = por %p120, %p121
    %p123 = scmp.ne.s32.totalorder %s112, %s113
    %p124 = scmp.eq.s32.totalorder %s15, 0
    %p125 = por %p123, %p124
    %p126 = scmp.ne.s32.totalorder %s112, %s113
    %p127 = scmp.eq.s32.totalorder %s16, 1
    %p128 = por %p126, %p127
    %p130 = scmp.ne.s32.totalorder %s113, %s129
    %p131 = scmp.eq.s32.totalorder %s16, 0
    %p132 = por %p130, %p131
    %p133 = scmp.le.s32.totalorder 1, %s10
    %p134 = scmp.lt.s32.totalorder %s10, 3
    %p135 = pnand %p133, %p134
    %p136 = pneg %p135
    // Predicated region
    $region9: #{_lambda_.10} parent=5 // pred_check
      _
    $region10: #{_lambda_.10} parent=5 // pred_check_branch
      %138 = sbr.rel (%p135) target = $region12
    $region11: #{_lambda_.10} parent=5 // pred_region
      %s139 = ssub.s32 %s10, 1
      // Predicated region
      $region13: #{_lambda_.10} parent=11 // pred_check
        %p140 = pneg %p71
      $region14: #{_lambda_.10} parent=11 // pred_check_branch
        %142 = sbr.rel (%p140) target = $region16
      $region15: #{_lambda_.10} parent=11 // pred_region
        _
      $region16: #{_lambda_.10} parent=11 // pred_fallthru
        _
    $region12: #{_lambda_.10} parent=5 // pred_fallthru
      _
    %p143 = scmp.lt.s32.totalorder %s10, 2
    // Predicated region
    $region17: #{_lambda_.10} parent=5 // pred_check
      %p144 = pneg %p143
    $region18: #{_lambda_.10} parent=5 // pred_check_branch
      %146 = sbr.rel (%p144) target = $region20
    $region19: #{_lambda_.10} parent=5 // pred_region
      // Predicated region
      $region21: #{_lambda_.10} parent=19 // pred_check
        %p147 = pneg %p44
      $region22: #{_lambda_.10} parent=19 // pred_check_branch
        %149 = sbr.rel (%p147) target = $region24
      $region23: #{_lambda_.10} parent=19 // pred_region
        %s150 = sadd.s32 %s17, %s18
        %p151 = scmp.lt.s32.totalorder %s150, 1
        %s152 = scalar_select %p151, %s150, 1
        %s153 = smul.addr %s152, 20
        %s154 = smul.addr %s153, 4
        %s155 = scalar_lea.vmem %s0, %s154
        %s156 = sadd.s32 %s17, %s18
      $region24: #{_lambda_.10} parent=19 // pred_fallthru
        _
    $region20: #{_lambda_.10} parent=5 // pred_fallthru
      _
    %p157 = scmp.le.s32.totalorder 1, %s10
    %p158 = scmp.lt.s32.totalorder %s10, 3
    %p159 = pnand %p157, %p158
    %p160 = pneg %p159
    // Predicated region
    $region25: #{_lambda_.10} parent=5 // pred_check
      _
    $region26: #{_lambda_.10} parent=5 // pred_check_branch
      %162 = sbr.rel (%p159) target = $region28
    $region27: #{_lambda_.10} parent=5 // pred_region
      %s163 = ssub.s32 %s10, 1
      %s164 = sadd.s32 %s19, %s20
      %p165 = scmp.lt.s32.totalorder %s164, 1
      %s166 = scalar_select %p165, %s164, 1
      %s167 = smul.addr %s166, 20
      %s168 = smul.addr %s167, 4
      %s169 = scalar_lea.vmem %s0, %s168
      %p170 = pneg %p50
      %p171 = pneg %p47
      %p172 = pneg %p71
      %p173 = pneg %p68
      %p174 = pneg %p99
      %p175 = pneg %p96
      %s176 = sadd.s32 %s19, %s20
      %p177 = scmp.lt.s32.totalorder %s176, 1
      %s178 = scalar_select %p177, %s176, 1
      %s179 = smul.addr %s178, 8
      %s180 = smul.addr %s179, 4
      %s181 = scalar_lea.vmem %s2, %s180
      %p182 = pneg %p125
      %p183 = pneg %p122
      %p184 = scmp.lt.s32.totalorder %s19, 1
      %s185 = scalar_select %p184, %s19, 1
      %s186 = smul.addr %s185, 8
      %s187 = scalar_lea.vmem %s3, %s186
      %s188 = sadd.s32 %s19, %s20
      %p189 = scmp.lt.s32.totalorder %s188, 1
      %s190 = scalar_select %p189, %s188, 1
      %s191 = smul.addr %s190, 20
      %s192 = smul.addr %s191, 4
      %s193 = scalar_lea.vmem %s0, %s192
      %s194 = sadd.s32 %s19, %s20
      %s195 = sadd.s32 %s19, %s20
      %p196 = scmp.lt.s32.totalorder %s195, 1
      %s197 = scalar_select %p196, %s195, 1
      %s198 = smul.addr %s197, 8
      %s199 = smul.addr %s198, 4
      %s200 = scalar_lea.vmem %s2, %s199
      %s201 = sadd.s32 %s19, %s20
      %p202 = scmp.lt.s32.totalorder %s19, 1
      %s203 = scalar_select %p202, %s19, 1
      %s204 = smul.addr %s203, 8
      %s205 = scalar_lea.vmem %s3, %s204
      %p207 = scmp.eq.s32.totalorder %s20, 0
      // Predicated region
      $region29: #{_lambda_.10} parent=27 // pred_check
        %p208 = pneg %p207
      $region30: #{_lambda_.10} parent=27 // pred_check_branch
        %210 = sbr.rel (%p208) target = $region32
      $region31: #{_lambda_.10} parent=27 // pred_region
        %211 = vst [vmem:[%s205] sm:$0xff] 0.0
      $region32: #{_lambda_.10} parent=27 // pred_fallthru
        _
      %v212 = vld [vmem:[%s193] sm:$0xf]
      %v213 = vld [vmem:[%s193 + $0x8] sm:$0xf]
      %v214 = vld [vmem:[%s193 + $0x10] sm:$0xf]
      %v215 = vld [vmem:[%s193 + $0x18] sm:$0xf]
      %v216 = vld [vmem:[%s193 + $0x20] sm:$0xf]
      %v217 = vld [vmem:[%s193 + $0x28] sm:$0xf]
      %v218 = vld [vmem:[%s193 + $0x30] sm:$0xf]
      %v219 = vld [vmem:[%s193 + $0x38] sm:$0xf]
      %v220 = vld [vmem:[%s1] sm:$0xf]
      %v221 = vld [vmem:[%s1 + $0x4] sm:$0xf]
      %v222 = vld [vmem:[%s1 + $0x8] sm:$0xf]
      %v223 = vld [vmem:[%s1 + $0xc] sm:$0xf]
      %v224 = vld [vmem:[%s1 + $0x10] sm:$0xf]
      %v225 = vld [vmem:[%s1 + $0x14] sm:$0xf]
      %v226 = vld [vmem:[%s1 + $0x18] sm:$0xf]
      %v227 = vld [vmem:[%s1 + $0x1c] sm:$0xf]
      %v228 = vld [vmem:[%s1 + $0x20] sm:$0xf]
      %v229 = vld [vmem:[%s1 + $0x24] sm:$0xf]
      %v230 = vld [vmem:[%s1 + $0x28] sm:$0xf]
      %v231 = vld [vmem:[%s1 + $0x2c] sm:$0xf]
      %v232 = vld [vmem:[%s1 + $0x30] sm:$0xf]
      %v233 = vld [vmem:[%s1 + $0x34] sm:$0xf]
      %v234 = vld [vmem:[%s1 + $0x38] sm:$0xf]
      %v235 = vld [vmem:[%s1 + $0x3c] sm:$0xf]
      %v236 = vld [vmem:[%s193 + $0x4] sm:$0x1]
      %v237 = vld [vmem:[%s193 + $0xc] sm:$0x1]
      %v238 = vld [vmem:[%s193 + $0x14] sm:$0x1]
      %v239 = vld [vmem:[%s193 + $0x1c] sm:$0x1]
      %v240 = vld [vmem:[%s193 + $0x24] sm:$0x1]
      %v241 = vld [vmem:[%s193 + $0x2c] sm:$0x1]
      %v242 = vld [vmem:[%s193 + $0x34] sm:$0x1]
      %v243 = vld [vmem:[%s193 + $0x3c] sm:$0x1]
      %vm244 = vsmask.f32 3328
      %vm245 = vsmask.f32 7440
      %vm246 = vmor %vm244, %vm245
      %v248 = vshrl.u32 %v212, 16
      %v250 = vrot.slane %v248, 4
      %v251 = vshll.u32 %v212, 16
      %v253 = vrot.slane %v251, 5
      %v254 = vor.u32 %v250, %v253
      %v255 = vrot.slane %v254, 4
      %v257 = vshll.u32 %v236, 16
      %v259 = vrot.slane %v257, 5
      %v260 = vsel %vm246, %v255, %v259
      %v262 = vshrl.u32 %v213, 16
      %v264 = vrot.slane %v262, 4
      %v265 = vshll.u32 %v213, 16
      %v267 = vrot.slane %v265, 5
      %v268 = vor.u32 %v264, %v267
      %v269 = vrot.slane %v268, 4
      %v271 = vshll.u32 %v237, 16
      %v273 = vrot.slane %v271, 5
      %v274 = vsel %vm246, %v269, %v273
      %v276 = vshrl.u32 %v214, 16
      %v278 = vrot.slane %v276, 4
      %v279 = vshll.u32 %v214, 16
      %v281 = vrot.slane %v279, 5
      %v282 = vor.u32 %v278, %v281
      %v283 = vrot.slane %v282, 4
      %v285 = vshll.u32 %v238, 16
      %v287 = vrot.slane %v285, 5
      %v288 = vsel %vm246, %v283, %v287
      %v290 = vshrl.u32 %v215, 16
      %v292 = vrot.slane %v290, 4
      %v293 = vshll.u32 %v215, 16
      %v295 = vrot.slane %v293, 5
      %v296 = vor.u32 %v292, %v295
      %v297 = vrot.slane %v296, 4
      %v299 = vshll.u32 %v239, 16
      %v301 = vrot.slane %v299, 5
      %v302 = vsel %vm246, %v297, %v301
      %v304 = vshrl.u32 %v216, 16
      %v306 = vrot.slane %v304, 4
      %v307 = vshll.u32 %v216, 16
      %v309 = vrot.slane %v307, 5
      %v310 = vor.u32 %v306, %v309
      %v311 = vrot.slane %v310, 4
      %v313 = vshll.u32 %v240, 16
      %v315 = vrot.slane %v313, 5
      %v316 = vsel %vm246, %v311, %v315
      %v318 = vshrl.u32 %v217, 16
      %v320 = vrot.slane %v318, 4
      %v321 = vshll.u32 %v217, 16
      %v323 = vrot.slane %v321, 5
      %v324 = vor.u32 %v320, %v323
      %v325 = vrot.slane %v324, 4
      %v327 = vshll.u32 %v241, 16
      %v329 = vrot.slane %v327, 5
      %v330 = vsel %vm246, %v325, %v329
      %v332 = vshrl.u32 %v218, 16
      %v334 = vrot.slane %v332, 4
      %v335 = vshll.u32 %v218, 16
      %v337 = vrot.slane %v335, 5
      %v338 = vor.u32 %v334, %v337
      %v339 = vrot.slane %v338, 4
      %v341 = vshll.u32 %v242, 16
      %v343 = vrot.slane %v341, 5
      %v344 = vsel %vm246, %v339, %v343
      %v346 = vshrl.u32 %v219, 16
      %v348 = vrot.slane %v346, 4
      %v349 = vshll.u32 %v219, 16
      %v351 = vrot.slane %v349, 5
      %v352 = vor.u32 %v348, %v351
      %v353 = vrot.slane %v352, 4
      %v355 = vshll.u32 %v243, 16
      %v357 = vrot.slane %v355, 5
      %v358 = vsel %vm246, %v353, %v357
      %s359 = scalar_lea.vmem %s1, 64
      %v360 = vld [vmem:[%s359] sm:$0xf]
      %v361 = vld [vmem:[%s359 + $0x4] sm:$0xf]
      %v362 = vld [vmem:[%s359 + $0x8] sm:$0xf]
      %v363 = vld [vmem:[%s359 + $0xc] sm:$0xf]
      %v364 = vld [vmem:[%s359 + $0x10] sm:$0xf]
      %v365 = vld [vmem:[%s359 + $0x14] sm:$0xf]
      %v366 = vld [vmem:[%s359 + $0x18] sm:$0xf]
      %v367 = vld [vmem:[%s359 + $0x1c] sm:$0xf]
      %v368 = vld [vmem:[%s359 + $0x20] sm:$0xf]
      %v369 = vld [vmem:[%s359 + $0x24] sm:$0xf]
      %v370 = vld [vmem:[%s359 + $0x28] sm:$0xf]
      %v371 = vld [vmem:[%s359 + $0x2c] sm:$0xf]
      %v372 = vld [vmem:[%s359 + $0x30] sm:$0xf]
      %v373 = vld [vmem:[%s359 + $0x34] sm:$0xf]
      %v374 = vld [vmem:[%s359 + $0x38] sm:$0xf]
      %v375 = vld [vmem:[%s359 + $0x3c] sm:$0xf]
      %v376 = vunpack.c.l.b16 %v260
      %v377 = vunpack.c.l.b16 %v274
      %v378 = vunpack.c.l.b16 %v288
      %v379 = vunpack.c.l.b16 %v302
      %v380 = vunpack.c.l.b16 %v316
      %v381 = vunpack.c.l.b16 %v330
      %v382 = vunpack.c.l.b16 %v344
      %v383 = vunpack.c.l.b16 %v358
      %v384 = vpack.c.b16 %v377, %v376
      %v385 = vpack.c.b16 %v379, %v378
      %v386 = vpack.c.b16 %v381, %v380
      %v387 = vpack.c.b16 %v383, %v382
      %v408 = vunpack.c.l.b16 %v360
      %v409 = vunpack.c.l.b16 %v361
      %v410 = vunpack.c.l.b16 %v362
      %v411 = vunpack.c.l.b16 %v363
      %v412 = vunpack.c.l.b16 %v364
      %v413 = vunpack.c.l.b16 %v365
      %v414 = vunpack.c.l.b16 %v366
      %v415 = vunpack.c.l.b16 %v367
      %v416 = vunpack.c.l.b16 %v368
      %v417 = vunpack.c.l.b16 %v369
      %v418 = vunpack.c.l.b16 %v370
      %v419 = vunpack.c.l.b16 %v371
      %v420 = vunpack.c.l.b16 %v372
      %v421 = vunpack.c.l.b16 %v373
      %v422 = vunpack.c.l.b16 %v374
      %v423 = vunpack.c.l.b16 %v375
      %v424 = vpack.c.b16 %v409, %v408
      %v425 = vpack.c.b16 %v411, %v410
      %v426 = vpack.c.b16 %v413, %v412
      %v427 = vpack.c.b16 %v415, %v414
      %v428 = vpack.c.b16 %v417, %v416
      %v429 = vpack.c.b16 %v419, %v418
      %v430 = vpack.c.b16 %v421, %v420
      %v431 = vpack.c.b16 %v423, %v422
      %440 = vmatprep.subr.bf16.mxu0 0
      %441 = vmatpush1.bf16.msra.mxu0 %v431
      %442 = vmatprep.subr.bf16.mxu0 0
      %443 = vmatpush1.bf16.msra.mxu0 %v430
      %444 = vmatprep.subr.bf16.mxu0 0
      %445 = vmatpush1.bf16.msra.mxu0 %v429
      %446 = vmatprep.subr.bf16.mxu0 0
      %447 = vmatpush1.bf16.msra.mxu0 %v428
      %448 = vmatprep.subr.bf16.mxu0 0
      %449 = vmatpush1.bf16.msra.mxu0 %v427
      %450 = vmatprep.subr.bf16.mxu0 0
      %451 = vmatpush1.bf16.msra.mxu0 %v426
      %452 = vmatprep.subr.bf16.mxu0 0
      %453 = vmatpush1.bf16.msra.mxu0 %v425
      %454 = vmatprep.subr.bf16.mxu0 0
      %455 = vmatpush1.bf16.msra.mxu0 %v424
      %456 = vmatprep.subr.bf16.mxu0 0
      %457 = vmatpush2.bf16.msra.mxu0 0
      %458 = vmatprep.subr.bf16.mxu0 0
      %459 = vmatpush2.bf16.msra.mxu0 0
      %460 = vmatprep.subr.bf16.mxu0 0
      %461 = vmatpush2.bf16.msra.mxu0 0
      %462 = vmatprep.subr.bf16.mxu0 0
      %463 = vmatpush2.bf16.msra.mxu0 0
      %464 = vmatprep.subr.bf16.mxu0 0
      %465 = vmatpush2.bf16.msra.mxu0 0
      %466 = vmatprep.subr.bf16.mxu0 0
      %467 = vmatpush2.bf16.msra.mxu0 0
      %468 = vmatprep.subr.bf16.mxu0 0
      %469 = vmatpush2.bf16.msra.mxu0 0
      %470 = vmatprep.subr.bf16.mxu0 0
      %471 = vmatpush2.bf16.msra.mxu0 0
      %472 = vmatprep.mubr.bf16.mxu0 0
      %473 = vmatmul.mubr.bf16.gmra.mxu0 %v384
      %v474 = vpop.f32.mrf.mxu0
      %v475 = vadd.f32 0.0, %v474
      %v476 = vpop.f32.mrf.mxu0
      %v477 = vpop.f32.mrf.mxu0
      %v478 = vadd.f32 0.0, %v477
      %v479 = vpop.f32.mrf.mxu0
      %480 = vmatprep.mubr.bf16.mxu0 0
      %481 = vmatmul.mubr.bf16.gmra.mxu0 %v385
      %v482 = vpop.f32.mrf.mxu0
      %v483 = vadd.f32 0.0, %v482
      %v484 = vpop.f32.mrf.mxu0
      %v485 = vpop.f32.mrf.mxu0
      %v486 = vadd.f32 0.0, %v485
      %v487 = vpop.f32.mrf.mxu0
      %488 = vmatprep.mubr.bf16.mxu0 0
      %489 = vmatmul.mubr.bf16.gmra.mxu0 %v386
      %v490 = vpop.f32.mrf.mxu0
      %v491 = vadd.f32 0.0, %v490
      %v492 = vpop.f32.mrf.mxu0
      %v493 = vpop.f32.mrf.mxu0
      %v494 = vadd.f32 0.0, %v493
      %v495 = vpop.f32.mrf.mxu0
      %496 = vmatprep.mubr.bf16.mxu0 0
      %497 = vmatmul.mubr.bf16.gmra.mxu0 %v387
      %v498 = vpop.f32.mrf.mxu0
      %v499 = vadd.f32 0.0, %v498
      %v500 = vpop.f32.mrf.mxu0
      %v501 = vpop.f32.mrf.mxu0
      %v502 = vadd.f32 0.0, %v501
      %v503 = vpop.f32.mrf.mxu0
      %504 = vdwg.mxu0
      %v513 = vunpack.c.l.b16 %v212
      %v514 = vunpack.c.l.b16 %v213
      %v515 = vunpack.c.l.b16 %v214
      %v516 = vunpack.c.l.b16 %v215
      %v517 = vunpack.c.l.b16 %v216
      %v518 = vunpack.c.l.b16 %v217
      %v519 = vunpack.c.l.b16 %v218
      %v520 = vunpack.c.l.b16 %v219
      %v521 = vpack.c.b16 %v514, %v513
      %v522 = vpack.c.b16 %v516, %v515
      %v523 = vpack.c.b16 %v518, %v517
      %v524 = vpack.c.b16 %v520, %v519
      %v545 = vunpack.c.l.b16 %v220
      %v546 = vunpack.c.l.b16 %v221
      %v547 = vunpack.c.l.b16 %v222
      %v548 = vunpack.c.l.b16 %v223
      %v549 = vunpack.c.l.b16 %v224
      %v550 = vunpack.c.l.b16 %v225
      %v551 = vunpack.c.l.b16 %v226
      %v552 = vunpack.c.l.b16 %v227
      %v553 = vunpack.c.l.b16 %v228
      %v554 = vunpack.c.l.b16 %v229
      %v555 = vunpack.c.l.b16 %v230
      %v556 = vunpack.c.l.b16 %v231
      %v557 = vunpack.c.l.b16 %v232
      %v558 = vunpack.c.l.b16 %v233
      %v559 = vunpack.c.l.b16 %v234
      %v560 = vunpack.c.l.b16 %v235
      %v561 = vpack.c.b16 %v546, %v545
      %v562 = vpack.c.b16 %v548, %v547
      %v563 = vpack.c.b16 %v550, %v549
      %v564 = vpack.c.b16 %v552, %v551
      %v565 = vpack.c.b16 %v554, %v553
      %v566 = vpack.c.b16 %v556, %v555
      %v567 = vpack.c.b16 %v558, %v557
      %v568 = vpack.c.b16 %v560, %v559
      %577 = vmatprep.subr.bf16.mxu0 0
      %578 = vmatpush1.bf16.msra.mxu0 %v568
      %579 = vmatprep.subr.bf16.mxu0 0
      %580 = vmatpush1.bf16.msra.mxu0 %v567
      %581 = vmatprep.subr.bf16.mxu0 0
      %582 = vmatpush1.bf16.msra.mxu0 %v566
      %583 = vmatprep.subr.bf16.mxu0 0
      %584 = vmatpush1.bf16.msra.mxu0 %v565
      %585 = vmatprep.subr.bf16.mxu0 0
      %586 = vmatpush1.bf16.msra.mxu0 %v564
      %587 = vmatprep.subr.bf16.mxu0 0
      %588 = vmatpush1.bf16.msra.mxu0 %v563
      %589 = vmatprep.subr.bf16.mxu0 0
      %590 = vmatpush1.bf16.msra.mxu0 %v562
      %591 = vmatprep.subr.bf16.mxu0 0
      %592 = vmatpush1.bf16.msra.mxu0 %v561
      %593 = vmatprep.subr.bf16.mxu0 0
      %594 = vmatpush2.bf16.msra.mxu0 0
      %595 = vmatprep.subr.bf16.mxu0 0
      %596 = vmatpush2.bf16.msra.mxu0 0
      %597 = vmatprep.subr.bf16.mxu0 0
      %598 = vmatpush2.bf16.msra.mxu0 0
      %599 = vmatprep.subr.bf16.mxu0 0
      %600 = vmatpush2.bf16.msra.mxu0 0
      %601 = vmatprep.subr.bf16.mxu0 0
      %602 = vmatpush2.bf16.msra.mxu0 0
      %603 = vmatprep.subr.bf16.mxu0 0
      %604 = vmatpush2.bf16.msra.mxu0 0
      %605 = vmatprep.subr.bf16.mxu0 0
      %606 = vmatpush2.bf16.msra.mxu0 0
      %607 = vmatprep.subr.bf16.mxu0 0
      %608 = vmatpush2.bf16.msra.mxu0 0
      %609 = vmatprep.mubr.bf16.mxu0 0
      %610 = vmatmul.mubr.bf16.gmra.mxu0 %v521
      %v611 = vpop.f32.mrf.mxu0
      %v612 = vadd.f32 %v475, %v611
      %v613 = vpop.f32.mrf.mxu0
      %v614 = vpop.f32.mrf.mxu0
      %v615 = vadd.f32 %v478, %v614
      %v616 = vpop.f32.mrf.mxu0
      %617 = vmatprep.mubr.bf16.mxu0 0
      %618 = vmatmul.mubr.bf16.gmra.mxu0 %v522
      %v619 = vpop.f32.mrf.mxu0
      %v620 = vadd.f32 %v483, %v619
      %v621 = vpop.f32.mrf.mxu0
      %v622 = vpop.f32.mrf.mxu0
      %v623 = vadd.f32 %v486, %v622
      %v624 = vpop.f32.mrf.mxu0
      %625 = vmatprep.mubr.bf16.mxu0 0
      %626 = vmatmul.mubr.bf16.gmra.mxu0 %v523
      %v627 = vpop.f32.mrf.mxu0
      %v628 = vadd.f32 %v491, %v627
      %v629 = vpop.f32.mrf.mxu0
      %v630 = vpop.f32.mrf.mxu0
      %v631 = vadd.f32 %v494, %v630
      %v632 = vpop.f32.mrf.mxu0
      %633 = vmatprep.mubr.bf16.mxu0 0
      %634 = vmatmul.mubr.bf16.gmra.mxu0 %v524
      %v635 = vpop.f32.mrf.mxu0
      %v636 = vadd.f32 %v499, %v635
      %v637 = vpop.f32.mrf.mxu0
      %v638 = vpop.f32.mrf.mxu0
      %v639 = vadd.f32 %v502, %v638
      %v640 = vpop.f32.mrf.mxu0
      %641 = vdwg.mxu0
      %v642 = vld [vmem:[%s193] sm:$0xe]
      %v643 = vld [vmem:[%s193 + $0x8] sm:$0xe]
      %v644 = vld [vmem:[%s193 + $0x10] sm:$0xe]
      %v645 = vld [vmem:[%s193 + $0x18] sm:$0xe]
      %v646 = vld [vmem:[%s193 + $0x20] sm:$0xe]
      %v647 = vld [vmem:[%s193 + $0x28] sm:$0xe]
      %v648 = vld [vmem:[%s193 + $0x30] sm:$0xe]
      %v649 = vld [vmem:[%s193 + $0x38] sm:$0xe]
      %vm666 = vcmask 1042432
      %vm667 = vcmask 1046532
      %vm668 = vmor %vm666, %vm667
      %v669 = vrot.slane %v642, 5
      %v670 = vrot.slane %v669, 4
      %v671 = vrot.slane %v236, 5
      %v672 = vsel %vm668, %v670, %v671
      %v673 = vrot.slane %v643, 5
      %v674 = vrot.slane %v673, 4
      %v675 = vrot.slane %v237, 5
      %v676 = vsel %vm668, %v674, %v675
      %v677 = vrot.slane %v644, 5
      %v678 = vrot.slane %v677, 4
      %v679 = vrot.slane %v238, 5
      %v680 = vsel %vm668, %v678, %v679
      %v681 = vrot.slane %v645, 5
      %v682 = vrot.slane %v681, 4
      %v683 = vrot.slane %v239, 5
      %v684 = vsel %vm668, %v682, %v683
      %v685 = vrot.slane %v646, 5
      %v686 = vrot.slane %v685, 4
      %v687 = vrot.slane %v240, 5
      %v688 = vsel %vm668, %v686, %v687
      %v689 = vrot.slane %v647, 5
      %v690 = vrot.slane %v689, 4
      %v691 = vrot.slane %v241, 5
      %v692 = vsel %vm668, %v690, %v691
      %v693 = vrot.slane %v648, 5
      %v694 = vrot.slane %v693, 4
      %v695 = vrot.slane %v242, 5
      %v696 = vsel %vm668, %v694, %v695
      %v697 = vrot.slane %v649, 5
      %v698 = vrot.slane %v697, 4
      %v699 = vrot.slane %v243, 5
      %v700 = vsel %vm668, %v698, %v699
      %s701 = scalar_lea.vmem %s1, 128
      %v702 = vld [vmem:[%s701] sm:$0xf]
      %v703 = vld [vmem:[%s701 + $0x4] sm:$0xf]
      %v704 = vld [vmem:[%s701 + $0x8] sm:$0xf]
      %v705 = vld [vmem:[%s701 + $0xc] sm:$0xf]
      %v706 = vld [vmem:[%s701 + $0x10] sm:$0xf]
      %v707 = vld [vmem:[%s701 + $0x14] sm:$0xf]
      %v708 = vld [vmem:[%s701 + $0x18] sm:$0xf]
      %v709 = vld [vmem:[%s701 + $0x1c] sm:$0xf]
      %v710 = vld [vmem:[%s701 + $0x20] sm:$0xf]
      %v711 = vld [vmem:[%s701 + $0x24] sm:$0xf]
      %v712 = vld [vmem:[%s701 + $0x28] sm:$0xf]
      %v713 = vld [vmem:[%s701 + $0x2c] sm:$0xf]
      %v714 = vld [vmem:[%s701 + $0x30] sm:$0xf]
      %v715 = vld [vmem:[%s701 + $0x34] sm:$0xf]
      %v716 = vld [vmem:[%s701 + $0x38] sm:$0xf]
      %v717 = vld [vmem:[%s701 + $0x3c] sm:$0xf]
      %v718 = vunpack.c.l.b16 %v672
      %v719 = vunpack.c.l.b16 %v676
      %v720 = vunpack.c.l.b16 %v680
      %v721 = vunpack.c.l.b16 %v684
      %v722 = vunpack.c.l.b16 %v688
      %v723 = vunpack.c.l.b16 %v692
      %v724 = vunpack.c.l.b16 %v696
      %v725 = vunpack.c.l.b16 %v700
      %v726 = vpack.c.b16 %v719, %v718
      %v727 = vpack.c.b16 %v721, %v720
      %v728 = vpack.c.b16 %v723, %v722
      %v729 = vpack.c.b16 %v725, %v724
      %v750 = vunpack.c.l.b16 %v702
      %v751 = vunpack.c.l.b16 %v703
      %v752 = vunpack.c.l.b16 %v704
      %v753 = vunpack.c.l.b16 %v705
      %v754 = vunpack.c.l.b16 %v706
      %v755 = vunpack.c.l.b16 %v707
      %v756 = vunpack.c.l.b16 %v708
      %v757 = vunpack.c.l.b16 %v709
      %v758 = vunpack.c.l.b16 %v710
      %v759 = vunpack.c.l.b16 %v711
      %v760 = vunpack.c.l.b16 %v712
      %v761 = vunpack.c.l.b16 %v713
      %v762 = vunpack.c.l.b16 %v714
      %v763 = vunpack.c.l.b16 %v715
      %v764 = vunpack.c.l.b16 %v716
      %v765 = vunpack.c.l.b16 %v717
      %v766 = vpack.c.b16 %v751, %v750
      %v767 = vpack.c.b16 %v753, %v752
      %v768 = vpack.c.b16 %v755, %v754
      %v769 = vpack.c.b16 %v757, %v756
      %v770 = vpack.c.b16 %v759, %v758
      %v771 = vpack.c.b16 %v761, %v760
      %v772 = vpack.c.b16 %v763, %v762
      %v773 = vpack.c.b16 %v765, %v764
      %782 = vmatprep.subr.bf16.mxu0 0
      %783 = vmatpush1.bf16.msra.mxu0 %v773
      %784 = vmatprep.subr.bf16.mxu0 0
      %785 = vmatpush1.bf16.msra.mxu0 %v772
      %786 = vmatprep.subr.bf16.mxu0 0
      %787 = vmatpush1.bf16.msra.mxu0 %v771
      %788 = vmatprep.subr.bf16.mxu0 0
      %789 = vmatpush1.bf16.msra.mxu0 %v770
      %790 = vmatprep.subr.bf16.mxu0 0
      %791 = vmatpush1.bf16.msra.mxu0 %v769
      %792 = vmatprep.subr.bf16.mxu0 0
      %793 = vmatpush1.bf16.msra.mxu0 %v768
      %794 = vmatprep.subr.bf16.mxu0 0
      %795 = vmatpush1.bf16.msra.mxu0 %v767
      %796 = vmatprep.subr.bf16.mxu0 0
      %797 = vmatpush1.bf16.msra.mxu0 %v766
      %798 = vmatprep.subr.bf16.mxu0 0
      %799 = vmatpush2.bf16.msra.mxu0 0
      %800 = vmatprep.subr.bf16.mxu0 0
      %801 = vmatpush2.bf16.msra.mxu0 0
      %802 = vmatprep.subr.bf16.mxu0 0
      %803 = vmatpush2.bf16.msra.mxu0 0
      %804 = vmatprep.subr.bf16.mxu0 0
      %805 = vmatpush2.bf16.msra.mxu0 0
      %806 = vmatprep.subr.bf16.mxu0 0
      %807 = vmatpush2.bf16.msra.mxu0 0
      %808 = vmatprep.subr.bf16.mxu0 0
      %809 = vmatpush2.bf16.msra.mxu0 0
      %810 = vmatprep.subr.bf16.mxu0 0
      %811 = vmatpush2.bf16.msra.mxu0 0
      %812 = vmatprep.subr.bf16.mxu0 0
      %813 = vmatpush2.bf16.msra.mxu0 0
      %814 = vmatprep.mubr.bf16.mxu0 0
      %815 = vmatmul.mubr.bf16.gmra.mxu0 %v726
      %v816 = vpop.f32.mrf.mxu0
      %v817 = vadd.f32 0.0, %v816
      %v818 = vpop.f32.mrf.mxu0
      %v819 = vpop.f32.mrf.mxu0
      %v820 = vadd.f32 0.0, %v819
      %v821 = vpop.f32.mrf.mxu0
      %822 = vmatprep.mubr.bf16.mxu0 0
      %823 = vmatmul.mubr.bf16.gmra.mxu0 %v727
      %v824 = vpop.f32.mrf.mxu0
      %v825 = vadd.f32 0.0, %v824
      %v826 = vpop.f32.mrf.mxu0
      %v827 = vpop.f32.mrf.mxu0
      %v828 = vadd.f32 0.0, %v827
      %v829 = vpop.f32.mrf.mxu0
      %830 = vmatprep.mubr.bf16.mxu0 0
      %831 = vmatmul.mubr.bf16.gmra.mxu0 %v728
      %v832 = vpop.f32.mrf.mxu0
      %v833 = vadd.f32 0.0, %v832
      %v834 = vpop.f32.mrf.mxu0
      %v835 = vpop.f32.mrf.mxu0
      %v836 = vadd.f32 0.0, %v835
      %v837 = vpop.f32.mrf.mxu0
      %838 = vmatprep.mubr.bf16.mxu0 0
      %839 = vmatmul.mubr.bf16.gmra.mxu0 %v729
      %v840 = vpop.f32.mrf.mxu0
      %v841 = vadd.f32 0.0, %v840
      %v842 = vpop.f32.mrf.mxu0
      %v843 = vpop.f32.mrf.mxu0
      %v844 = vadd.f32 0.0, %v843
      %v845 = vpop.f32.mrf.mxu0
      %846 = vdwg.mxu0
      %v847 = vadd.f32 %v612, %v817
      %v848 = vadd.f32 %v615, %v820
      %v849 = vadd.f32 %v620, %v825
      %v850 = vadd.f32 %v623, %v828
      %v851 = vadd.f32 %v628, %v833
      %v852 = vadd.f32 %v631, %v836
      %v853 = vadd.f32 %v636, %v841
      %v854 = vadd.f32 %v639, %v844
      %s855 = scalar_lea.vmem %s193, 8
      %v856 = vld [vmem:[%s855] sm:$0xf]
      %v857 = vld [vmem:[%s855 + $0x8] sm:$0xf]
      %v858 = vld [vmem:[%s855 + $0x10] sm:$0xf]
      %v859 = vld [vmem:[%s855 + $0x18] sm:$0xf]
      %v860 = vld [vmem:[%s855 + $0x20] sm:$0xf]
      %v861 = vld [vmem:[%s855 + $0x28] sm:$0xf]
      %v862 = vld [vmem:[%s855 + $0x30] sm:$0xf]
      %v863 = vld [vmem:[%s855 + $0x38] sm:$0xf]
      %s864 = scalar_lea.vmem %s1, 192
      %v865 = vld [vmem:[%s864] sm:$0xf]
      %v866 = vld [vmem:[%s864 + $0x4] sm:$0xf]
      %v867 = vld [vmem:[%s864 + $0x8] sm:$0xf]
      %v868 = vld [vmem:[%s864 + $0xc] sm:$0xf]
      %v869 = vld [vmem:[%s864 + $0x10] sm:$0xf]
      %v870 = vld [vmem:[%s864 + $0x14] sm:$0xf]
      %v871 = vld [vmem:[%s864 + $0x18] sm:$0xf]
      %v872 = vld [vmem:[%s864 + $0x1c] sm:$0xf]
      %v873 = vld [vmem:[%s864 + $0x20] sm:$0xf]
      %v874 = vld [vmem:[%s864 + $0x24] sm:$0xf]
      %v875 = vld [vmem:[%s864 + $0x28] sm:$0xf]
      %v876 = vld [vmem:[%s864 + $0x2c] sm:$0xf]
      %v877 = vld [vmem:[%s864 + $0x30] sm:$0xf]
      %v878 = vld [vmem:[%s864 + $0x34] sm:$0xf]
      %v879 = vld [vmem:[%s864 + $0x38] sm:$0xf]
      %v880 = vld [vmem:[%s864 + $0x3c] sm:$0xf]
      %v889 = vunpack.c.l.b16 %v856
      %v890 = vunpack.c.l.b16 %v857
      %v891 = vunpack.c.l.b16 %v858
      %v892 = vunpack.c.l.b16 %v859
      %v893 = vunpack.c.l.b16 %v860
      %v894 = vunpack.c.l.b16 %v861
      %v895 = vunpack.c.l.b16 %v862
      %v896 = vunpack.c.l.b16 %v863
      %v897 = vpack.c.b16 %v890, %v889
      %v898 = vpack.c.b16 %v892, %v891
      %v899 = vpack.c.b16 %v894, %v893
      %v900 = vpack.c.b16 %v896, %v895
      %v921 = vunpack.c.l.b16 %v865
      %v922 = vunpack.c.l.b16 %v866
      %v923 = vunpack.c.l.b16 %v867
      %v924 = vunpack.c.l.b16 %v868
      %v925 = vunpack.c.l.b16 %v869
      %v926 = vunpack.c.l.b16 %v870
      %v927 = vunpack.c.l.b16 %v871
      %v928 = vunpack.c.l.b16 %v872
      %v929 = vunpack.c.l.b16 %v873
      %v930 = vunpack.c.l.b16 %v874
      %v931 = vunpack.c.l.b16 %v875
      %v932 = vunpack.c.l.b16 %v876
      %v933 = vunpack.c.l.b16 %v877
      %v934 = vunpack.c.l.b16 %v878
      %v935 = vunpack.c.l.b16 %v879
      %v936 = vunpack.c.l.b16 %v880
      %v937 = vpack.c.b16 %v922, %v921
      %v938 = vpack.c.b16 %v924, %v923
      %v939 = vpack.c.b16 %v926, %v925
      %v940 = vpack.c.b16 %v928, %v927
      %v941 = vpack.c.b16 %v930, %v929
      %v942 = vpack.c.b16 %v932, %v931
      %v943 = vpack.c.b16 %v934, %v933
      %v944 = vpack.c.b16 %v936, %v935
      %953 = vmatprep.subr.bf16.mxu0 0
      %954 = vmatpush1.bf16.msra.mxu0 %v944
      %955 = vmatprep.subr.bf16.mxu0 0
      %956 = vmatpush1.bf16.msra.mxu0 %v943
      %957 = vmatprep.subr.bf16.mxu0 0
      %958 = vmatpush1.bf16.msra.mxu0 %v942
      %959 = vmatprep.subr.bf16.mxu0 0
      %960 = vmatpush1.bf16.msra.mxu0 %v941
      %961 = vmatprep.subr.bf16.mxu0 0
      %962 = vmatpush1.bf16.msra.mxu0 %v940
      %963 = vmatprep.subr.bf16.mxu0 0
      %964 = vmatpush1.bf16.msra.mxu0 %v939
      %965 = vmatprep.subr.bf16.mxu0 0
      %966 = vmatpush1.bf16.msra.mxu0 %v938
      %967 = vmatprep.subr.bf16.mxu0 0
      %968 = vmatpush1.bf16.msra.mxu0 %v937
      %969 = vmatprep.subr.bf16.mxu0 0
      %970 = vmatpush2.bf16.msra.mxu0 0
      %971 = vmatprep.subr.bf16.mxu0 0
      %972 = vmatpush2.bf16.msra.mxu0 0
      %973 = vmatprep.subr.bf16.mxu0 0
      %974 = vmatpush2.bf16.msra.mxu0 0
      %975 = vmatprep.subr.bf16.mxu0 0
      %976 = vmatpush2.bf16.msra.mxu0 0
      %977 = vmatprep.subr.bf16.mxu0 0
      %978 = vmatpush2.bf16.msra.mxu0 0
      %979 = vmatprep.subr.bf16.mxu0 0
      %980 = vmatpush2.bf16.msra.mxu0 0
      %981 = vmatprep.subr.bf16.mxu0 0
      %982 = vmatpush2.bf16.msra.mxu0 0
      %983 = vmatprep.subr.bf16.mxu0 0
      %984 = vmatpush2.bf16.msra.mxu0 0
      %985 = vmatprep.mubr.bf16.mxu0 0
      %986 = vmatmul.mubr.bf16.gmra.mxu0 %v897
      %v987 = vpop.f32.mrf.mxu0
      %v988 = vadd.f32 0.0, %v987
      %v989 = vpop.f32.mrf.mxu0
      %v990 = vpop.f32.mrf.mxu0
      %v991 = vadd.f32 0.0, %v990
      %v992 = vpop.f32.mrf.mxu0
      %993 = vmatprep.mubr.bf16.mxu0 0
      %994 = vmatmul.mubr.bf16.gmra.mxu0 %v898
      %v995 = vpop.f32.mrf.mxu0
      %v996 = vadd.f32 0.0, %v995
      %v997 = vpop.f32.mrf.mxu0
      %v998 = vpop.f32.mrf.mxu0
      %v999 = vadd.f32 0.0, %v998
      %v1000 = vpop.f32.mrf.mxu0
      %1001 = vmatprep.mubr.bf16.mxu0 0
      %1002 = vmatmul.mubr.bf16.gmra.mxu0 %v899
      %v1003 = vpop.f32.mrf.mxu0
      %v1004 = vadd.f32 0.0, %v1003
      %v1005 = vpop.f32.mrf.mxu0
      %v1006 = vpop.f32.mrf.mxu0
      %v1007 = vadd.f32 0.0, %v1006
      %v1008 = vpop.f32.mrf.mxu0
      %1009 = vmatprep.mubr.bf16.mxu0 0
      %1010 = vmatmul.mubr.bf16.gmra.mxu0 %v900
      %v1011 = vpop.f32.mrf.mxu0
      %v1012 = vadd.f32 0.0, %v1011
      %v1013 = vpop.f32.mrf.mxu0
      %v1014 = vpop.f32.mrf.mxu0
      %v1015 = vadd.f32 0.0, %v1014
      %v1016 = vpop.f32.mrf.mxu0
      %1017 = vdwg.mxu0
      %v1018 = vadd.f32 %v847, %v988
      %v1019 = vadd.f32 %v848, %v991
      %v1020 = vadd.f32 %v849, %v996
      %v1021 = vadd.f32 %v850, %v999
      %v1022 = vadd.f32 %v851, %v1004
      %v1023 = vadd.f32 %v852, %v1007
      %v1024 = vadd.f32 %v853, %v1012
      %v1025 = vadd.f32 %v854, %v1015
      %v1026 = vld [vmem:[%s855] sm:$0xf]
      %v1027 = vld [vmem:[%s855 + $0x4] sm:$0x1]
      %v1028 = vld [vmem:[%s855 + $0x8] sm:$0xf]
      %v1029 = vld [vmem:[%s855 + $0xc] sm:$0x1]
      %v1030 = vld [vmem:[%s855 + $0x10] sm:$0xf]
      %v1031 = vld [vmem:[%s855 + $0x14] sm:$0x1]
      %v1032 = vld [vmem:[%s855 + $0x18] sm:$0xf]
      %v1033 = vld [vmem:[%s855 + $0x1c] sm:$0x1]
      %v1034 = vld [vmem:[%s855 + $0x20] sm:$0xf]
      %v1035 = vld [vmem:[%s855 + $0x24] sm:$0x1]
      %v1036 = vld [vmem:[%s855 + $0x28] sm:$0xf]
      %v1037 = vld [vmem:[%s855 + $0x2c] sm:$0x1]
      %v1038 = vld [vmem:[%s855 + $0x30] sm:$0xf]
      %v1039 = vld [vmem:[%s855 + $0x34] sm:$0x1]
      %v1040 = vld [vmem:[%s855 + $0x38] sm:$0xf]
      %v1041 = vld [vmem:[%s855 + $0x3c] sm:$0x1]
      %v1043 = vshrl.u32 %v1026, 16
      %v1045 = vrot.slane %v1043, 4
      %v1046 = vshll.u32 %v1026, 16
      %v1048 = vrot.slane %v1046, 5
      %v1049 = vor.u32 %v1045, %v1048
      %v1050 = vrot.slane %v1049, 4
      %v1052 = vshll.u32 %v1027, 16
      %v1054 = vrot.slane %v1052, 5
      %v1055 = vsel %vm246, %v1050, %v1054
      %v1057 = vshrl.u32 %v1028, 16
      %v1059 = vrot.slane %v1057, 4
      %v1060 = vshll.u32 %v1028, 16
      %v1062 = vrot.slane %v1060, 5
      %v1063 = vor.u32 %v1059, %v1062
      %v1064 = vrot.slane %v1063, 4
      %v1066 = vshll.u32 %v1029, 16
      %v1068 = vrot.slane %v1066, 5
      %v1069 = vsel %vm246, %v1064, %v1068
      %v1071 = vshrl.u32 %v1030, 16
      %v1073 = vrot.slane %v1071, 4
      %v1074 = vshll.u32 %v1030, 16
      %v1076 = vrot.slane %v1074, 5
      %v1077 = vor.u32 %v1073, %v1076
      %v1078 = vrot.slane %v1077, 4
      %v1080 = vshll.u32 %v1031, 16
      %v1082 = vrot.slane %v1080, 5
      %v1083 = vsel %vm246, %v1078, %v1082
      %v1085 = vshrl.u32 %v1032, 16
      %v1087 = vrot.slane %v1085, 4
      %v1088 = vshll.u32 %v1032, 16
      %v1090 = vrot.slane %v1088, 5
      %v1091 = vor.u32 %v1087, %v1090
      %v1092 = vrot.slane %v1091, 4
      %v1094 = vshll.u32 %v1033, 16
      %v1096 = vrot.slane %v1094, 5
      %v1097 = vsel %vm246, %v1092, %v1096
      %v1099 = vshrl.u32 %v1034, 16
      %v1101 = vrot.slane %v1099, 4
      %v1102 = vshll.u32 %v1034, 16
      %v1104 = vrot.slane %v1102, 5
      %v1105 = vor.u32 %v1101, %v1104
      %v1106 = vrot.slane %v1105, 4
      %v1108 = vshll.u32 %v1035, 16
      %v1110 = vrot.slane %v1108, 5
      %v1111 = vsel %vm246, %v1106, %v1110
      %v1113 = vshrl.u32 %v1036, 16
      %v1115 = vrot.slane %v1113, 4
      %v1116 = vshll.u32 %v1036, 16
      %v1118 = vrot.slane %v1116, 5
      %v1119 = vor.u32 %v1115, %v1118
      %v1120 = vrot.slane %v1119, 4
      %v1122 = vshll.u32 %v1037, 16
      %v1124 = vrot.slane %v1122, 5
      %v1125 = vsel %vm246, %v1120, %v1124
      %v1127 = vshrl.u32 %v1038, 16
      %v1129 = vrot.slane %v1127, 4
      %v1130 = vshll.u32 %v1038, 16
      %v1132 = vrot.slane %v1130, 5
      %v1133 = vor.u32 %v1129, %v1132
      %v1134 = vrot.slane %v1133, 4
      %v1136 = vshll.u32 %v1039, 16
      %v1138 = vrot.slane %v1136, 5
      %v1139 = vsel %vm246, %v1134, %v1138
      %v1141 = vshrl.u32 %v1040, 16
      %v1143 = vrot.slane %v1141, 4
      %v1144 = vshll.u32 %v1040, 16
      %v1146 = vrot.slane %v1144, 5
      %v1147 = vor.u32 %v1143, %v1146
      %v1148 = vrot.slane %v1147, 4
      %v1150 = vshll.u32 %v1041, 16
      %v1152 = vrot.slane %v1150, 5
      %v1153 = vsel %vm246, %v1148, %v1152
      %s1154 = scalar_lea.vmem %s1, 256
      %v1155 = vld [vmem:[%s1154] sm:$0xf]
      %v1156 = vld [vmem:[%s1154 + $0x4] sm:$0xf]
      %v1157 = vld [vmem:[%s1154 + $0x8] sm:$0xf]
      %v1158 = vld [vmem:[%s1154 + $0xc] sm:$0xf]
      %v1159 = vld [vmem:[%s1154 + $0x10] sm:$0xf]
      %v1160 = vld [vmem:[%s1154 + $0x14] sm:$0xf]
      %v1161 = vld [vmem:[%s1154 + $0x18] sm:$0xf]
      %v1162 = vld [vmem:[%s1154 + $0x1c] sm:$0xf]
      %v1163 = vld [vmem:[%s1154 + $0x20] sm:$0xf]
      %v1164 = vld [vmem:[%s1154 + $0x24] sm:$0xf]
      %v1165 = vld [vmem:[%s1154 + $0x28] sm:$0xf]
      %v1166 = vld [vmem:[%s1154 + $0x2c] sm:$0xf]
      %v1167 = vld [vmem:[%s1154 + $0x30] sm:$0xf]
      %v1168 = vld [vmem:[%s1154 + $0x34] sm:$0xf]
      %v1169 = vld [vmem:[%s1154 + $0x38] sm:$0xf]
      %v1170 = vld [vmem:[%s1154 + $0x3c] sm:$0xf]
      %v1171 = vunpack.c.l.b16 %v1055
      %v1172 = vunpack.c.l.b16 %v1069
      %v1173 = vunpack.c.l.b16 %v1083
      %v1174 = vunpack.c.l.b16 %v1097
      %v1175 = vunpack.c.l.b16 %v1111
      %v1176 = vunpack.c.l.b16 %v1125
      %v1177 = vunpack.c.l.b16 %v1139
      %v1178 = vunpack.c.l.b16 %v1153
      %v1179 = vpack.c.b16 %v1172, %v1171
      %v1180 = vpack.c.b16 %v1174, %v1173
      %v1181 = vpack.c.b16 %v1176, %v1175
      %v1182 = vpack.c.b16 %v1178, %v1177
      %v1203 = vunpack.c.l.b16 %v1155
      %v1204 = vunpack.c.l.b16 %v1156
      %v1205 = vunpack.c.l.b16 %v1157
      %v1206 = vunpack.c.l.b16 %v1158
      %v1207 = vunpack.c.l.b16 %v1159
      %v1208 = vunpack.c.l.b16 %v1160
      %v1209 = vunpack.c.l.b16 %v1161
      %v1210 = vunpack.c.l.b16 %v1162
      %v1211 = vunpack.c.l.b16 %v1163
      %v1212 = vunpack.c.l.b16 %v1164
      %v1213 = vunpack.c.l.b16 %v1165
      %v1214 = vunpack.c.l.b16 %v1166
      %v1215 = vunpack.c.l.b16 %v1167
      %v1216 = vunpack.c.l.b16 %v1168
      %v1217 = vunpack.c.l.b16 %v1169
      %v1218 = vunpack.c.l.b16 %v1170
      %v1219 = vpack.c.b16 %v1204, %v1203
      %v1220 = vpack.c.b16 %v1206, %v1205
      %v1221 = vpack.c.b16 %v1208, %v1207
      %v1222 = vpack.c.b16 %v1210, %v1209
      %v1223 = vpack.c.b16 %v1212, %v1211
      %v1224 = vpack.c.b16 %v1214, %v1213
      %v1225 = vpack.c.b16 %v1216, %v1215
      %v1226 = vpack.c.b16 %v1218, %v1217
      %1235 = vmatprep.subr.bf16.mxu0 0
      %1236 = vmatpush1.bf16.msra.mxu0 %v1226
      %1237 = vmatprep.subr.bf16.mxu0 0
      %1238 = vmatpush1.bf16.msra.mxu0 %v1225
      %1239 = vmatprep.subr.bf16.mxu0 0
      %1240 = vmatpush1.bf16.msra.mxu0 %v1224
      %1241 = vmatprep.subr.bf16.mxu0 0
      %1242 = vmatpush1.bf16.msra.mxu0 %v1223
      %1243 = vmatprep.subr.bf16.mxu0 0
      %1244 = vmatpush1.bf16.msra.mxu0 %v1222
      %1245 = vmatprep.subr.bf16.mxu0 0
      %1246 = vmatpush1.bf16.msra.mxu0 %v1221
      %1247 = vmatprep.subr.bf16.mxu0 0
      %1248 = vmatpush1.bf16.msra.mxu0 %v1220
      %1249 = vmatprep.subr.bf16.mxu0 0
      %1250 = vmatpush1.bf16.msra.mxu0 %v1219
      %1251 = vmatprep.subr.bf16.mxu0 0
      %1252 = vmatpush2.bf16.msra.mxu0 0
      %1253 = vmatprep.subr.bf16.mxu0 0
      %1254 = vmatpush2.bf16.msra.mxu0 0
      %1255 = vmatprep.subr.bf16.mxu0 0
      %1256 = vmatpush2.bf16.msra.mxu0 0
      %1257 = vmatprep.subr.bf16.mxu0 0
      %1258 = vmatpush2.bf16.msra.mxu0 0
      %1259 = vmatprep.subr.bf16.mxu0 0
      %1260 = vmatpush2.bf16.msra.mxu0 0
      %1261 = vmatprep.subr.bf16.mxu0 0
      %1262 = vmatpush2.bf16.msra.mxu0 0
      %1263 = vmatprep.subr.bf16.mxu0 0
      %1264 = vmatpush2.bf16.msra.mxu0 0
      %1265 = vmatprep.subr.bf16.mxu0 0
      %1266 = vmatpush2.bf16.msra.mxu0 0
      %1267 = vmatprep.mubr.bf16.mxu0 0
      %1268 = vmatmul.mubr.bf16.gmra.mxu0 %v1179
      %v1269 = vpop.f32.mrf.mxu0
      %v1270 = vadd.f32 0.0, %v1269
      %v1271 = vpop.f32.mrf.mxu0
      %v1272 = vpop.f32.mrf.mxu0
      %v1273 = vadd.f32 0.0, %v1272
      %v1274 = vpop.f32.mrf.mxu0
      %1275 = vmatprep.mubr.bf16.mxu0 0
      %1276 = vmatmul.mubr.bf16.gmra.mxu0 %v1180
      %v1277 = vpop.f32.mrf.mxu0
      %v1278 = vadd.f32 0.0, %v1277
      %v1279 = vpop.f32.mrf.mxu0
      %v1280 = vpop.f32.mrf.mxu0
      %v1281 = vadd.f32 0.0, %v1280
      %v1282 = vpop.f32.mrf.mxu0
      %1283 = vmatprep.mubr.bf16.mxu0 0
      %1284 = vmatmul.mubr.bf16.gmra.mxu0 %v1181
      %v1285 = vpop.f32.mrf.mxu0
      %v1286 = vadd.f32 0.0, %v1285
      %v1287 = vpop.f32.mrf.mxu0
      %v1288 = vpop.f32.mrf.mxu0
      %v1289 = vadd.f32 0.0, %v1288
      %v1290 = vpop.f32.mrf.mxu0
      %1291 = vmatprep.mubr.bf16.mxu0 0
      %1292 = vmatmul.mubr.bf16.gmra.mxu0 %v1182
      %v1293 = vpop.f32.mrf.mxu0
      %v1294 = vadd.f32 0.0, %v1293
      %v1295 = vpop.f32.mrf.mxu0
      %v1296 = vpop.f32.mrf.mxu0
      %v1297 = vadd.f32 0.0, %v1296
      %v1298 = vpop.f32.mrf.mxu0
      %1299 = vdwg.mxu0
      %v1300 = vadd.f32 %v1018, %v1270
      %v1301 = vadd.f32 %v1019, %v1273
      %v1302 = vadd.f32 %v1020, %v1278
      %v1303 = vadd.f32 %v1021, %v1281
      %v1304 = vadd.f32 %v1022, %v1286
      %v1305 = vadd.f32 %v1023, %v1289
      %v1306 = vadd.f32 %v1024, %v1294
      %v1307 = vadd.f32 %v1025, %v1297
      %v1308 = vld [vmem:[%s855] sm:$0xe]
      %v1309 = vld [vmem:[%s855 + $0x8] sm:$0xe]
      %v1310 = vld [vmem:[%s855 + $0x10] sm:$0xe]
      %v1311 = vld [vmem:[%s855 + $0x18] sm:$0xe]
      %v1312 = vld [vmem:[%s855 + $0x20] sm:$0xe]
      %v1313 = vld [vmem:[%s855 + $0x28] sm:$0xe]
      %v1314 = vld [vmem:[%s855 + $0x30] sm:$0xe]
      %v1315 = vld [vmem:[%s855 + $0x38] sm:$0xe]
      %v1332 = vrot.slane %v1308, 5
      %v1333 = vrot.slane %v1332, 4
      %v1334 = vrot.slane %v1027, 5
      %v1335 = vsel %vm668, %v1333, %v1334
      %v1336 = vrot.slane %v1309, 5
      %v1337 = vrot.slane %v1336, 4
      %v1338 = vrot.slane %v1029, 5
      %v1339 = vsel %vm668, %v1337, %v1338
      %v1340 = vrot.slane %v1310, 5
      %v1341 = vrot.slane %v1340, 4
      %v1342 = vrot.slane %v1031, 5
      %v1343 = vsel %vm668, %v1341, %v1342
      %v1344 = vrot.slane %v1311, 5
      %v1345 = vrot.slane %v1344, 4
      %v1346 = vrot.slane %v1033, 5
      %v1347 = vsel %vm668, %v1345, %v1346
      %v1348 = vrot.slane %v1312, 5
      %v1349 = vrot.slane %v1348, 4
      %v1350 = vrot.slane %v1035, 5
      %v1351 = vsel %vm668, %v1349, %v1350
      %v1352 = vrot.slane %v1313, 5
      %v1353 = vrot.slane %v1352, 4
      %v1354 = vrot.slane %v1037, 5
      %v1355 = vsel %vm668, %v1353, %v1354
      %v1356 = vrot.slane %v1314, 5
      %v1357 = vrot.slane %v1356, 4
      %v1358 = vrot.slane %v1039, 5
      %v1359 = vsel %vm668, %v1357, %v1358
      %v1360 = vrot.slane %v1315, 5
      %v1361 = vrot.slane %v1360, 4
      %v1362 = vrot.slane %v1041, 5
      %v1363 = vsel %vm668, %v1361, %v1362
      %s1364 = scalar_lea.vmem %s1, 320
      %v1365 = vld [vmem:[%s1364] sm:$0xf]
      %v1366 = vld [vmem:[%s1364 + $0x4] sm:$0xf]
      %v1367 = vld [vmem:[%s1364 + $0x8] sm:$0xf]
      %v1368 = vld [vmem:[%s1364 + $0xc] sm:$0xf]
      %v1369 = vld [vmem:[%s1364 + $0x10] sm:$0xf]
      %v1370 = vld [vmem:[%s1364 + $0x14] sm:$0xf]
      %v1371 = vld [vmem:[%s1364 + $0x18] sm:$0xf]
      %v1372 = vld [vmem:[%s1364 + $0x1c] sm:$0xf]
      %v1373 = vld [vmem:[%s1364 + $0x20] sm:$0xf]
      %v1374 = vld [vmem:[%s1364 + $0x24] sm:$0xf]
      %v1375 = vld [vmem:[%s1364 + $0x28] sm:$0xf]
      %v1376 = vld [vmem:[%s1364 + $0x2c] sm:$0xf]
      %v1377 = vld [vmem:[%s1364 + $0x30] sm:$0xf]
      %v1378 = vld [vmem:[%s1364 + $0x34] sm:$0xf]
      %v1379 = vld [vmem:[%s1364 + $0x38] sm:$0xf]
      %v1380 = vld [vmem:[%s1364 + $0x3c] sm:$0xf]
      %v1381 = vunpack.c.l.b16 %v1335
      %v1382 = vunpack.c.l.b16 %v1339
      %v1383 = vunpack.c.l.b16 %v1343
      %v1384 = vunpack.c.l.b16 %v1347
      %v1385 = vunpack.c.l.b16 %v1351
      %v1386 = vunpack.c.l.b16 %v1355
      %v1387 = vunpack.c.l.b16 %v1359
      %v1388 = vunpack.c.l.b16 %v1363
      %v1389 = vpack.c.b16 %v1382, %v1381
      %v1390 = vpack.c.b16 %v1384, %v1383
      %v1391 = vpack.c.b16 %v1386, %v1385
      %v1392 = vpack.c.b16 %v1388, %v1387
      %v1413 = vunpack.c.l.b16 %v1365
      %v1414 = vunpack.c.l.b16 %v1366
      %v1415 = vunpack.c.l.b16 %v1367
      %v1416 = vunpack.c.l.b16 %v1368
      %v1417 = vunpack.c.l.b16 %v1369
      %v1418 = vunpack.c.l.b16 %v1370
      %v1419 = vunpack.c.l.b16 %v1371
      %v1420 = vunpack.c.l.b16 %v1372
      %v1421 = vunpack.c.l.b16 %v1373
      %v1422 = vunpack.c.l.b16 %v1374
      %v1423 = vunpack.c.l.b16 %v1375
      %v1424 = vunpack.c.l.b16 %v1376
      %v1425 = vunpack.c.l.b16 %v1377
      %v1426 = vunpack.c.l.b16 %v1378
      %v1427 = vunpack.c.l.b16 %v1379
      %v1428 = vunpack.c.l.b16 %v1380
      %v1429 = vpack.c.b16 %v1414, %v1413
      %v1430 = vpack.c.b16 %v1416, %v1415
      %v1431 = vpack.c.b16 %v1418, %v1417
      %v1432 = vpack.c.b16 %v1420, %v1419
      %v1433 = vpack.c.b16 %v1422, %v1421
      %v1434 = vpack.c.b16 %v1424, %v1423
      %v1435 = vpack.c.b16 %v1426, %v1425
      %v1436 = vpack.c.b16 %v1428, %v1427
      %1445 = vmatprep.subr.bf16.mxu0 0
      %1446 = vmatpush1.bf16.msra.mxu0 %v1436
      %1447 = vmatprep.subr.bf16.mxu0 0
      %1448 = vmatpush1.bf16.msra.mxu0 %v1435
      %1449 = vmatprep.subr.bf16.mxu0 0
      %1450 = vmatpush1.bf16.msra.mxu0 %v1434
      %1451 = vmatprep.subr.bf16.mxu0 0
      %1452 = vmatpush1.bf16.msra.mxu0 %v1433
      %1453 = vmatprep.subr.bf16.mxu0 0
      %1454 = vmatpush1.bf16.msra.mxu0 %v1432
      %1455 = vmatprep.subr.bf16.mxu0 0
      %1456 = vmatpush1.bf16.msra.mxu0 %v1431
      %1457 = vmatprep.subr.bf16.mxu0 0
      %1458 = vmatpush1.bf16.msra.mxu0 %v1430
      %1459 = vmatprep.subr.bf16.mxu0 0
      %1460 = vmatpush1.bf16.msra.mxu0 %v1429
      %1461 = vmatprep.subr.bf16.mxu0 0
      %1462 = vmatpush2.bf16.msra.mxu0 0
      %1463 = vmatprep.subr.bf16.mxu0 0
      %1464 = vmatpush2.bf16.msra.mxu0 0
      %1465 = vmatprep.subr.bf16.mxu0 0
      %1466 = vmatpush2.bf16.msra.mxu0 0
      %1467 = vmatprep.subr.bf16.mxu0 0
      %1468 = vmatpush2.bf16.msra.mxu0 0
      %1469 = vmatprep.subr.bf16.mxu0 0
      %1470 = vmatpush2.bf16.msra.mxu0 0
      %1471 = vmatprep.subr.bf16.mxu0 0
      %1472 = vmatpush2.bf16.msra.mxu0 0
      %1473 = vmatprep.subr.bf16.mxu0 0
      %1474 = vmatpush2.bf16.msra.mxu0 0
      %1475 = vmatprep.subr.bf16.mxu0 0
      %1476 = vmatpush2.bf16.msra.mxu0 0
      %1477 = vmatprep.mubr.bf16.mxu0 0
      %1478 = vmatmul.mubr.bf16.gmra.mxu0 %v1389
      %v1479 = vpop.f32.mrf.mxu0
      %v1480 = vadd.f32 0.0, %v1479
      %v1481 = vpop.f32.mrf.mxu0
      %v1482 = vpop.f32.mrf.mxu0
      %v1483 = vadd.f32 0.0, %v1482
      %v1484 = vpop.f32.mrf.mxu0
      %1485 = vmatprep.mubr.bf16.mxu0 0
      %1486 = vmatmul.mubr.bf16.gmra.mxu0 %v1390
      %v1487 = vpop.f32.mrf.mxu0
      %v1488 = vadd.f32 0.0, %v1487
      %v1489 = vpop.f32.mrf.mxu0
      %v1490 = vpop.f32.mrf.mxu0
      %v1491 = vadd.f32 0.0, %v1490
      %v1492 = vpop.f32.mrf.mxu0
      %1493 = vmatprep.mubr.bf16.mxu0 0
      %1494 = vmatmul.mubr.bf16.gmra.mxu0 %v1391
      %v1495 = vpop.f32.mrf.mxu0
      %v1496 = vadd.f32 0.0, %v1495
      %v1497 = vpop.f32.mrf.mxu0
      %v1498 = vpop.f32.mrf.mxu0
      %v1499 = vadd.f32 0.0, %v1498
      %v1500 = vpop.f32.mrf.mxu0
      %1501 = vmatprep.mubr.bf16.mxu0 0
      %1502 = vmatmul.mubr.bf16.gmra.mxu0 %v1392
      %v1503 = vpop.f32.mrf.mxu0
      %v1504 = vadd.f32 0.0, %v1503
      %v1505 = vpop.f32.mrf.mxu0
      %v1506 = vpop.f32.mrf.mxu0
      %v1507 = vadd.f32 0.0, %v1506
      %v1508 = vpop.f32.mrf.mxu0
      %1509 = vdwg.mxu0
      %v1510 = vadd.f32 %v1300, %v1480
      %v1511 = vadd.f32 %v1301, %v1483
      %v1512 = vadd.f32 %v1302, %v1488
      %v1513 = vadd.f32 %v1303, %v1491
      %v1514 = vadd.f32 %v1304, %v1496
      %v1515 = vadd.f32 %v1305, %v1499
      %v1516 = vadd.f32 %v1306, %v1504
      %v1517 = vadd.f32 %v1307, %v1507
      %s1518 = scalar_lea.vmem %s193, 16
      %v1519 = vld [vmem:[%s1518] sm:$0xf]
      %v1520 = vld [vmem:[%s1518 + $0x8] sm:$0xf]
      %v1521 = vld [vmem:[%s1518 + $0x10] sm:$0xf]
      %v1522 = vld [vmem:[%s1518 + $0x18] sm:$0xf]
      %v1523 = vld [vmem:[%s1518 + $0x20] sm:$0xf]
      %v1524 = vld [vmem:[%s1518 + $0x28] sm:$0xf]
      %v1525 = vld [vmem:[%s1518 + $0x30] sm:$0xf]
      %v1526 = vld [vmem:[%s1518 + $0x38] sm:$0xf]
      %s1527 = scalar_lea.vmem %s1, 384
      %v1528 = vld [vmem:[%s1527] sm:$0xf]
      %v1529 = vld [vmem:[%s1527 + $0x4] sm:$0xf]
      %v1530 = vld [vmem:[%s1527 + $0x8] sm:$0xf]
      %v1531 = vld [vmem:[%s1527 + $0xc] sm:$0xf]
      %v1532 = vld [vmem:[%s1527 + $0x10] sm:$0xf]
      %v1533 = vld [vmem:[%s1527 + $0x14] sm:$0xf]
      %v1534 = vld [vmem:[%s1527 + $0x18] sm:$0xf]
      %v1535 = vld [vmem:[%s1527 + $0x1c] sm:$0xf]
      %v1536 = vld [vmem:[%s1527 + $0x20] sm:$0xf]
      %v1537 = vld [vmem:[%s1527 + $0x24] sm:$0xf]
      %v1538 = vld [vmem:[%s1527 + $0x28] sm:$0xf]
      %v1539 = vld [vmem:[%s1527 + $0x2c] sm:$0xf]
      %v1540 = vld [vmem:[%s1527 + $0x30] sm:$0xf]
      %v1541 = vld [vmem:[%s1527 + $0x34] sm:$0xf]
      %v1542 = vld [vmem:[%s1527 + $0x38] sm:$0xf]
      %v1543 = vld [vmem:[%s1527 + $0x3c] sm:$0xf]
      %v1552 = vunpack.c.l.b16 %v1519
      %v1553 = vunpack.c.l.b16 %v1520
      %v1554 = vunpack.c.l.b16 %v1521
      %v1555 = vunpack.c.l.b16 %v1522
      %v1556 = vunpack.c.l.b16 %v1523
      %v1557 = vunpack.c.l.b16 %v1524
      %v1558 = vunpack.c.l.b16 %v1525
      %v1559 = vunpack.c.l.b16 %v1526
      %v1560 = vpack.c.b16 %v1553, %v1552
      %v1561 = vpack.c.b16 %v1555, %v1554
      %v1562 = vpack.c.b16 %v1557, %v1556
      %v1563 = vpack.c.b16 %v1559, %v1558
      %v1584 = vunpack.c.l.b16 %v1528
      %v1585 = vunpack.c.l.b16 %v1529
      %v1586 = vunpack.c.l.b16 %v1530
      %v1587 = vunpack.c.l.b16 %v1531
      %v1588 = vunpack.c.l.b16 %v1532
      %v1589 = vunpack.c.l.b16 %v1533
      %v1590 = vunpack.c.l.b16 %v1534
      %v1591 = vunpack.c.l.b16 %v1535
      %v1592 = vunpack.c.l.b16 %v1536
      %v1593 = vunpack.c.l.b16 %v1537
      %v1594 = vunpack.c.l.b16 %v1538
      %v1595 = vunpack.c.l.b16 %v1539
      %v1596 = vunpack.c.l.b16 %v1540
      %v1597 = vunpack.c.l.b16 %v1541
      %v1598 = vunpack.c.l.b16 %v1542
      %v1599 = vunpack.c.l.b16 %v1543
      %v1600 = vpack.c.b16 %v1585, %v1584
      %v1601 = vpack.c.b16 %v1587, %v1586
      %v1602 = vpack.c.b16 %v1589, %v1588
      %v1603 = vpack.c.b16 %v1591, %v1590
      %v1604 = vpack.c.b16 %v1593, %v1592
      %v1605 = vpack.c.b16 %v1595, %v1594
      %v1606 = vpack.c.b16 %v1597, %v1596
      %v1607 = vpack.c.b16 %v1599, %v1598
      %1616 = vmatprep.subr.bf16.mxu0 0
      %1617 = vmatpush1.bf16.msra.mxu0 %v1607
      %1618 = vmatprep.subr.bf16.mxu0 0
      %1619 = vmatpush1.bf16.msra.mxu0 %v1606
      %1620 = vmatprep.subr.bf16.mxu0 0
      %1621 = vmatpush1.bf16.msra.mxu0 %v1605
      %1622 = vmatprep.subr.bf16.mxu0 0
      %1623 = vmatpush1.bf16.msra.mxu0 %v1604
      %1624 = vmatprep.subr.bf16.mxu0 0
      %1625 = vmatpush1.bf16.msra.mxu0 %v1603
      %1626 = vmatprep.subr.bf16.mxu0 0
      %1627 = vmatpush1.bf16.msra.mxu0 %v1602
      %1628 = vmatprep.subr.bf16.mxu0 0
      %1629 = vmatpush1.bf16.msra.mxu0 %v1601
      %1630 = vmatprep.subr.bf16.mxu0 0
      %1631 = vmatpush1.bf16.msra.mxu0 %v1600
      %1632 = vmatprep.subr.bf16.mxu0 0
      %1633 = vmatpush2.bf16.msra.mxu0 0
      %1634 = vmatprep.subr.bf16.mxu0 0
      %1635 = vmatpush2.bf16.msra.mxu0 0
      %1636 = vmatprep.subr.bf16.mxu0 0
      %1637 = vmatpush2.bf16.msra.mxu0 0
      %1638 = vmatprep.subr.bf16.mxu0 0
      %1639 = vmatpush2.bf16.msra.mxu0 0
      %1640 = vmatprep.subr.bf16.mxu0 0
      %1641 = vmatpush2.bf16.msra.mxu0 0
      %1642 = vmatprep.subr.bf16.mxu0 0
      %1643 = vmatpush2.bf16.msra.mxu0 0
      %1644 = vmatprep.subr.bf16.mxu0 0
      %1645 = vmatpush2.bf16.msra.mxu0 0
      %1646 = vmatprep.subr.bf16.mxu0 0
      %1647 = vmatpush2.bf16.msra.mxu0 0
      %1648 = vmatprep.mubr.bf16.mxu0 0
      %1649 = vmatmul.mubr.bf16.gmra.mxu0 %v1560
      %v1650 = vpop.f32.mrf.mxu0
      %v1651 = vadd.f32 0.0, %v1650
      %v1652 = vpop.f32.mrf.mxu0
      %v1653 = vpop.f32.mrf.mxu0
      %v1654 = vadd.f32 0.0, %v1653
      %v1655 = vpop.f32.mrf.mxu0
      %1656 = vmatprep.mubr.bf16.mxu0 0
      %1657 = vmatmul.mubr.bf16.gmra.mxu0 %v1561
      %v1658 = vpop.f32.mrf.mxu0
      %v1659 = vadd.f32 0.0, %v1658
      %v1660 = vpop.f32.mrf.mxu0
      %v1661 = vpop.f32.mrf.mxu0
      %v1662 = vadd.f32 0.0, %v1661
      %v1663 = vpop.f32.mrf.mxu0
      %1664 = vmatprep.mubr.bf16.mxu0 0
      %1665 = vmatmul.mubr.bf16.gmra.mxu0 %v1562
      %v1666 = vpop.f32.mrf.mxu0
      %v1667 = vadd.f32 0.0, %v1666
      %v1668 = vpop.f32.mrf.mxu0
      %v1669 = vpop.f32.mrf.mxu0
      %v1670 = vadd.f32 0.0, %v1669
      %v1671 = vpop.f32.mrf.mxu0
      %1672 = vmatprep.mubr.bf16.mxu0 0
      %1673 = vmatmul.mubr.bf16.gmra.mxu0 %v1563
      %v1674 = vpop.f32.mrf.mxu0
      %v1675 = vadd.f32 0.0, %v1674
      %v1676 = vpop.f32.mrf.mxu0
      %v1677 = vpop.f32.mrf.mxu0
      %v1678 = vadd.f32 0.0, %v1677
      %v1679 = vpop.f32.mrf.mxu0
      %1680 = vdwg.mxu0
      %v1681 = vadd.f32 %v1510, %v1651
      %v1682 = vadd.f32 %v1511, %v1654
      %v1683 = vadd.f32 %v1512, %v1659
      %v1684 = vadd.f32 %v1513, %v1662
      %v1685 = vadd.f32 %v1514, %v1667
      %v1686 = vadd.f32 %v1515, %v1670
      %v1687 = vadd.f32 %v1516, %v1675
      %v1688 = vadd.f32 %v1517, %v1678
      %v1689 = vld [vmem:[%s1518] sm:$0xf]
      %v1690 = vld [vmem:[%s1518 + $0x4] sm:$0x1]
      %v1691 = vld [vmem:[%s1518 + $0x8] sm:$0xf]
      %v1692 = vld [vmem:[%s1518 + $0xc] sm:$0x1]
      %v1693 = vld [vmem:[%s1518 + $0x10] sm:$0xf]
      %v1694 = vld [vmem:[%s1518 + $0x14] sm:$0x1]
      %v1695 = vld [vmem:[%s1518 + $0x18] sm:$0xf]
      %v1696 = vld [vmem:[%s1518 + $0x1c] sm:$0x1]
      %v1697 = vld [vmem:[%s1518 + $0x20] sm:$0xf]
      %v1698 = vld [vmem:[%s1518 + $0x24] sm:$0x1]
      %v1699 = vld [vmem:[%s1518 + $0x28] sm:$0xf]
      %v1700 = vld [vmem:[%s1518 + $0x2c] sm:$0x1]
      %v1701 = vld [vmem:[%s1518 + $0x30] sm:$0xf]
      %v1702 = vld [vmem:[%s1518 + $0x34] sm:$0x1]
      %v1703 = vld [vmem:[%s1518 + $0x38] sm:$0xf]
      %v1704 = vld [vmem:[%s1518 + $0x3c] sm:$0x1]
      %v1706 = vshrl.u32 %v1689, 16
      %v1708 = vrot.slane %v1706, 4
      %v1709 = vshll.u32 %v1689, 16
      %v1711 = vrot.slane %v1709, 5
      %v1712 = vor.u32 %v1708, %v1711
      %v1713 = vrot.slane %v1712, 4
      %v1715 = vshll.u32 %v1690, 16
      %v1717 = vrot.slane %v1715, 5
      %v1718 = vsel %vm246, %v1713, %v1717
      %v1720 = vshrl.u32 %v1691, 16
      %v1722 = vrot.slane %v1720, 4
      %v1723 = vshll.u32 %v1691, 16
      %v1725 = vrot.slane %v1723, 5
      %v1726 = vor.u32 %v1722, %v1725
      %v1727 = vrot.slane %v1726, 4
      %v1729 = vshll.u32 %v1692, 16
      %v1731 = vrot.slane %v1729, 5
      %v1732 = vsel %vm246, %v1727, %v1731
      %v1734 = vshrl.u32 %v1693, 16
      %v1736 = vrot.slane %v1734, 4
      %v1737 = vshll.u32 %v1693, 16
      %v1739 = vrot.slane %v1737, 5
      %v1740 = vor.u32 %v1736, %v1739
      %v1741 = vrot.slane %v1740, 4
      %v1743 = vshll.u32 %v1694, 16
      %v1745 = vrot.slane %v1743, 5
      %v1746 = vsel %vm246, %v1741, %v1745
      %v1748 = vshrl.u32 %v1695, 16
      %v1750 = vrot.slane %v1748, 4
      %v1751 = vshll.u32 %v1695, 16
      %v1753 = vrot.slane %v1751, 5
      %v1754 = vor.u32 %v1750, %v1753
      %v1755 = vrot.slane %v1754, 4
      %v1757 = vshll.u32 %v1696, 16
      %v1759 = vrot.slane %v1757, 5
      %v1760 = vsel %vm246, %v1755, %v1759
      %v1762 = vshrl.u32 %v1697, 16
      %v1764 = vrot.slane %v1762, 4
      %v1765 = vshll.u32 %v1697, 16
      %v1767 = vrot.slane %v1765, 5
      %v1768 = vor.u32 %v1764, %v1767
      %v1769 = vrot.slane %v1768, 4
      %v1771 = vshll.u32 %v1698, 16
      %v1773 = vrot.slane %v1771, 5
      %v1774 = vsel %vm246, %v1769, %v1773
      %v1776 = vshrl.u32 %v1699, 16
      %v1778 = vrot.slane %v1776, 4
      %v1779 = vshll.u32 %v1699, 16
      %v1781 = vrot.slane %v1779, 5
      %v1782 = vor.u32 %v1778, %v1781
      %v1783 = vrot.slane %v1782, 4
      %v1785 = vshll.u32 %v1700, 16
      %v1787 = vrot.slane %v1785, 5
      %v1788 = vsel %vm246, %v1783, %v1787
      %v1790 = vshrl.u32 %v1701, 16
      %v1792 = vrot.slane %v1790, 4
      %v1793 = vshll.u32 %v1701, 16
      %v1795 = vrot.slane %v1793, 5
      %v1796 = vor.u32 %v1792, %v1795
      %v1797 = vrot.slane %v1796, 4
      %v1799 = vshll.u32 %v1702, 16
      %v1801 = vrot.slane %v1799, 5
      %v1802 = vsel %vm246, %v1797, %v1801
      %v1804 = vshrl.u32 %v1703, 16
      %v1806 = vrot.slane %v1804, 4
      %v1807 = vshll.u32 %v1703, 16
      %v1809 = vrot.slane %v1807, 5
      %v1810 = vor.u32 %v1806, %v1809
      %v1811 = vrot.slane %v1810, 4
      %v1813 = vshll.u32 %v1704, 16
      %v1815 = vrot.slane %v1813, 5
      %v1816 = vsel %vm246, %v1811, %v1815
      %s1817 = scalar_lea.vmem %s1, 448
      %v1818 = vld [vmem:[%s1817] sm:$0xf]
      %v1819 = vld [vmem:[%s1817 + $0x4] sm:$0xf]
      %v1820 = vld [vmem:[%s1817 + $0x8] sm:$0xf]
      %v1821 = vld [vmem:[%s1817 + $0xc] sm:$0xf]
      %v1822 = vld [vmem:[%s1817 + $0x10] sm:$0xf]
      %v1823 = vld [vmem:[%s1817 + $0x14] sm:$0xf]
      %v1824 = vld [vmem:[%s1817 + $0x18] sm:$0xf]
      %v1825 = vld [vmem:[%s1817 + $0x1c] sm:$0xf]
      %v1826 = vld [vmem:[%s1817 + $0x20] sm:$0xf]
      %v1827 = vld [vmem:[%s1817 + $0x24] sm:$0xf]
      %v1828 = vld [vmem:[%s1817 + $0x28] sm:$0xf]
      %v1829 = vld [vmem:[%s1817 + $0x2c] sm:$0xf]
      %v1830 = vld [vmem:[%s1817 + $0x30] sm:$0xf]
      %v1831 = vld [vmem:[%s1817 + $0x34] sm:$0xf]
      %v1832 = vld [vmem:[%s1817 + $0x38] sm:$0xf]
      %v1833 = vld [vmem:[%s1817 + $0x3c] sm:$0xf]
      %v1834 = vunpack.c.l.b16 %v1718
      %v1835 = vunpack.c.l.b16 %v1732
      %v1836 = vunpack.c.l.b16 %v1746
      %v1837 = vunpack.c.l.b16 %v1760
      %v1838 = vunpack.c.l.b16 %v1774
      %v1839 = vunpack.c.l.b16 %v1788
      %v1840 = vunpack.c.l.b16 %v1802
      %v1841 = vunpack.c.l.b16 %v1816
      %v1842 = vpack.c.b16 %v1835, %v1834
      %v1843 = vpack.c.b16 %v1837, %v1836
      %v1844 = vpack.c.b16 %v1839, %v1838
      %v1845 = vpack.c.b16 %v1841, %v1840
      %v1866 = vunpack.c.l.b16 %v1818
      %v1867 = vunpack.c.l.b16 %v1819
      %v1868 = vunpack.c.l.b16 %v1820
      %v1869 = vunpack.c.l.b16 %v1821
      %v1870 = vunpack.c.l.b16 %v1822
      %v1871 = vunpack.c.l.b16 %v1823
      %v1872 = vunpack.c.l.b16 %v1824
      %v1873 = vunpack.c.l.b16 %v1825
      %v1874 = vunpack.c.l.b16 %v1826
      %v1875 = vunpack.c.l.b16 %v1827
      %v1876 = vunpack.c.l.b16 %v1828
      %v1877 = vunpack.c.l.b16 %v1829
      %v1878 = vunpack.c.l.b16 %v1830
      %v1879 = vunpack.c.l.b16 %v1831
      %v1880 = vunpack.c.l.b16 %v1832
      %v1881 = vunpack.c.l.b16 %v1833
      %v1882 = vpack.c.b16 %v1867, %v1866
      %v1883 = vpack.c.b16 %v1869, %v1868
      %v1884 = vpack.c.b16 %v1871, %v1870
      %v1885 = vpack.c.b16 %v1873, %v1872
      %v1886 = vpack.c.b16 %v1875, %v1874
      %v1887 = vpack.c.b16 %v1877, %v1876
      %v1888 = vpack.c.b16 %v1879, %v1878
      %v1889 = vpack.c.b16 %v1881, %v1880
      %1898 = vmatprep.subr.bf16.mxu0 0
      %1899 = vmatpush1.bf16.msra.mxu0 %v1889
      %1900 = vmatprep.subr.bf16.mxu0 0
      %1901 = vmatpush1.bf16.msra.mxu0 %v1888
      %1902 = vmatprep.subr.bf16.mxu0 0
      %1903 = vmatpush1.bf16.msra.mxu0 %v1887
      %1904 = vmatprep.subr.bf16.mxu0 0
      %1905 = vmatpush1.bf16.msra.mxu0 %v1886
      %1906 = vmatprep.subr.bf16.mxu0 0
      %1907 = vmatpush1.bf16.msra.mxu0 %v1885
      %1908 = vmatprep.subr.bf16.mxu0 0
      %1909 = vmatpush1.bf16.msra.mxu0 %v1884
      %1910 = vmatprep.subr.bf16.mxu0 0
      %1911 = vmatpush1.bf16.msra.mxu0 %v1883
      %1912 = vmatprep.subr.bf16.mxu0 0
      %1913 = vmatpush1.bf16.msra.mxu0 %v1882
      %1914 = vmatprep.subr.bf16.mxu0 0
      %1915 = vmatpush2.bf16.msra.mxu0 0
      %1916 = vmatprep.subr.bf16.mxu0 0
      %1917 = vmatpush2.bf16.msra.mxu0 0
      %1918 = vmatprep.subr.bf16.mxu0 0
      %1919 = vmatpush2.bf16.msra.mxu0 0
      %1920 = vmatprep.subr.bf16.mxu0 0
      %1921 = vmatpush2.bf16.msra.mxu0 0
      %1922 = vmatprep.subr.bf16.mxu0 0
      %1923 = vmatpush2.bf16.msra.mxu0 0
      %1924 = vmatprep.subr.bf16.mxu0 0
      %1925 = vmatpush2.bf16.msra.mxu0 0
      %1926 = vmatprep.subr.bf16.mxu0 0
      %1927 = vmatpush2.bf16.msra.mxu0 0
      %1928 = vmatprep.subr.bf16.mxu0 0
      %1929 = vmatpush2.bf16.msra.mxu0 0
      %1930 = vmatprep.mubr.bf16.mxu0 0
      %1931 = vmatmul.mubr.bf16.gmra.mxu0 %v1842
      %v1932 = vpop.f32.mrf.mxu0
      %v1933 = vadd.f32 0.0, %v1932
      %v1934 = vpop.f32.mrf.mxu0
      %v1935 = vpop.f32.mrf.mxu0
      %v1936 = vadd.f32 0.0, %v1935
      %v1937 = vpop.f32.mrf.mxu0
      %1938 = vmatprep.mubr.bf16.mxu0 0
      %1939 = vmatmul.mubr.bf16.gmra.mxu0 %v1843
      %v1940 = vpop.f32.mrf.mxu0
      %v1941 = vadd.f32 0.0, %v1940
      %v1942 = vpop.f32.mrf.mxu0
      %v1943 = vpop.f32.mrf.mxu0
      %v1944 = vadd.f32 0.0, %v1943
      %v1945 = vpop.f32.mrf.mxu0
      %1946 = vmatprep.mubr.bf16.mxu0 0
      %1947 = vmatmul.mubr.bf16.gmra.mxu0 %v1844
      %v1948 = vpop.f32.mrf.mxu0
      %v1949 = vadd.f32 0.0, %v1948
      %v1950 = vpop.f32.mrf.mxu0
      %v1951 = vpop.f32.mrf.mxu0
      %v1952 = vadd.f32 0.0, %v1951
      %v1953 = vpop.f32.mrf.mxu0
      %1954 = vmatprep.mubr.bf16.mxu0 0
      %1955 = vmatmul.mubr.bf16.gmra.mxu0 %v1845
      %v1956 = vpop.f32.mrf.mxu0
      %v1957 = vadd.f32 0.0, %v1956
      %v1958 = vpop.f32.mrf.mxu0
      %v1959 = vpop.f32.mrf.mxu0
      %v1960 = vadd.f32 0.0, %v1959
      %v1961 = vpop.f32.mrf.mxu0
      %1962 = vdwg.mxu0
      %v1963 = vadd.f32 %v1681, %v1933
      %v1964 = vadd.f32 %v1682, %v1936
      %v1965 = vadd.f32 %v1683, %v1941
      %v1966 = vadd.f32 %v1684, %v1944
      %v1967 = vadd.f32 %v1685, %v1949
      %v1968 = vadd.f32 %v1686, %v1952
      %v1969 = vadd.f32 %v1687, %v1957
      %v1970 = vadd.f32 %v1688, %v1960
      %v1971 = vld [vmem:[%s1518] sm:$0xe]
      %v1972 = vld [vmem:[%s1518 + $0x8] sm:$0xe]
      %v1973 = vld [vmem:[%s1518 + $0x10] sm:$0xe]
      %v1974 = vld [vmem:[%s1518 + $0x18] sm:$0xe]
      %v1975 = vld [vmem:[%s1518 + $0x20] sm:$0xe]
      %v1976 = vld [vmem:[%s1518 + $0x28] sm:$0xe]
      %v1977 = vld [vmem:[%s1518 + $0x30] sm:$0xe]
      %v1978 = vld [vmem:[%s1518 + $0x38] sm:$0xe]
      %v1995 = vrot.slane %v1971, 5
      %v1996 = vrot.slane %v1995, 4
      %v1997 = vrot.slane %v1690, 5
      %v1998 = vsel %vm668, %v1996, %v1997
      %v1999 = vrot.slane %v1972, 5
      %v2000 = vrot.slane %v1999, 4
      %v2001 = vrot.slane %v1692, 5
      %v2002 = vsel %vm668, %v2000, %v2001
      %v2003 = vrot.slane %v1973, 5
      %v2004 = vrot.slane %v2003, 4
      %v2005 = vrot.slane %v1694, 5
      %v2006 = vsel %vm668, %v2004, %v2005
      %v2007 = vrot.slane %v1974, 5
      %v2008 = vrot.slane %v2007, 4
      %v2009 = vrot.slane %v1696, 5
      %v2010 = vsel %vm668, %v2008, %v2009
      %v2011 = vrot.slane %v1975, 5
      %v2012 = vrot.slane %v2011, 4
      %v2013 = vrot.slane %v1698, 5
      %v2014 = vsel %vm668, %v2012, %v2013
      %v2015 = vrot.slane %v1976, 5
      %v2016 = vrot.slane %v2015, 4
      %v2017 = vrot.slane %v1700, 5
      %v2018 = vsel %vm668, %v2016, %v2017
      %v2019 = vrot.slane %v1977, 5
      %v2020 = vrot.slane %v2019, 4
      %v2021 = vrot.slane %v1702, 5
      %v2022 = vsel %vm668, %v2020, %v2021
      %v2023 = vrot.slane %v1978, 5
      %v2024 = vrot.slane %v2023, 4
      %v2025 = vrot.slane %v1704, 5
      %v2026 = vsel %vm668, %v2024, %v2025
      %s2027 = scalar_lea.vmem %s1, 512
      %v2028 = vld [vmem:[%s2027] sm:$0xf]
      %v2029 = vld [vmem:[%s2027 + $0x4] sm:$0xf]
      %v2030 = vld [vmem:[%s2027 + $0x8] sm:$0xf]
      %v2031 = vld [vmem:[%s2027 + $0xc] sm:$0xf]
      %v2032 = vld [vmem:[%s2027 + $0x10] sm:$0xf]
      %v2033 = vld [vmem:[%s2027 + $0x14] sm:$0xf]
      %v2034 = vld [vmem:[%s2027 + $0x18] sm:$0xf]
      %v2035 = vld [vmem:[%s2027 + $0x1c] sm:$0xf]
      %v2036 = vld [vmem:[%s2027 + $0x20] sm:$0xf]
      %v2037 = vld [vmem:[%s2027 + $0x24] sm:$0xf]
      %v2038 = vld [vmem:[%s2027 + $0x28] sm:$0xf]
      %v2039 = vld [vmem:[%s2027 + $0x2c] sm:$0xf]
      %v2040 = vld [vmem:[%s2027 + $0x30] sm:$0xf]
      %v2041 = vld [vmem:[%s2027 + $0x34] sm:$0xf]
      %v2042 = vld [vmem:[%s2027 + $0x38] sm:$0xf]
      %v2043 = vld [vmem:[%s2027 + $0x3c] sm:$0xf]
      %v2044 = vunpack.c.l.b16 %v1998
      %v2045 = vunpack.c.l.b16 %v2002
      %v2046 = vunpack.c.l.b16 %v2006
      %v2047 = vunpack.c.l.b16 %v2010
      %v2048 = vunpack.c.l.b16 %v2014
      %v2049 = vunpack.c.l.b16 %v2018
      %v2050 = vunpack.c.l.b16 %v2022
      %v2051 = vunpack.c.l.b16 %v2026
      %v2052 = vpack.c.b16 %v2045, %v2044
      %v2053 = vpack.c.b16 %v2047, %v2046
      %v2054 = vpack.c.b16 %v2049, %v2048
      %v2055 = vpack.c.b16 %v2051, %v2050
      %v2076 = vunpack.c.l.b16 %v2028
      %v2077 = vunpack.c.l.b16 %v2029
      %v2078 = vunpack.c.l.b16 %v2030
      %v2079 = vunpack.c.l.b16 %v2031
      %v2080 = vunpack.c.l.b16 %v2032
      %v2081 = vunpack.c.l.b16 %v2033
      %v2082 = vunpack.c.l.b16 %v2034
      %v2083 = vunpack.c.l.b16 %v2035
      %v2084 = vunpack.c.l.b16 %v2036
      %v2085 = vunpack.c.l.b16 %v2037
      %v2086 = vunpack.c.l.b16 %v2038
      %v2087 = vunpack.c.l.b16 %v2039
      %v2088 = vunpack.c.l.b16 %v2040
      %v2089 = vunpack.c.l.b16 %v2041
      %v2090 = vunpack.c.l.b16 %v2042
      %v2091 = vunpack.c.l.b16 %v2043
      %v2092 = vpack.c.b16 %v2077, %v2076
      %v2093 = vpack.c.b16 %v2079, %v2078
      %v2094 = vpack.c.b16 %v2081, %v2080
      %v2095 = vpack.c.b16 %v2083, %v2082
      %v2096 = vpack.c.b16 %v2085, %v2084
      %v2097 = vpack.c.b16 %v2087, %v2086
      %v2098 = vpack.c.b16 %v2089, %v2088
      %v2099 = vpack.c.b16 %v2091, %v2090
      %2108 = vmatprep.subr.bf16.mxu0 0
      %2109 = vmatpush1.bf16.msra.mxu0 %v2099
      %2110 = vmatprep.subr.bf16.mxu0 0
      %2111 = vmatpush1.bf16.msra.mxu0 %v2098
      %2112 = vmatprep.subr.bf16.mxu0 0
      %2113 = vmatpush1.bf16.msra.mxu0 %v2097
      %2114 = vmatprep.subr.bf16.mxu0 0
      %2115 = vmatpush1.bf16.msra.mxu0 %v2096
      %2116 = vmatprep.subr.bf16.mxu0 0
      %2117 = vmatpush1.bf16.msra.mxu0 %v2095
      %2118 = vmatprep.subr.bf16.mxu0 0
      %2119 = vmatpush1.bf16.msra.mxu0 %v2094
      %2120 = vmatprep.subr.bf16.mxu0 0
      %2121 = vmatpush1.bf16.msra.mxu0 %v2093
      %2122 = vmatprep.subr.bf16.mxu0 0
      %2123 = vmatpush1.bf16.msra.mxu0 %v2092
      %2124 = vmatprep.subr.bf16.mxu0 0
      %2125 = vmatpush2.bf16.msra.mxu0 0
      %2126 = vmatprep.subr.bf16.mxu0 0
      %2127 = vmatpush2.bf16.msra.mxu0 0
      %2128 = vmatprep.subr.bf16.mxu0 0
      %2129 = vmatpush2.bf16.msra.mxu0 0
      %2130 = vmatprep.subr.bf16.mxu0 0
      %2131 = vmatpush2.bf16.msra.mxu0 0
      %2132 = vmatprep.subr.bf16.mxu0 0
      %2133 = vmatpush2.bf16.msra.mxu0 0
      %2134 = vmatprep.subr.bf16.mxu0 0
      %2135 = vmatpush2.bf16.msra.mxu0 0
      %2136 = vmatprep.subr.bf16.mxu0 0
      %2137 = vmatpush2.bf16.msra.mxu0 0
      %2138 = vmatprep.subr.bf16.mxu0 0
      %2139 = vmatpush2.bf16.msra.mxu0 0
      %2140 = vmatprep.mubr.bf16.mxu0 0
      %2141 = vmatmul.mubr.bf16.gmra.mxu0 %v2052
      %v2142 = vpop.f32.mrf.mxu0
      %v2143 = vadd.f32 0.0, %v2142
      %v2144 = vpop.f32.mrf.mxu0
      %v2145 = vpop.f32.mrf.mxu0
      %v2146 = vadd.f32 0.0, %v2145
      %v2147 = vpop.f32.mrf.mxu0
      %2148 = vmatprep.mubr.bf16.mxu0 0
      %2149 = vmatmul.mubr.bf16.gmra.mxu0 %v2053
      %v2150 = vpop.f32.mrf.mxu0
      %v2151 = vadd.f32 0.0, %v2150
      %v2152 = vpop.f32.mrf.mxu0
      %v2153 = vpop.f32.mrf.mxu0
      %v2154 = vadd.f32 0.0, %v2153
      %v2155 = vpop.f32.mrf.mxu0
      %2156 = vmatprep.mubr.bf16.mxu0 0
      %2157 = vmatmul.mubr.bf16.gmra.mxu0 %v2054
      %v2158 = vpop.f32.mrf.mxu0
      %v2159 = vadd.f32 0.0, %v2158
      %v2160 = vpop.f32.mrf.mxu0
      %v2161 = vpop.f32.mrf.mxu0
      %v2162 = vadd.f32 0.0, %v2161
      %v2163 = vpop.f32.mrf.mxu0
      %2164 = vmatprep.mubr.bf16.mxu0 0
      %2165 = vmatmul.mubr.bf16.gmra.mxu0 %v2055
      %v2166 = vpop.f32.mrf.mxu0
      %v2167 = vadd.f32 0.0, %v2166
      %v2168 = vpop.f32.mrf.mxu0
      %v2169 = vpop.f32.mrf.mxu0
      %v2170 = vadd.f32 0.0, %v2169
      %v2171 = vpop.f32.mrf.mxu0
      %2172 = vdwg.mxu0
      %v2173 = vadd.f32 %v1963, %v2143
      %v2174 = vadd.f32 %v1964, %v2146
      %v2175 = vadd.f32 %v1965, %v2151
      %v2176 = vadd.f32 %v1966, %v2154
      %v2177 = vadd.f32 %v1967, %v2159
      %v2178 = vadd.f32 %v1968, %v2162
      %v2179 = vadd.f32 %v1969, %v2167
      %v2180 = vadd.f32 %v1970, %v2170
      %v2181 = vpack.c.bf16 %v2174, %v2173
      %v2182 = vpack.c.bf16 %v2176, %v2175
      %v2183 = vpack.c.bf16 %v2178, %v2177
      %v2184 = vpack.c.bf16 %v2180, %v2179
      %v2189 = vunpack.c.l.b16 %v2181
      %v2190 = vunpack.c.h.b16 %v2181
      %v2191 = vunpack.c.l.b16 %v2182
      %v2192 = vunpack.c.h.b16 %v2182
      %v2193 = vunpack.c.l.b16 %v2183
      %v2194 = vunpack.c.h.b16 %v2183
      %v2195 = vunpack.c.l.b16 %v2184
      %v2196 = vunpack.c.h.b16 %v2184
      %v2197 = vpack.c.b16 %v2189, %v2189
      %v2198 = vpack.c.b16 %v2190, %v2190
      %v2199 = vpack.c.b16 %v2191, %v2191
      %v2200 = vpack.c.b16 %v2192, %v2192
      %v2201 = vpack.c.b16 %v2193, %v2193
      %v2202 = vpack.c.b16 %v2194, %v2194
      %v2203 = vpack.c.b16 %v2195, %v2195
      %v2204 = vpack.c.b16 %v2196, %v2196
      %2213 = vst [vmem:[%s200] sm:$0xf] %v2197
      %2214 = vst [vmem:[%s200 + $0x4] sm:$0xf] %v2198
      %2215 = vst [vmem:[%s200 + $0x8] sm:$0xf] %v2199
      %2216 = vst [vmem:[%s200 + $0xc] sm:$0xf] %v2200
      %2217 = vst [vmem:[%s200 + $0x10] sm:$0xf] %v2201
      %2218 = vst [vmem:[%s200 + $0x14] sm:$0xf] %v2202
      %2219 = vst [vmem:[%s200 + $0x18] sm:$0xf] %v2203
      %2220 = vst [vmem:[%s200 + $0x1c] sm:$0xf] %v2204
      %v2221 = vadd.f32 %v2173, %v2174
      %v2222 = vadd.f32 %v2221, %v2175
      %v2223 = vadd.f32 %v2222, %v2176
      %v2224 = vadd.f32 %v2223, %v2177
      %v2225 = vadd.f32 %v2224, %v2178
      %v2226 = vadd.f32 %v2225, %v2179
      %v2227 = vadd.f32 %v2226, %v2180
      %v2228 = vrot.slane %v2227, 4
      %v2229 = vadd.f32 %v2227, %v2228
      %v2230 = vrot.slane %v2229, 2
      %v2231 = vadd.f32 %v2229, %v2230
      %v2232 = vrot.slane %v2231, 1
      %v2233 = vadd.f32 %v2231, %v2232
      %v2234 = vmul.f32 %v2173, %v2173
      %v2235 = vmul.f32 %v2174, %v2174
      %v2236 = vmul.f32 %v2175, %v2175
      %v2237 = vmul.f32 %v2176, %v2176
      %v2238 = vmul.f32 %v2177, %v2177
      %v2239 = vmul.f32 %v2178, %v2178
      %v2240 = vmul.f32 %v2179, %v2179
      %v2241 = vmul.f32 %v2180, %v2180
      %v2242 = vadd.f32 %v2234, %v2235
      %v2243 = vadd.f32 %v2242, %v2236
      %v2244 = vadd.f32 %v2243, %v2237
      %v2245 = vadd.f32 %v2244, %v2238
      %v2246 = vadd.f32 %v2245, %v2239
      %v2247 = vadd.f32 %v2246, %v2240
      %v2248 = vadd.f32 %v2247, %v2241
      %v2249 = vrot.slane %v2248, 4
      %v2250 = vadd.f32 %v2248, %v2249
      %v2251 = vrot.slane %v2250, 2
      %v2252 = vadd.f32 %v2250, %v2251
      %v2253 = vrot.slane %v2252, 1
      %v2254 = vadd.f32 %v2252, %v2253
      %vm2255 = vcmask 1040384
      %v2256 = vsel %vm2255, %v2233, %v2254
      %vm2257 = vcmask 1041408
      %v2258 = vsel %vm2257, %v2256, 0.0
      %vm2259 = vcmask 1042432
      %v2260 = vsel %vm2259, %v2258, 0.0
      %vm2261 = vcmask 1043456
      %v2262 = vsel %vm2261, %v2260, 0.0
      %v2263 = vld [vmem:[%s205] sm:$0xff]
      %v2264 = vadd.f32 %v2263, %v2262
      %2265 = vst [vmem:[%s205] sm:$0xff] %v2264
      %s2266 = sadd.s32 %s19, %s20
      %p2267 = scmp.lt.s32.totalorder %s2266, 1
      %s2268 = scalar_select %p2267, %s2266, 1
      %s2269 = smul.addr %s2268, 8
      %s2270 = smul.addr %s2269, 4
      %s2271 = scalar_lea.vmem %s2, %s2270
      %p2272 = scmp.lt.s32.totalorder %s19, 1
      %s2273 = scalar_select %p2272, %s19, 1
      %s2274 = smul.addr %s2273, 8
      %s2275 = scalar_lea.vmem %s3, %s2274
      // Predicated region
      $region33: #{_lambda_.10} parent=27 // pred_check
        %p2276 = pneg %p96
      $region34: #{_lambda_.10} parent=27 // pred_check_branch
        %2278 = sbr.rel (%p2276) target = $region36
      $region35: #{_lambda_.10} parent=27 // pred_region
        %s2279 = sadd.s32 %s19, %s20
      $region36: #{_lambda_.10} parent=27 // pred_fallthru
        _
      // Predicated region
      $region37: #{_lambda_.10} parent=27 // pred_check
        %p2280 = pneg %p122
      $region38: #{_lambda_.10} parent=27 // pred_check_branch
        %2282 = sbr.rel (%p2280) target = $region40
      $region39: #{_lambda_.10} parent=27 // pred_region
        _
      $region40: #{_lambda_.10} parent=27 // pred_fallthru
        _
    $region28: #{_lambda_.10} parent=5 // pred_fallthru
      _
    %p2283 = scmp.le.s32.totalorder 2, %s10
    // Predicated region
    $region41: #{_lambda_.10} parent=5 // pred_check
      %p2284 = pneg %p2283
    $region42: #{_lambda_.10} parent=5 // pred_check_branch
      %2286 = sbr.rel (%p2284) target = $region44
    $region43: #{_lambda_.10} parent=5 // pred_region
      %s2287 = ssub.s32 %s10, 2
      // Predicated region
      $region45: #{_lambda_.10} parent=43 // pred_check
        %p2288 = pneg %p102
      $region46: #{_lambda_.10} parent=43 // pred_check_branch
        %2290 = sbr.rel (%p2288) target = $region48
      $region47: #{_lambda_.10} parent=43 // pred_region
        %s2291 = sadd.s32 %s21, %s22
        %p2292 = scmp.lt.s32.totalorder %s2291, 1
        %s2293 = scalar_select %p2292, %s2291, 1
        %s2294 = smul.addr %s2293, 8
        %s2295 = smul.addr %s2294, 4
        %s2296 = scalar_lea.vmem %s2, %s2295
      $region48: #{_lambda_.10} parent=43 // pred_fallthru
        _
      // Predicated region
      $region49: #{_lambda_.10} parent=43 // pred_check
        %p2297 = pneg %p128
      $region50: #{_lambda_.10} parent=43 // pred_check_branch
        %2299 = sbr.rel (%p2297) target = $region52
      $region51: #{_lambda_.10} parent=43 // pred_region
        %p2300 = scmp.lt.s32.totalorder %s21, 1
        %s2301 = scalar_select %p2300, %s21, 1
        %s2302 = smul.addr %s2301, 8
        %s2303 = scalar_lea.vmem %s3, %s2302
      $region52: #{_lambda_.10} parent=43 // pred_fallthru
        _
    $region44: #{_lambda_.10} parent=5 // pred_fallthru
      _
  $region6: #{_lambda_.10} parent=0 // loop_footer
    %s14 = sadd.s32 1, %s10
  $region7: #{_lambda_.10} parent=0 // loop_footer_branch
    %9 = sbr.rel target = $region3
  $region8: #{_lambda_.10} parent=0 // loop_exit
    _

</llo_original>
